<compile_context>
chip_gen: v7x
topology: tpu7x:2x2x1
jax: 0.10.0
libtpu: 0.0.40
codegen_flags: <defaults>
</compile_context>

<pallas_src>
import functools

import jax
import jax.numpy as jnp
from jax.experimental import pallas as pl
from jax.experimental.pallas import tpu as pltpu


_MAX_ROW_TILE = 1024     # rows per grid step for the C<=2 scoring / BPR paths
_MAX_RANK_TILE = 256     # rows per grid step for the C-candidate ranking path
_MEGACORE_MIN_ROWS = 64  # split single-tile batches >= this into >=2 grid steps


def _round_up(x, m):
    return ((x + m - 1) // m) * m


@functools.lru_cache(maxsize=1)
def _vmem_limit_bytes():
    cap = 64 * 1024 * 1024
    try:
        info = pltpu.get_tpu_info()
        cap = int(getattr(info, "vmem_capacity_bytes", cap))
    except Exception:
        pass
    # keep ~25% headroom for compiler-internal scratch, never above 64 MiB:
    # -> ~64 MiB scoped on 128 MiB v5e/v6e, ~48 MiB on 64 MiB v7x.
    return int(min(64 * 1024 * 1024, (cap * 3) // 4))


def _compiler_params():
    return pltpu.CompilerParams(
        dimension_semantics=("parallel",),
        vmem_limit_bytes=_vmem_limit_bytes(),
    )


def _choose_tile(n_rows, max_tile):
    tb = min(max_tile, _round_up(n_rows, 8))
    # A single mega-tile leaves one v7x TensorCore idle; split large batches
    # so the "parallel" grid axis has at least two steps.
    if tb >= n_rows and n_rows >= _MEGACORE_MIN_ROWS:
        tb = _round_up(pl.cdiv(n_rows, 2), 8)
    return tb


def _pad_rows(x, rows):
    pad = rows - x.shape[0]
    if pad <= 0:
        return x
    widths = ((0, pad),) + ((0, 0),) * (x.ndim - 1)
    return jnp.pad(x, widths)


def flatten_core_tensor(core_tensor):
    """(U, I, T) -> lane-dense (I, T*U); column index = t*U + u."""
    U, I, T = core_tensor.shape
    return jnp.transpose(core_tensor, (1, 2, 0)).reshape(I, T * U)


# ---------------------------------------------------------------------------
# Kernel: score C candidate tags per row against the shared core tensor.
# ---------------------------------------------------------------------------
def _tag_score_kernel(u_ref, i_ref, t_ref, core_ref, out_ref):
    # u_ref: (TN, U), i_ref: (TN, I), t_ref: (TN, C, T), core_ref: (I, T*U)
    # out_ref: (1, TN, C)
    u = u_ref[...]                    # (TN, U)
    iv = i_ref[...]                   # (TN, I)
    tv = t_ref[...]                   # (TN, C, T)
    TN, U = u.shape
    C, T = tv.shape[1], tv.shape[2]

    # (1) MXU: contract the resident core with i ONCE per row (not per
    #     candidate).  a[n, t*U + u] = sum_i iv[n, i] * core[u, i, t]
    a = jnp.dot(iv, core_ref[...], preferred_element_type=jnp.float32)  # (TN, T*U)

    # (2) VPU/XLU: fold in u.  V[n, t] = sum_u a[n, t, u] * u[n, u]
    v = jnp.sum(a.reshape(TN, T, U) * u[:, None, :], axis=-1)           # (TN, T)

    # (3) cheap per-candidate dot with t — no core replication across C.
    s = jnp.sum(tv * v[:, None, :], axis=-1)                            # (TN, C)

    out_ref[...] = s[None, :, :]


# ---------------------------------------------------------------------------
# Wrapper
# ---------------------------------------------------------------------------
def tag_scores(u_emb, i_emb, t_emb, core_mat):
    """u_emb (N,U), i_emb (N,I), t_emb (N,C,T), core_mat (I,T*U) -> (N,C)."""
    N, U = u_emb.shape
    I = i_emb.shape[1]
    C, T = t_emb.shape[1], t_emb.shape[2]

    max_tile = _MAX_ROW_TILE if C <= 2 else _MAX_RANK_TILE
    tn = _choose_tile(N, max_tile)

    # No full-batch HBM pad copy: only pad when the (tiny) batch is smaller
    # than one 8-aligned tile; larger batches use ragged tail blocks and the
    # garbage tail rows are discarded by the [:N] slice below.
    n_eff = max(N, tn)
    u_p = _pad_rows(u_emb.astype(jnp.float32), n_eff)
    i_p = _pad_rows(i_emb.astype(jnp.float32), n_eff)
    t_p = _pad_rows(t_emb.astype(jnp.float32), n_eff)

    n_tiles = pl.cdiv(n_eff, tn)
    out = pl.pallas_call(
        _tag_score_kernel,
        out_shape=jax.ShapeDtypeStruct((n_tiles, tn, C), jnp.float32),
        grid=(n_tiles,),
        in_specs=[
            pl.BlockSpec((tn, U), lambda n: (n, 0)),
            pl.BlockSpec((tn, I), lambda n: (n, 0)),
            pl.BlockSpec((tn, C, T), lambda n: (n, 0, 0)),
            pl.BlockSpec((I, T * U), lambda n: (0, 0)),   # resident across grid
        ],
        out_specs=pl.BlockSpec((1, tn, C), lambda n: (n, 0, 0)),
        compiler_params=_compiler_params(),
    )(u_p, i_p, t_p, core_mat)
    return out.reshape(n_tiles * tn, C)[:N]


# ---------------------------------------------------------------------------
# Module
# ---------------------------------------------------------------------------
class MTER:
    """JAX/Pallas port of the MTER module (user-item-tag tensor factorization)."""

    def __init__(self, config, key):
        ku, ki, kt, kc = jax.random.split(key, 4)
        std = 0.01
        self.user_embeddings = std * jax.random.normal(
            ku, (config["user_num"], config["u_emb_size"]), jnp.float32)
        self.item_embeddings = std * jax.random.normal(
            ki, (config["item_num"], config["i_emb_size"]), jnp.float32)
        self.reason_tag_embeddings = std * jax.random.normal(
            kt, (config["tag_num"], config["t_emb_size"]), jnp.float32)
        # nn.Parameter(torch.Tensor(...)) is uninitialized in the reference;
        # initialize deterministically here.
        self.core_tensor = std * jax.random.normal(
            kc, (config["u_emb_size"], config["i_emb_size"], config["t_emb_size"]),
            jnp.float32)
        # Flattened (I, T*U) core, cached once; stays VMEM-resident in kernels.
        self.core_mat = flatten_core_tensor(self.core_tensor)
        self.tag_num = config["tag_num"]
        self.candidate_num = config["candidate_num"]

    # forward() in the reference returns None; real compute is in the methods.
    def forward(self):
        return None

    def predict_rating(self, user, item):
        # 2*B*D flops: a dedicated pallas_call is pure launch overhead (perf
        # review) — plain JAX lets XLA fuse it with the embedding gathers.
        u_emb = self.user_embeddings[user]
        i_emb = self.item_embeddings[item]
        return jnp.sum(u_emb * i_emb, axis=1)

    def predict_tag_score(self, u_emb, i_emb, t_emb):
        return tag_scores(u_emb, i_emb, t_emb[:, None, :], self.core_mat)[:, 0]

    def calculate_rating_loss(self, user, item, rating_label):
        pred = self.predict_rating(user, item)
        return jnp.mean((pred - rating_label) ** 2)

    def calculate_reason_loss(self, user, item, pos_tag, neg_tag):
        # Fused BPR: pos and neg tags scored in ONE pallas_call (C=2 path).
        u_emb = self.user_embeddings[user]
        i_emb = self.item_embeddings[item]
        t_pair = jnp.stack(
            [self.reason_tag_embeddings[pos_tag],
             self.reason_tag_embeddings[neg_tag]], axis=1)          # (B, 2, T)
        s = tag_scores(u_emb, i_emb, t_pair, self.core_mat)         # (B, 2)
        return -jnp.mean(jax.nn.log_sigmoid(s[:, 0] - s[:, 1]))     # BPR loss

    def calculate_non_negative_reg(self):
        # simple elementwise + reduce; kept in plain JAX (glue-level compute)
        reg = 0.0
        for w in (self.user_embeddings, self.item_embeddings,
                  self.reason_tag_embeddings, self.core_tensor):
            reg = reg + jnp.sum(jnp.abs(w) - w)
        return reg

    def rank_reason_tags(self, user, item, tag):
        # user (N,), item (N,), tag (N, C) -> (N, C).  u/i are read once per
        # user; the kernel amortizes the core contraction over all C tags.
        u_emb = self.user_embeddings[user]
        i_emb = self.item_embeddings[item]
        t_emb = self.reason_tag_embeddings[tag]                     # (N, C, T)
        return tag_scores(u_emb, i_emb, t_emb, self.core_mat)


# ---------------------------------------------------------------------------
# Demo / correctness check
# ---------------------------------------------------------------------------
if __name__ == "__main__":
    key = jax.random.PRNGKey(0)
    config = {
        "device": None,
        "candidate_num": 8,
        "user_num": 8,
        "item_num": 10,
        "tag_num": 12,
        "u_emb_size": 32,
        "i_emb_size": 32,
        "t_emb_size": 32,
    }
    model = MTER(config, key)

    k1, k2, k3, k4, k5 = jax.random.split(jax.random.PRNGKey(1), 5)
    B = 2
    user = jax.random.randint(k1, (B,), 0, config["user_num"])
    item = jax.random.randint(k2, (B,), 0, config["item_num"])
    pos_tag = jax.random.randint(k3, (B,), 0, config["tag_num"])
    neg_tag = jax.random.randint(k5, (B,), 0, config["tag_num"])
    cand_tags = jax.random.randint(k4, (B, config["candidate_num"]),
                                   0, config["tag_num"])

    # --- rating (plain JAX glue, per perf review)
    rating = model.predict_rating(user, item)

    # --- tag score (kernel, C=1)
    u_emb = model.user_embeddings[user]
    i_emb = model.item_embeddings[item]
    t_emb = model.reason_tag_embeddings[pos_tag]
    t_score = model.predict_tag_score(u_emb, i_emb, t_emb)

    # --- rank candidate tags (kernel, C=candidate_num)
    rank_scores = model.rank_reason_tags(user, item, cand_tags)

    # --- losses / regularizer (reason loss = fused C=2 kernel call)
    rating_loss = model.calculate_rating_loss(user, item, jnp.ones((B,), jnp.float32))
    reason_loss = model.calculate_reason_loss(user, item, pos_tag, neg_tag)
    nn_reg = model.calculate_non_negative_reg()

    jax.block_until_ready(
        (rating, t_score, rank_scores, rating_loss, reason_loss, nn_reg))

    # --- pure-JAX references
    rating_ref = jnp.sum(u_emb * i_emb, axis=1)
    t_score_ref = jnp.einsum("bu,uit,bi,bt->b",
                             u_emb, model.core_tensor, i_emb, t_emb)
    rank_ref = jnp.einsum("nu,uit,ni,nct->nc",
                          u_emb, model.core_tensor, i_emb,
                          model.reason_tag_embeddings[cand_tags])
    pos_ref = jnp.einsum("bu,uit,bi,bt->b", u_emb, model.core_tensor, i_emb,
                         model.reason_tag_embeddings[pos_tag])
    neg_ref = jnp.einsum("bu,uit,bi,bt->b", u_emb, model.core_tensor, i_emb,
                         model.reason_tag_embeddings[neg_tag])
    reason_ref = -jnp.mean(jax.nn.log_sigmoid(pos_ref - neg_ref))

    assert jnp.allclose(rating, rating_ref, atol=1e-5, rtol=1e-5)
    assert jnp.allclose(t_score, t_score_ref, atol=1e-5, rtol=1e-5)
    assert jnp.allclose(rank_scores, rank_ref, atol=1e-5, rtol=1e-5)
    assert jnp.allclose(reason_loss, reason_ref, atol=1e-5, rtol=1e-5)

    print("KERNEL_OK")
</pallas_src>

<mosaic_0001>
module attributes {stable_mosaic.version = 11 : i64} {
  func.func @_tag_score_kernel(%arg0: i32, %arg1: memref<8x32xf32, #tpu.memory_space<vmem>>, %arg2: memref<8x32xf32, #tpu.memory_space<vmem>>, %arg3: memref<8x1x32xf32, #tpu.memory_space<vmem>>, %arg4: memref<32x1024xf32, #tpu.memory_space<vmem>>, %arg5: memref<1x8x1xf32, #tpu.memory_space<vmem>>) attributes {dimension_semantics = [#tpu.dimension_semantics<parallel>], iteration_bounds = array<i64: 1>, scalar_prefetch = 0 : i64, scratch_operands = 0 : i64, tpu.core_type = #tpu.core_type<tc>, window_params = [{transform_indices = @transform_0, window_bounds = array<i64: 8, 32>}, {transform_indices = @transform_1, window_bounds = array<i64: 8, 32>}, {transform_indices = @transform_2, window_bounds = array<i64: 8, 1, 32>}, {pipeline_mode = #tpu.pipeline_mode<synchronous>, transform_indices = @transform_3, window_bounds = array<i64: 32, 1024>}, {transform_indices = @transform_4, window_bounds = array<i64: 1, 8, 1>}]} {
    %c0 = arith.constant 0 : index
    %c0_0 = arith.constant 0 : index
    %0 = vector.load %arg1[%c0, %c0_0] : memref<8x32xf32, #tpu.memory_space<vmem>>, vector<8x32xf32>
    %c0_1 = arith.constant 0 : index
    %c0_2 = arith.constant 0 : index
    %1 = vector.load %arg2[%c0_1, %c0_2] : memref<8x32xf32, #tpu.memory_space<vmem>>, vector<8x32xf32>
    %c0_3 = arith.constant 0 : index
    %c0_4 = arith.constant 0 : index
    %c0_5 = arith.constant 0 : index
    %2 = vector.load %arg3[%c0_3, %c0_4, %c0_5] : memref<8x1x32xf32, #tpu.memory_space<vmem>>, vector<8x1x32xf32>
    %c0_6 = arith.constant 0 : index
    %c0_7 = arith.constant 0 : index
    %3 = vector.load %arg4[%c0_6, %c0_7] : memref<32x1024xf32, #tpu.memory_space<vmem>>, vector<32x1024xf32>
    %cst = arith.constant dense<0.000000e+00> : vector<8x1024xf32>
    %4 = tpu.matmul %1, %3, %cst {dimension_numbers = #tpu.dot_dimension_numbers<[1], [0], [0], [1], [0, 0, 1, 1], [], []>} : vector<8x32xf32>, vector<32x1024xf32>, vector<8x1024xf32> -> vector<8x1024xf32>
    %5 = vector.shape_cast %4 : vector<8x1024xf32> to vector<8x32x32xf32>
    %6 = vector.shape_cast %0 : vector<8x32xf32> to vector<8x1x32xf32>
    %7 = vector.broadcast %6 : vector<8x1x32xf32> to vector<8x32x32xf32>
    %8 = arith.mulf %5, %7 : vector<8x32x32xf32>
    %cst_8 = arith.constant dense<0.000000e+00> : vector<8x32xf32>
    %9 = vector.multi_reduction <add>, %8, %cst_8 [2] : vector<8x32x32xf32> to vector<8x32xf32>
    %10 = vector.shape_cast %9 : vector<8x32xf32> to vector<8x1x32xf32>
    %11 = arith.mulf %2, %10 : vector<8x1x32xf32>
    %cst_9 = arith.constant dense<0.000000e+00> : vector<8x1xf32>
    %12 = vector.multi_reduction <add>, %11, %cst_9 [2] : vector<8x1x32xf32> to vector<8x1xf32>
    %13 = vector.shape_cast %12 : vector<8x1xf32> to vector<1x8x1xf32>
    %c0_10 = arith.constant 0 : index
    %c0_11 = arith.constant 0 : index
    %c0_12 = arith.constant 0 : index
    %14 = vector.load %arg5[%c0_10, %c0_11, %c0_12] : memref<1x8x1xf32, #tpu.memory_space<vmem>>, vector<1x8x1xf32>
    tpu.vector_store %arg5[%c0_10, %c0_11, %c0_12], %13 {strides = array<i32>} : memref<1x8x1xf32, #tpu.memory_space<vmem>>, vector<1x8x1xf32>,
    return
  }
  func.func @transform_0(%arg0: i32) -> (i32, i32) {
    %c0_i32 = arith.constant 0 : i32
    %c0_i32_0 = arith.constant 0 : i32
    return %arg0, %c0_i32 : i32, i32
  }
  func.func @transform_1(%arg0: i32) -> (i32, i32) {
    %c0_i32 = arith.constant 0 : i32
    %c0_i32_0 = arith.constant 0 : i32
    return %arg0, %c0_i32 : i32, i32
  }
  func.func @transform_2(%arg0: i32) -> (i32, i32, i32) {
    %c0_i32 = arith.constant 0 : i32
    %c0_i32_0 = arith.constant 0 : i32
    %c0_i32_1 = arith.constant 0 : i32
    return %arg0, %c0_i32, %c0_i32_0 : i32, i32, i32
  }
  func.func @transform_3(%arg0: i32) -> (i32, i32) {
    %c0_i32 = arith.constant 0 : i32
    %c0_i32_0 = arith.constant 0 : i32
    %c0_i32_1 = arith.constant 0 : i32
    return %c0_i32, %c0_i32_0 : i32, i32
  }
  func.func @transform_4(%arg0: i32) -> (i32, i32, i32) {
    %c0_i32 = arith.constant 0 : i32
    %c0_i32_0 = arith.constant 0 : i32
    %c0_i32_1 = arith.constant 0 : i32
    return %arg0, %c0_i32, %c0_i32_0 : i32, i32, i32
  }
}

</mosaic_0001>

<llo_original>
// kernel: tpu_custom_call.1
$region0: #{tpu_custom_call.1}
  #allocation0 [shape = 'u32[]', space=smem, size = 0x4, offset = 0x4, fixed_abs, tag = 'smem constant byte address 0x4 - core index']
  #allocation1 [shape = 'u32[144,128]{1,0:T(1,128)}', space=vmem, size = 0x12000, scoped, tag = 'internal scratch']
  %s0 = inlined_call_operand.hbm [shape: f32[8,32], index: 0, kind: input, shape index: {}]
  %s1 = inlined_call_operand.hbm [shape: f32[8,32], index: 1, kind: input, shape index: {}]
  %s2 = inlined_call_operand.hbm [shape: f32[8,1,32], index: 2, kind: input, shape index: {}]
  %s3 = inlined_call_operand.hbm [shape: f32[32,1024], index: 3, kind: input, shape index: {}]
  %s4 = inlined_call_operand.vmem [shape: f32[1,8,1], index: 4, kind: output, shape index: {}]
  %s5 = sld [smem:[#allocation0]]
  $region42: #{tpu_custom_call.1} parent=0
    _
  %s7 = ssub.s32 1, %s5
  %s8 = scalar_select 0, %s7, %s5
  $region1: #{tpu_custom_call.1} parent=0
    #allocation2 [shape = 'u8[4096]{0}', space=vmem, size = 0x1000, scoped, tag = 'input window, operand 0, single buffered']
    #allocation3 [shape = 's32[1]{0}', space=sflag, size = 0x4, scoped, tag = 'scoped memory for tpu_custom_call.1']
    #allocation4 [shape = 'u8[4096]{0}', space=vmem, size = 0x1000, scoped, tag = 'input window, operand 1, single buffered']
    #allocation5 [shape = 's32[1]{0}', space=sflag, size = 0x4, scoped, tag = 'scoped memory for tpu_custom_call.1']
    #allocation6 [shape = 'u8[4096]{0}', space=vmem, size = 0x1000, scoped, tag = 'input window, operand 2, single buffered']
    #allocation7 [shape = 'u8[131072]{0}', space=vmem, size = 0x20000, scoped, tag = 'input window, operand 3, single buffered']
    #allocation8 [shape = 's32[1]{0}', space=sflag, size = 0x4, scoped, tag = 'scoped memory for tpu_custom_call.1']
    %9 = vsyncpa [#allocation3], 0
    %10 = vsyncpa [#allocation5], 0
    %11 = vsyncpa [#allocation8], 0
    // Predicated region
    $region2: #{tpu_custom_call.1} parent=1 // pred_check
      _
    $region3: #{tpu_custom_call.1} parent=1 // pred_check_branch
      %13 = sbr.rel (0) target = $region5
    $region4: #{tpu_custom_call.1} parent=1 // pred_region
      %s15 = ssub.s32 128, 128
      %16 = vsyncadd [#allocation3], %s15
      %s18 = sshll.u32 [#allocation2], 4
      %s19 = int_to_ptr.vmem [resolvable:$true] %s18
      %21 = dma.hbm_to_vmem [thread:$0]  %s0, 128, %s19, [#allocation3]
    $region5: #{tpu_custom_call.1} parent=1 // pred_fallthru
      _
    // Predicated region
    $region6: #{tpu_custom_call.1} parent=1 // pred_check
      _
    $region7: #{tpu_custom_call.1} parent=1 // pred_check_branch
      %23 = sbr.rel (0) target = $region9
    $region8: #{tpu_custom_call.1} parent=1 // pred_region
      %s25 = ssub.s32 128, 128
      %26 = vsyncadd [#allocation5], %s25
      %s28 = sshll.u32 [#allocation4], 4
      %s29 = int_to_ptr.vmem [resolvable:$true] %s28
      %31 = dma.hbm_to_vmem [thread:$0]  %s1, 128, %s29, [#allocation5]
    $region9: #{tpu_custom_call.1} parent=1 // pred_fallthru
      _
    // Predicated region
    $region10: #{tpu_custom_call.1} parent=1 // pred_check
      _
    $region11: #{tpu_custom_call.1} parent=1 // pred_check_branch
      %33 = sbr.rel (0) target = $region13
    $region12: #{tpu_custom_call.1} parent=1 // pred_region
      %s35 = ssub.s32 128, 128
      %36 = vsyncadd [#allocation5], %s35
      %s37 = sshll.u32 [#allocation6], 4
      %s38 = int_to_ptr.vmem [resolvable:$true] %s37
      %43 = dma.hbm_to_vmem [thread:$0]  %s2, 128, %s38, [#allocation5], 16, 16, 1
    $region13: #{tpu_custom_call.1} parent=1 // pred_fallthru
      _
    // Predicated region
    $region14: #{tpu_custom_call.1} parent=1 // pred_check
      _
    $region15: #{tpu_custom_call.1} parent=1 // pred_check_branch
      %45 = sbr.rel (0) target = $region17
    $region16: #{tpu_custom_call.1} parent=1 // pred_region
      %s47 = ssub.s32 4096, 4096
      %48 = vsyncadd [#allocation8], %s47
      %s49 = sshll.u32 [#allocation7], 4
      %s50 = int_to_ptr.vmem [resolvable:$true] %s49
      %55 = dma.hbm_to_vmem [thread:$0]  %s3, 4096, %s50, [#allocation8], 1024, 1024, 64
    $region17: #{tpu_custom_call.1} parent=1 // pred_fallthru
      _
    // Predicated region
    $region18: #{tpu_custom_call.1} parent=1 // pred_check
      _
    $region19: #{tpu_custom_call.1} parent=1 // pred_check_branch
      %57 = sbr.rel (0) target = $region21
    $region20: #{tpu_custom_call.1} parent=1 // pred_region
      %58 = dma.done [#allocation3], 128
    $region21: #{tpu_custom_call.1} parent=1 // pred_fallthru
      _
    // Predicated region
    $region22: #{tpu_custom_call.1} parent=1 // pred_check
      _
    $region23: #{tpu_custom_call.1} parent=1 // pred_check_branch
      %60 = sbr.rel (0) target = $region25
    $region24: #{tpu_custom_call.1} parent=1 // pred_region
      %61 = dma.done [#allocation5], 128
    $region25: #{tpu_custom_call.1} parent=1 // pred_fallthru
      _
    // Predicated region
    $region26: #{tpu_custom_call.1} parent=1 // pred_check
      _
    $region27: #{tpu_custom_call.1} parent=1 // pred_check_branch
      %63 = sbr.rel (0) target = $region29
    $region28: #{tpu_custom_call.1} parent=1 // pred_region
      %64 = dma.done [#allocation5], 128
    $region29: #{tpu_custom_call.1} parent=1 // pred_fallthru
      _
    // Predicated region
    $region30: #{tpu_custom_call.1} parent=1 // pred_check
      _
    $region31: #{tpu_custom_call.1} parent=1 // pred_check_branch
      %66 = sbr.rel (0) target = $region33
    $region32: #{tpu_custom_call.1} parent=1 // pred_region
      %67 = dma.done [#allocation8], 4096
    $region33: #{tpu_custom_call.1} parent=1 // pred_fallthru
      _
    %v68 = vld [vmem:[#allocation2] sm:$0xff]
    %v69 = vld [vmem:[#allocation4] sm:$0xff]
    %v70 = vld [vmem:[#allocation6] sm:$0x1]
    %v71 = vld [vmem:[#allocation6 + $0x1] sm:$0x1]
    %v72 = vld [vmem:[#allocation6 + $0x2] sm:$0x1]
    %v73 = vld [vmem:[#allocation6 + $0x3] sm:$0x1]
    %v74 = vld [vmem:[#allocation6 + $0x4] sm:$0x1]
    %v75 = vld [vmem:[#allocation6 + $0x5] sm:$0x1]
    %v76 = vld [vmem:[#allocation6 + $0x6] sm:$0x1]
    %v77 = vld [vmem:[#allocation6 + $0x7] sm:$0x1]
    %v78 = vld [vmem:[#allocation7] sm:$0xff]
    %v79 = vld [vmem:[#allocation7 + $0x8] sm:$0xff]
    %v80 = vld [vmem:[#allocation7 + $0x10] sm:$0xff]
    %v81 = vld [vmem:[#allocation7 + $0x18] sm:$0xff]
    %v82 = vld [vmem:[#allocation7 + $0x20] sm:$0xff]
    %v83 = vld [vmem:[#allocation7 + $0x28] sm:$0xff]
    %v84 = vld [vmem:[#allocation7 + $0x30] sm:$0xff]
    %v85 = vld [vmem:[#allocation7 + $0x38] sm:$0xff]
    %v86 = vld [vmem:[#allocation7 + $0x40] sm:$0xff]
    %v87 = vld [vmem:[#allocation7 + $0x48] sm:$0xff]
    %v88 = vld [vmem:[#allocation7 + $0x50] sm:$0xff]
    %v89 = vld [vmem:[#allocation7 + $0x58] sm:$0xff]
    %v90 = vld [vmem:[#allocation7 + $0x60] sm:$0xff]
    %v91 = vld [vmem:[#allocation7 + $0x68] sm:$0xff]
    %v92 = vld [vmem:[#allocation7 + $0x70] sm:$0xff]
    %v93 = vld [vmem:[#allocation7 + $0x78] sm:$0xff]
    %v94 = vld [vmem:[#allocation7 + $0x80] sm:$0xff]
    %v95 = vld [vmem:[#allocation7 + $0x88] sm:$0xff]
    %v96 = vld [vmem:[#allocation7 + $0x90] sm:$0xff]
    %v97 = vld [vmem:[#allocation7 + $0x98] sm:$0xff]
    %v98 = vld [vmem:[#allocation7 + $0xa0] sm:$0xff]
    %v99 = vld [vmem:[#allocation7 + $0xa8] sm:$0xff]
    %v100 = vld [vmem:[#allocation7 + $0xb0] sm:$0xff]
    %v101 = vld [vmem:[#allocation7 + $0xb8] sm:$0xff]
    %v102 = vld [vmem:[#allocation7 + $0xc0] sm:$0xff]
    %v103 = vld [vmem:[#allocation7 + $0xc8] sm:$0xff]
    %v104 = vld [vmem:[#allocation7 + $0xd0] sm:$0xff]
    %v105 = vld [vmem:[#allocation7 + $0xd8] sm:$0xff]
    %v106 = vld [vmem:[#allocation7 + $0xe0] sm:$0xff]
    %v107 = vld [vmem:[#allocation7 + $0xe8] sm:$0xff]
    %v108 = vld [vmem:[#allocation7 + $0xf0] sm:$0xff]
    %v109 = vld [vmem:[#allocation7 + $0xf8] sm:$0xff]
    %vm110 = vcmask 261120
    %v112 = vsel %vm110, %v69, 0
    %114 = vmatprep.subr.mxu0 %v79
    %115 = vmatpush1.msra.mxu0 %v78
    %116 = vmatprep.subr.mxu0 %v87
    %117 = vmatpush1.msra.mxu0 %v86
    %118 = vmatprep.subr.mxu0 %v95
    %119 = vmatpush1.msra.mxu0 %v94
    %120 = vmatprep.subr.mxu0 %v103
    %121 = vmatpush1.msra.mxu0 %v102
    %122 = vmatprep.subr.mxu0 0.0
    %123 = vmatpush1.msra.mxu0 0.0
    %124 = vmatprep.subr.mxu0 0.0
    %125 = vmatpush1.msra.mxu0 0.0
    %126 = vmatprep.subr.mxu0 0.0
    %127 = vmatpush1.msra.mxu0 0.0
    %128 = vmatprep.subr.mxu0 0.0
    %129 = vmatpush1.msra.mxu0 0.0
    %130 = vmatprep.subr.mxu0 0.0
    %131 = vmatpush1.msra.mxu0 0.0
    %132 = vmatprep.subr.mxu0 0.0
    %133 = vmatpush1.msra.mxu0 0.0
    %134 = vmatprep.subr.mxu0 0.0
    %135 = vmatpush1.msra.mxu0 0.0
    %136 = vmatprep.subr.mxu0 0.0
    %137 = vmatpush1.msra.mxu0 0.0
    %138 = vmatprep.subr.mxu0 0.0
    %139 = vmatpush1.msra.mxu0 0.0
    %140 = vmatprep.subr.mxu0 0.0
    %141 = vmatpush1.msra.mxu0 0.0
    %142 = vmatprep.subr.mxu0 0.0
    %143 = vmatpush1.msra.mxu0 0.0
    %144 = vmatprep.subr.mxu0 0.0
    %145 = vmatpush1.msra.mxu0 0.0
    %146 = vmatprep.subr.mxu0 0.0
    %147 = vmatpush1.msra.mxu0 0.0
    %148 = vmatprep.subr.mxu0 0.0
    %149 = vmatpush1.msra.mxu0 0.0
    %150 = vmatprep.subr.mxu0 0.0
    %151 = vmatpush1.msra.mxu0 0.0
    %152 = vmatprep.subr.mxu0 0.0
    %153 = vmatpush1.msra.mxu0 0.0
    %154 = vmatprep.subr.mxu0 0.0
    %155 = vmatpush1.msra.mxu0 0.0
    %156 = vmatprep.subr.mxu0 0.0
    %157 = vmatpush1.msra.mxu0 0.0
    %158 = vmatprep.subr.mxu0 0.0
    %159 = vmatpush1.msra.mxu0 0.0
    %160 = vmatprep.subr.mxu0 0.0
    %161 = vmatpush1.msra.mxu0 0.0
    %162 = vmatprep.subr.mxu0 0.0
    %163 = vmatpush1.msra.mxu0 0.0
    %164 = vmatprep.subr.mxu0 0.0
    %165 = vmatpush1.msra.mxu0 0.0
    %166 = vmatprep.subr.mxu0 0.0
    %167 = vmatpush1.msra.mxu0 0.0
    %168 = vmatprep.subr.mxu0 0.0
    %169 = vmatpush1.msra.mxu0 0.0
    %170 = vmatprep.subr.mxu0 0.0
    %171 = vmatpush1.msra.mxu0 0.0
    %172 = vmatprep.subr.mxu0 0.0
    %173 = vmatpush1.msra.mxu0 0.0
    %174 = vmatprep.subr.mxu0 0.0
    %175 = vmatpush1.msra.mxu0 0.0
    %176 = vmatprep.subr.mxu0 0.0
    %177 = vmatpush1.msra.mxu0 0.0
    %178 = vmatprep.mubr.f32.mxu0 0.0
    %179 = vmatmul.mubr.f32.gmra.mrb[0].mxu0 %v112
    %v180 = vpop.f32.mrb[0].mxu0
    %v181 = vadd.f32 0.0, %v180
    %v182 = vpop.f32.mrb[0].mxu0
    %v183 = vadd.f32 0.0, %v182
    %184 = vdwg.mxu0
    %185 = vmatprep.subr.mxu0 %v81
    %186 = vmatpush1.msra.mxu0 %v80
    %187 = vmatprep.subr.mxu0 %v89
    %188 = vmatpush1.msra.mxu0 %v88
    %189 = vmatprep.subr.mxu0 %v97
    %190 = vmatpush1.msra.mxu0 %v96
    %191 = vmatprep.subr.mxu0 %v105
    %192 = vmatpush1.msra.mxu0 %v104
    %193 = vmatprep.subr.mxu0 0.0
    %194 = vmatpush1.msra.mxu0 0.0
    %195 = vmatprep.subr.mxu0 0.0
    %196 = vmatpush1.msra.mxu0 0.0
    %197 = vmatprep.subr.mxu0 0.0
    %198 = vmatpush1.msra.mxu0 0.0
    %199 = vmatprep.subr.mxu0 0.0
    %200 = vmatpush1.msra.mxu0 0.0
    %201 = vmatprep.subr.mxu0 0.0
    %202 = vmatpush1.msra.mxu0 0.0
    %203 = vmatprep.subr.mxu0 0.0
    %204 = vmatpush1.msra.mxu0 0.0
    %205 = vmatprep.subr.mxu0 0.0
    %206 = vmatpush1.msra.mxu0 0.0
    %207 = vmatprep.subr.mxu0 0.0
    %208 = vmatpush1.msra.mxu0 0.0
    %209 = vmatprep.subr.mxu0 0.0
    %210 = vmatpush1.msra.mxu0 0.0
    %211 = vmatprep.subr.mxu0 0.0
    %212 = vmatpush1.msra.mxu0 0.0
    %213 = vmatprep.subr.mxu0 0.0
    %214 = vmatpush1.msra.mxu0 0.0
    %215 = vmatprep.subr.mxu0 0.0
    %216 = vmatpush1.msra.mxu0 0.0
    %217 = vmatprep.subr.mxu0 0.0
    %218 = vmatpush1.msra.mxu0 0.0
    %219 = vmatprep.subr.mxu0 0.0
    %220 = vmatpush1.msra.mxu0 0.0
    %221 = vmatprep.subr.mxu0 0.0
    %222 = vmatpush1.msra.mxu0 0.0
    %223 = vmatprep.subr.mxu0 0.0
    %224 = vmatpush1.msra.mxu0 0.0
    %225 = vmatprep.subr.mxu0 0.0
    %226 = vmatpush1.msra.mxu0 0.0
    %227 = vmatprep.subr.mxu0 0.0
    %228 = vmatpush1.msra.mxu0 0.0
    %229 = vmatprep.subr.mxu0 0.0
    %230 = vmatpush1.msra.mxu0 0.0
    %231 = vmatprep.subr.mxu0 0.0
    %232 = vmatpush1.msra.mxu0 0.0
    %233 = vmatprep.subr.mxu0 0.0
    %234 = vmatpush1.msra.mxu0 0.0
    %235 = vmatprep.subr.mxu0 0.0
    %236 = vmatpush1.msra.mxu0 0.0
    %237 = vmatprep.subr.mxu0 0.0
    %238 = vmatpush1.msra.mxu0 0.0
    %239 = vmatprep.subr.mxu0 0.0
    %240 = vmatpush1.msra.mxu0 0.0
    %241 = vmatprep.subr.mxu0 0.0
    %242 = vmatpush1.msra.mxu0 0.0
    %243 = vmatprep.subr.mxu0 0.0
    %244 = vmatpush1.msra.mxu0 0.0
    %245 = vmatprep.subr.mxu0 0.0
    %246 = vmatpush1.msra.mxu0 0.0
    %247 = vmatprep.subr.mxu0 0.0
    %248 = vmatpush1.msra.mxu0 0.0
    %249 = vmatprep.mubr.f32.mxu0 0.0
    %250 = vmatmul.mubr.f32.gmra.mrb[0].mxu0 %v112
    %v251 = vpop.f32.mrb[0].mxu0
    %v252 = vadd.f32 0.0, %v251
    %v253 = vpop.f32.mrb[0].mxu0
    %v254 = vadd.f32 0.0, %v253
    %255 = vdwg.mxu0
    %256 = vmatprep.subr.mxu0 %v83
    %257 = vmatpush1.msra.mxu0 %v82
    %258 = vmatprep.subr.mxu0 %v91
    %259 = vmatpush1.msra.mxu0 %v90
    %260 = vmatprep.subr.mxu0 %v99
    %261 = vmatpush1.msra.mxu0 %v98
    %262 = vmatprep.subr.mxu0 %v107
    %263 = vmatpush1.msra.mxu0 %v106
    %264 = vmatprep.subr.mxu0 0.0
    %265 = vmatpush1.msra.mxu0 0.0
    %266 = vmatprep.subr.mxu0 0.0
    %267 = vmatpush1.msra.mxu0 0.0
    %268 = vmatprep.subr.mxu0 0.0
    %269 = vmatpush1.msra.mxu0 0.0
    %270 = vmatprep.subr.mxu0 0.0
    %271 = vmatpush1.msra.mxu0 0.0
    %272 = vmatprep.subr.mxu0 0.0
    %273 = vmatpush1.msra.mxu0 0.0
    %274 = vmatprep.subr.mxu0 0.0
    %275 = vmatpush1.msra.mxu0 0.0
    %276 = vmatprep.subr.mxu0 0.0
    %277 = vmatpush1.msra.mxu0 0.0
    %278 = vmatprep.subr.mxu0 0.0
    %279 = vmatpush1.msra.mxu0 0.0
    %280 = vmatprep.subr.mxu0 0.0
    %281 = vmatpush1.msra.mxu0 0.0
    %282 = vmatprep.subr.mxu0 0.0
    %283 = vmatpush1.msra.mxu0 0.0
    %284 = vmatprep.subr.mxu0 0.0
    %285 = vmatpush1.msra.mxu0 0.0
    %286 = vmatprep.subr.mxu0 0.0
    %287 = vmatpush1.msra.mxu0 0.0
    %288 = vmatprep.subr.mxu0 0.0
    %289 = vmatpush1.msra.mxu0 0.0
    %290 = vmatprep.subr.mxu0 0.0
    %291 = vmatpush1.msra.mxu0 0.0
    %292 = vmatprep.subr.mxu0 0.0
    %293 = vmatpush1.msra.mxu0 0.0
    %294 = vmatprep.subr.mxu0 0.0
    %295 = vmatpush1.msra.mxu0 0.0
    %296 = vmatprep.subr.mxu0 0.0
    %297 = vmatpush1.msra.mxu0 0.0
    %298 = vmatprep.subr.mxu0 0.0
    %299 = vmatpush1.msra.mxu0 0.0
    %300 = vmatprep.subr.mxu0 0.0
    %301 = vmatpush1.msra.mxu0 0.0
    %302 = vmatprep.subr.mxu0 0.0
    %303 = vmatpush1.msra.mxu0 0.0
    %304 = vmatprep.subr.mxu0 0.0
    %305 = vmatpush1.msra.mxu0 0.0
    %306 = vmatprep.subr.mxu0 0.0
    %307 = vmatpush1.msra.mxu0 0.0
    %308 = vmatprep.subr.mxu0 0.0
    %309 = vmatpush1.msra.mxu0 0.0
    %310 = vmatprep.subr.mxu0 0.0
    %311 = vmatpush1.msra.mxu0 0.0
    %312 = vmatprep.subr.mxu0 0.0
    %313 = vmatpush1.msra.mxu0 0.0
    %314 = vmatprep.subr.mxu0 0.0
    %315 = vmatpush1.msra.mxu0 0.0
    %316 = vmatprep.subr.mxu0 0.0
    %317 = vmatpush1.msra.mxu0 0.0
    %318 = vmatprep.subr.mxu0 0.0
    %319 = vmatpush1.msra.mxu0 0.0
    %320 = vmatprep.mubr.f32.mxu0 0.0
    %321 = vmatmul.mubr.f32.gmra.mrb[0].mxu0 %v112
    %v322 = vpop.f32.mrb[0].mxu0
    %v323 = vadd.f32 0.0, %v322
    %v324 = vpop.f32.mrb[0].mxu0
    %v325 = vadd.f32 0.0, %v324
    %326 = vdwg.mxu0
    %327 = vmatprep.subr.mxu0 %v85
    %328 = vmatpush1.msra.mxu0 %v84
    %329 = vmatprep.subr.mxu0 %v93
    %330 = vmatpush1.msra.mxu0 %v92
    %331 = vmatprep.subr.mxu0 %v101
    %332 = vmatpush1.msra.mxu0 %v100
    %333 = vmatprep.subr.mxu0 %v109
    %334 = vmatpush1.msra.mxu0 %v108
    %335 = vmatprep.subr.mxu0 0.0
    %336 = vmatpush1.msra.mxu0 0.0
    %337 = vmatprep.subr.mxu0 0.0
    %338 = vmatpush1.msra.mxu0 0.0
    %339 = vmatprep.subr.mxu0 0.0
    %340 = vmatpush1.msra.mxu0 0.0
    %341 = vmatprep.subr.mxu0 0.0
    %342 = vmatpush1.msra.mxu0 0.0
    %343 = vmatprep.subr.mxu0 0.0
    %344 = vmatpush1.msra.mxu0 0.0
    %345 = vmatprep.subr.mxu0 0.0
    %346 = vmatpush1.msra.mxu0 0.0
    %347 = vmatprep.subr.mxu0 0.0
    %348 = vmatpush1.msra.mxu0 0.0
    %349 = vmatprep.subr.mxu0 0.0
    %350 = vmatpush1.msra.mxu0 0.0
    %351 = vmatprep.subr.mxu0 0.0
    %352 = vmatpush1.msra.mxu0 0.0
    %353 = vmatprep.subr.mxu0 0.0
    %354 = vmatpush1.msra.mxu0 0.0
    %355 = vmatprep.subr.mxu0 0.0
    %356 = vmatpush1.msra.mxu0 0.0
    %357 = vmatprep.subr.mxu0 0.0
    %358 = vmatpush1.msra.mxu0 0.0
    %359 = vmatprep.subr.mxu0 0.0
    %360 = vmatpush1.msra.mxu0 0.0
    %361 = vmatprep.subr.mxu0 0.0
    %362 = vmatpush1.msra.mxu0 0.0
    %363 = vmatprep.subr.mxu0 0.0
    %364 = vmatpush1.msra.mxu0 0.0
    %365 = vmatprep.subr.mxu0 0.0
    %366 = vmatpush1.msra.mxu0 0.0
    %367 = vmatprep.subr.mxu0 0.0
    %368 = vmatpush1.msra.mxu0 0.0
    %369 = vmatprep.subr.mxu0 0.0
    %370 = vmatpush1.msra.mxu0 0.0
    %371 = vmatprep.subr.mxu0 0.0
    %372 = vmatpush1.msra.mxu0 0.0
    %373 = vmatprep.subr.mxu0 0.0
    %374 = vmatpush1.msra.mxu0 0.0
    %375 = vmatprep.subr.mxu0 0.0
    %376 = vmatpush1.msra.mxu0 0.0
    %377 = vmatprep.subr.mxu0 0.0
    %378 = vmatpush1.msra.mxu0 0.0
    %379 = vmatprep.subr.mxu0 0.0
    %380 = vmatpush1.msra.mxu0 0.0
    %381 = vmatprep.subr.mxu0 0.0
    %382 = vmatpush1.msra.mxu0 0.0
    %383 = vmatprep.subr.mxu0 0.0
    %384 = vmatpush1.msra.mxu0 0.0
    %385 = vmatprep.subr.mxu0 0.0
    %386 = vmatpush1.msra.mxu0 0.0
    %387 = vmatprep.subr.mxu0 0.0
    %388 = vmatpush1.msra.mxu0 0.0
    %389 = vmatprep.subr.mxu0 0.0
    %390 = vmatpush1.msra.mxu0 0.0
    %391 = vmatprep.mubr.f32.mxu0 0.0
    %392 = vmatmul.mubr.f32.gmra.mrb[0].mxu0 %v112
    %v393 = vpop.f32.mrb[0].mxu0
    %v394 = vadd.f32 0.0, %v393
    %v395 = vpop.f32.mrb[0].mxu0
    %v396 = vadd.f32 0.0, %v395
    %397 = vdwg.mxu0
    %399 = vrot.lane.b32.xlu0 %v181, 96
    %v400 = vpop.permute.xlu0 %399
    %402 = vrot.lane.b32.xlu0 %v181, 64
    %v403 = vpop.permute.xlu0 %402
    %405 = vrot.lane.b32.xlu0 %v181, 32
    %v406 = vpop.permute.xlu0 %405
    %409 = vrot.lane.b32.xlu0 %v183, 96
    %v410 = vpop.permute.xlu0 %409
    %412 = vrot.lane.b32.xlu0 %v183, 64
    %v413 = vpop.permute.xlu0 %412
    %415 = vrot.lane.b32.xlu0 %v183, 32
    %v416 = vpop.permute.xlu0 %415
    %419 = vrot.lane.b32.xlu0 %v252, 96
    %v420 = vpop.permute.xlu0 %419
    %422 = vrot.lane.b32.xlu0 %v252, 64
    %v423 = vpop.permute.xlu0 %422
    %425 = vrot.lane.b32.xlu0 %v252, 32
    %v426 = vpop.permute.xlu0 %425
    %429 = vrot.lane.b32.xlu0 %v254, 96
    %v430 = vpop.permute.xlu0 %429
    %432 = vrot.lane.b32.xlu0 %v254, 64
    %v433 = vpop.permute.xlu0 %432
    %435 = vrot.lane.b32.xlu0 %v254, 32
    %v436 = vpop.permute.xlu0 %435
    %439 = vrot.lane.b32.xlu0 %v323, 96
    %v440 = vpop.permute.xlu0 %439
    %442 = vrot.lane.b32.xlu0 %v323, 64
    %v443 = vpop.permute.xlu0 %442
    %445 = vrot.lane.b32.xlu0 %v323, 32
    %v446 = vpop.permute.xlu0 %445
    %449 = vrot.lane.b32.xlu0 %v325, 96
    %v450 = vpop.permute.xlu0 %449
    %452 = vrot.lane.b32.xlu0 %v325, 64
    %v453 = vpop.permute.xlu0 %452
    %455 = vrot.lane.b32.xlu0 %v325, 32
    %v456 = vpop.permute.xlu0 %455
    %459 = vrot.lane.b32.xlu0 %v394, 96
    %v460 = vpop.permute.xlu0 %459
    %462 = vrot.lane.b32.xlu0 %v394, 64
    %v463 = vpop.permute.xlu0 %462
    %465 = vrot.lane.b32.xlu0 %v394, 32
    %v466 = vpop.permute.xlu0 %465
    %469 = vrot.lane.b32.xlu0 %v396, 96
    %v470 = vpop.permute.xlu0 %469
    %472 = vrot.lane.b32.xlu0 %v396, 64
    %v473 = vpop.permute.xlu0 %472
    %475 = vrot.lane.b32.xlu0 %v396, 32
    %v476 = vpop.permute.xlu0 %475
    %v478 = vcombine.low %v181, %v403
    %v479 = vcombine.high %v181, %v403
    %v481 = vunpack.c.l.s4 1983009808
    %v482 = vunpack.c.0.s8 %v481
    %v483 = vlaneseq
    %v484 = vshrl.u32 %v483, 7
    %v485 = vsub.s32 %v482, %v484
    %v486 = vrot.slane %v478, %v485
    %v488 = vunpack.c.l.s4 1983009808
    %v489 = vunpack.c.0.s8 %v488
    %v490 = vlaneseq
    %v491 = vshrl.u32 %v490, 7
    %v492 = vsub.s32 %v489, %v491
    %v493 = vrot.slane %v479, %v492
    %v494 = vcombine.low %v400, %v406
    %v495 = vcombine.high %v400, %v406
    %v497 = vunpack.c.l.s4 1983009808
    %v498 = vunpack.c.0.s8 %v497
    %v499 = vlaneseq
    %v500 = vshrl.u32 %v499, 7
    %v501 = vsub.s32 %v498, %v500
    %v502 = vrot.slane %v494, %v501
    %v504 = vunpack.c.l.s4 1983009808
    %v505 = vunpack.c.0.s8 %v504
    %v506 = vlaneseq
    %v507 = vshrl.u32 %v506, 7
    %v508 = vsub.s32 %v505, %v507
    %v509 = vrot.slane %v495, %v508
    %v510 = vcombine.low %v183, %v413
    %v511 = vcombine.high %v183, %v413
    %v513 = vunpack.c.l.s4 1983009808
    %v514 = vunpack.c.0.s8 %v513
    %v515 = vlaneseq
    %v516 = vshrl.u32 %v515, 7
    %v517 = vsub.s32 %v514, %v516
    %v518 = vrot.slane %v510, %v517
    %v520 = vunpack.c.l.s4 1983009808
    %v521 = vunpack.c.0.s8 %v520
    %v522 = vlaneseq
    %v523 = vshrl.u32 %v522, 7
    %v524 = vsub.s32 %v521, %v523
    %v525 = vrot.slane %v511, %v524
    %v526 = vcombine.low %v410, %v416
    %v527 = vcombine.high %v410, %v416
    %v529 = vunpack.c.l.s4 1983009808
    %v530 = vunpack.c.0.s8 %v529
    %v531 = vlaneseq
    %v532 = vshrl.u32 %v531, 7
    %v533 = vsub.s32 %v530, %v532
    %v534 = vrot.slane %v526, %v533
    %v536 = vunpack.c.l.s4 1983009808
    %v537 = vunpack.c.0.s8 %v536
    %v538 = vlaneseq
    %v539 = vshrl.u32 %v538, 7
    %v540 = vsub.s32 %v537, %v539
    %v541 = vrot.slane %v527, %v540
    %v542 = vcombine.low %v486, %v502
    %v543 = vcombine.high %v486, %v502
    %v545 = vunpack.c.l.s4 1934713408
    %v546 = vunpack.c.0.s8 %v545
    %v547 = vlaneseq
    %v548 = vshrl.u32 %v547, 7
    %v549 = vsub.s32 %v546, %v548
    %v550 = vrot.slane %v542, %v549
    %v552 = vunpack.c.l.s4 1934713408
    %v553 = vunpack.c.0.s8 %v552
    %v554 = vlaneseq
    %v555 = vshrl.u32 %v554, 7
    %v556 = vsub.s32 %v553, %v555
    %v557 = vrot.slane %v543, %v556
    %v558 = vcombine.low %v493, %v509
    %v559 = vcombine.high %v493, %v509
    %v561 = vunpack.c.l.s4 1934713408
    %v562 = vunpack.c.0.s8 %v561
    %v563 = vlaneseq
    %v564 = vshrl.u32 %v563, 7
    %v565 = vsub.s32 %v562, %v564
    %v566 = vrot.slane %v558, %v565
    %v568 = vunpack.c.l.s4 1934713408
    %v569 = vunpack.c.0.s8 %v568
    %v570 = vlaneseq
    %v571 = vshrl.u32 %v570, 7
    %v572 = vsub.s32 %v569, %v571
    %v573 = vrot.slane %v559, %v572
    %v574 = vcombine.low %v518, %v534
    %v575 = vcombine.high %v518, %v534
    %v577 = vunpack.c.l.s4 1934713408
    %v578 = vunpack.c.0.s8 %v577
    %v579 = vlaneseq
    %v580 = vshrl.u32 %v579, 7
    %v581 = vsub.s32 %v578, %v580
    %v582 = vrot.slane %v574, %v581
    %v584 = vunpack.c.l.s4 1934713408
    %v585 = vunpack.c.0.s8 %v584
    %v586 = vlaneseq
    %v587 = vshrl.u32 %v586, 7
    %v588 = vsub.s32 %v585, %v587
    %v589 = vrot.slane %v575, %v588
    %v590 = vcombine.low %v525, %v541
    %v591 = vcombine.high %v525, %v541
    %v593 = vunpack.c.l.s4 1934713408
    %v594 = vunpack.c.0.s8 %v593
    %v595 = vlaneseq
    %v596 = vshrl.u32 %v595, 7
    %v597 = vsub.s32 %v594, %v596
    %v598 = vrot.slane %v590, %v597
    %v600 = vunpack.c.l.s4 1934713408
    %v601 = vunpack.c.0.s8 %v600
    %v602 = vlaneseq
    %v603 = vshrl.u32 %v602, 7
    %v604 = vsub.s32 %v601, %v603
    %v605 = vrot.slane %v591, %v604
    %v606 = vcombine.low %v550, %v582
    %v607 = vcombine.high %v550, %v582
    %v608 = vcombine.low %v557, %v589
    %v609 = vcombine.high %v557, %v589
    %v610 = vcombine.low %v566, %v598
    %v611 = vcombine.high %v566, %v598
    %v612 = vcombine.low %v573, %v605
    %v613 = vcombine.high %v573, %v605
    %v614 = vcombine.low %v252, %v423
    %v615 = vcombine.high %v252, %v423
    %v617 = vunpack.c.l.s4 1983009808
    %v618 = vunpack.c.0.s8 %v617
    %v619 = vlaneseq
    %v620 = vshrl.u32 %v619, 7
    %v621 = vsub.s32 %v618, %v620
    %v622 = vrot.slane %v614, %v621
    %v624 = vunpack.c.l.s4 1983009808
    %v625 = vunpack.c.0.s8 %v624
    %v626 = vlaneseq
    %v627 = vshrl.u32 %v626, 7
    %v628 = vsub.s32 %v625, %v627
    %v629 = vrot.slane %v615, %v628
    %v630 = vcombine.low %v420, %v426
    %v631 = vcombine.high %v420, %v426
    %v633 = vunpack.c.l.s4 1983009808
    %v634 = vunpack.c.0.s8 %v633
    %v635 = vlaneseq
    %v636 = vshrl.u32 %v635, 7
    %v637 = vsub.s32 %v634, %v636
    %v638 = vrot.slane %v630, %v637
    %v640 = vunpack.c.l.s4 1983009808
    %v641 = vunpack.c.0.s8 %v640
    %v642 = vlaneseq
    %v643 = vshrl.u32 %v642, 7
    %v644 = vsub.s32 %v641, %v643
    %v645 = vrot.slane %v631, %v644
    %v646 = vcombine.low %v254, %v433
    %v647 = vcombine.high %v254, %v433
    %v649 = vunpack.c.l.s4 1983009808
    %v650 = vunpack.c.0.s8 %v649
    %v651 = vlaneseq
    %v652 = vshrl.u32 %v651, 7
    %v653 = vsub.s32 %v650, %v652
    %v654 = vrot.slane %v646, %v653
    %v656 = vunpack.c.l.s4 1983009808
    %v657 = vunpack.c.0.s8 %v656
    %v658 = vlaneseq
    %v659 = vshrl.u32 %v658, 7
    %v660 = vsub.s32 %v657, %v659
    %v661 = vrot.slane %v647, %v660
    %v662 = vcombine.low %v430, %v436
    %v663 = vcombine.high %v430, %v436
    %v665 = vunpack.c.l.s4 1983009808
    %v666 = vunpack.c.0.s8 %v665
    %v667 = vlaneseq
    %v668 = vshrl.u32 %v667, 7
    %v669 = vsub.s32 %v666, %v668
    %v670 = vrot.slane %v662, %v669
    %v672 = vunpack.c.l.s4 1983009808
    %v673 = vunpack.c.0.s8 %v672
    %v674 = vlaneseq
    %v675 = vshrl.u32 %v674, 7
    %v676 = vsub.s32 %v673, %v675
    %v677 = vrot.slane %v663, %v676
    %v678 = vcombine.low %v622, %v638
    %v679 = vcombine.high %v622, %v638
    %v681 = vunpack.c.l.s4 1934713408
    %v682 = vunpack.c.0.s8 %v681
    %v683 = vlaneseq
    %v684 = vshrl.u32 %v683, 7
    %v685 = vsub.s32 %v682, %v684
    %v686 = vrot.slane %v678, %v685
    %v688 = vunpack.c.l.s4 1934713408
    %v689 = vunpack.c.0.s8 %v688
    %v690 = vlaneseq
    %v691 = vshrl.u32 %v690, 7
    %v692 = vsub.s32 %v689, %v691
    %v693 = vrot.slane %v679, %v692
    %v694 = vcombine.low %v629, %v645
    %v695 = vcombine.high %v629, %v645
    %v697 = vunpack.c.l.s4 1934713408
    %v698 = vunpack.c.0.s8 %v697
    %v699 = vlaneseq
    %v700 = vshrl.u32 %v699, 7
    %v701 = vsub.s32 %v698, %v700
    %v702 = vrot.slane %v694, %v701
    %v704 = vunpack.c.l.s4 1934713408
    %v705 = vunpack.c.0.s8 %v704
    %v706 = vlaneseq
    %v707 = vshrl.u32 %v706, 7
    %v708 = vsub.s32 %v705, %v707
    %v709 = vrot.slane %v695, %v708
    %v710 = vcombine.low %v654, %v670
    %v711 = vcombine.high %v654, %v670
    %v713 = vunpack.c.l.s4 1934713408
    %v714 = vunpack.c.0.s8 %v713
    %v715 = vlaneseq
    %v716 = vshrl.u32 %v715, 7
    %v717 = vsub.s32 %v714, %v716
    %v718 = vrot.slane %v710, %v717
    %v720 = vunpack.c.l.s4 1934713408
    %v721 = vunpack.c.0.s8 %v720
    %v722 = vlaneseq
    %v723 = vshrl.u32 %v722, 7
    %v724 = vsub.s32 %v721, %v723
    %v725 = vrot.slane %v711, %v724
    %v726 = vcombine.low %v661, %v677
    %v727 = vcombine.high %v661, %v677
    %v729 = vunpack.c.l.s4 1934713408
    %v730 = vunpack.c.0.s8 %v729
    %v731 = vlaneseq
    %v732 = vshrl.u32 %v731, 7
    %v733 = vsub.s32 %v730, %v732
    %v734 = vrot.slane %v726, %v733
    %v736 = vunpack.c.l.s4 1934713408
    %v737 = vunpack.c.0.s8 %v736
    %v738 = vlaneseq
    %v739 = vshrl.u32 %v738, 7
    %v740 = vsub.s32 %v737, %v739
    %v741 = vrot.slane %v727, %v740
    %v742 = vcombine.low %v686, %v718
    %v743 = vcombine.high %v686, %v718
    %v744 = vcombine.low %v693, %v725
    %v745 = vcombine.high %v693, %v725
    %v746 = vcombine.low %v702, %v734
    %v747 = vcombine.high %v702, %v734
    %v748 = vcombine.low %v709, %v741
    %v749 = vcombine.high %v709, %v741
    %v750 = vcombine.low %v323, %v443
    %v751 = vcombine.high %v323, %v443
    %v753 = vunpack.c.l.s4 1983009808
    %v754 = vunpack.c.0.s8 %v753
    %v755 = vlaneseq
    %v756 = vshrl.u32 %v755, 7
    %v757 = vsub.s32 %v754, %v756
    %v758 = vrot.slane %v750, %v757
    %v760 = vunpack.c.l.s4 1983009808
    %v761 = vunpack.c.0.s8 %v760
    %v762 = vlaneseq
    %v763 = vshrl.u32 %v762, 7
    %v764 = vsub.s32 %v761, %v763
    %v765 = vrot.slane %v751, %v764
    %v766 = vcombine.low %v440, %v446
    %v767 = vcombine.high %v440, %v446
    %v769 = vunpack.c.l.s4 1983009808
    %v770 = vunpack.c.0.s8 %v769
    %v771 = vlaneseq
    %v772 = vshrl.u32 %v771, 7
    %v773 = vsub.s32 %v770, %v772
    %v774 = vrot.slane %v766, %v773
    %v776 = vunpack.c.l.s4 1983009808
    %v777 = vunpack.c.0.s8 %v776
    %v778 = vlaneseq
    %v779 = vshrl.u32 %v778, 7
    %v780 = vsub.s32 %v777, %v779
    %v781 = vrot.slane %v767, %v780
    %v782 = vcombine.low %v325, %v453
    %v783 = vcombine.high %v325, %v453
    %v785 = vunpack.c.l.s4 1983009808
    %v786 = vunpack.c.0.s8 %v785
    %v787 = vlaneseq
    %v788 = vshrl.u32 %v787, 7
    %v789 = vsub.s32 %v786, %v788
    %v790 = vrot.slane %v782, %v789
    %v792 = vunpack.c.l.s4 1983009808
    %v793 = vunpack.c.0.s8 %v792
    %v794 = vlaneseq
    %v795 = vshrl.u32 %v794, 7
    %v796 = vsub.s32 %v793, %v795
    %v797 = vrot.slane %v783, %v796
    %v798 = vcombine.low %v450, %v456
    %v799 = vcombine.high %v450, %v456
    %v801 = vunpack.c.l.s4 1983009808
    %v802 = vunpack.c.0.s8 %v801
    %v803 = vlaneseq
    %v804 = vshrl.u32 %v803, 7
    %v805 = vsub.s32 %v802, %v804
    %v806 = vrot.slane %v798, %v805
    %v808 = vunpack.c.l.s4 1983009808
    %v809 = vunpack.c.0.s8 %v808
    %v810 = vlaneseq
    %v811 = vshrl.u32 %v810, 7
    %v812 = vsub.s32 %v809, %v811
    %v813 = vrot.slane %v799, %v812
    %v814 = vcombine.low %v758, %v774
    %v815 = vcombine.high %v758, %v774
    %v817 = vunpack.c.l.s4 1934713408
    %v818 = vunpack.c.0.s8 %v817
    %v819 = vlaneseq
    %v820 = vshrl.u32 %v819, 7
    %v821 = vsub.s32 %v818, %v820
    %v822 = vrot.slane %v814, %v821
    %v824 = vunpack.c.l.s4 1934713408
    %v825 = vunpack.c.0.s8 %v824
    %v826 = vlaneseq
    %v827 = vshrl.u32 %v826, 7
    %v828 = vsub.s32 %v825, %v827
    %v829 = vrot.slane %v815, %v828
    %v830 = vcombine.low %v765, %v781
    %v831 = vcombine.high %v765, %v781
    %v833 = vunpack.c.l.s4 1934713408
    %v834 = vunpack.c.0.s8 %v833
    %v835 = vlaneseq
    %v836 = vshrl.u32 %v835, 7
    %v837 = vsub.s32 %v834, %v836
    %v838 = vrot.slane %v830, %v837
    %v840 = vunpack.c.l.s4 1934713408
    %v841 = vunpack.c.0.s8 %v840
    %v842 = vlaneseq
    %v843 = vshrl.u32 %v842, 7
    %v844 = vsub.s32 %v841, %v843
    %v845 = vrot.slane %v831, %v844
    %v846 = vcombine.low %v790, %v806
    %v847 = vcombine.high %v790, %v806
    %v849 = vunpack.c.l.s4 1934713408
    %v850 = vunpack.c.0.s8 %v849
    %v851 = vlaneseq
    %v852 = vshrl.u32 %v851, 7
    %v853 = vsub.s32 %v850, %v852
    %v854 = vrot.slane %v846, %v853
    %v856 = vunpack.c.l.s4 1934713408
    %v857 = vunpack.c.0.s8 %v856
    %v858 = vlaneseq
    %v859 = vshrl.u32 %v858, 7
    %v860 = vsub.s32 %v857, %v859
    %v861 = vrot.slane %v847, %v860
    %v862 = vcombine.low %v797, %v813
    %v863 = vcombine.high %v797, %v813
    %v865 = vunpack.c.l.s4 1934713408
    %v866 = vunpack.c.0.s8 %v865
    %v867 = vlaneseq
    %v868 = vshrl.u32 %v867, 7
    %v869 = vsub.s32 %v866, %v868
    %v870 = vrot.slane %v862, %v869
    %v872 = vunpack.c.l.s4 1934713408
    %v873 = vunpack.c.0.s8 %v872
    %v874 = vlaneseq
    %v875 = vshrl.u32 %v874, 7
    %v876 = vsub.s32 %v873, %v875
    %v877 = vrot.slane %v863, %v876
    %v878 = vcombine.low %v822, %v854
    %v879 = vcombine.high %v822, %v854
    %v880 = vcombine.low %v829, %v861
    %v881 = vcombine.high %v829, %v861
    %v882 = vcombine.low %v838, %v870
    %v883 = vcombine.high %v838, %v870
    %v884 = vcombine.low %v845, %v877
    %v885 = vcombine.high %v845, %v877
    %v886 = vcombine.low %v394, %v463
    %v887 = vcombine.high %v394, %v463
    %v889 = vunpack.c.l.s4 1983009808
    %v890 = vunpack.c.0.s8 %v889
    %v891 = vlaneseq
    %v892 = vshrl.u32 %v891, 7
    %v893 = vsub.s32 %v890, %v892
    %v894 = vrot.slane %v886, %v893
    %v896 = vunpack.c.l.s4 1983009808
    %v897 = vunpack.c.0.s8 %v896
    %v898 = vlaneseq
    %v899 = vshrl.u32 %v898, 7
    %v900 = vsub.s32 %v897, %v899
    %v901 = vrot.slane %v887, %v900
    %v902 = vcombine.low %v460, %v466
    %v903 = vcombine.high %v460, %v466
    %v905 = vunpack.c.l.s4 1983009808
    %v906 = vunpack.c.0.s8 %v905
    %v907 = vlaneseq
    %v908 = vshrl.u32 %v907, 7
    %v909 = vsub.s32 %v906, %v908
    %v910 = vrot.slane %v902, %v909
    %v912 = vunpack.c.l.s4 1983009808
    %v913 = vunpack.c.0.s8 %v912
    %v914 = vlaneseq
    %v915 = vshrl.u32 %v914, 7
    %v916 = vsub.s32 %v913, %v915
    %v917 = vrot.slane %v903, %v916
    %v918 = vcombine.low %v396, %v473
    %v919 = vcombine.high %v396, %v473
    %v921 = vunpack.c.l.s4 1983009808
    %v922 = vunpack.c.0.s8 %v921
    %v923 = vlaneseq
    %v924 = vshrl.u32 %v923, 7
    %v925 = vsub.s32 %v922, %v924
    %v926 = vrot.slane %v918, %v925
    %v928 = vunpack.c.l.s4 1983009808
    %v929 = vunpack.c.0.s8 %v928
    %v930 = vlaneseq
    %v931 = vshrl.u32 %v930, 7
    %v932 = vsub.s32 %v929, %v931
    %v933 = vrot.slane %v919, %v932
    %v934 = vcombine.low %v470, %v476
    %v935 = vcombine.high %v470, %v476
    %v937 = vunpack.c.l.s4 1983009808
    %v938 = vunpack.c.0.s8 %v937
    %v939 = vlaneseq
    %v940 = vshrl.u32 %v939, 7
    %v941 = vsub.s32 %v938, %v940
    %v942 = vrot.slane %v934, %v941
    %v944 = vunpack.c.l.s4 1983009808
    %v945 = vunpack.c.0.s8 %v944
    %v946 = vlaneseq
    %v947 = vshrl.u32 %v946, 7
    %v948 = vsub.s32 %v945, %v947
    %v949 = vrot.slane %v935, %v948
    %v950 = vcombine.low %v894, %v910
    %v951 = vcombine.high %v894, %v910
    %v953 = vunpack.c.l.s4 1934713408
    %v954 = vunpack.c.0.s8 %v953
    %v955 = vlaneseq
    %v956 = vshrl.u32 %v955, 7
    %v957 = vsub.s32 %v954, %v956
    %v958 = vrot.slane %v950, %v957
    %v960 = vunpack.c.l.s4 1934713408
    %v961 = vunpack.c.0.s8 %v960
    %v962 = vlaneseq
    %v963 = vshrl.u32 %v962, 7
    %v964 = vsub.s32 %v961, %v963
    %v965 = vrot.slane %v951, %v964
    %v966 = vcombine.low %v901, %v917
    %v967 = vcombine.high %v901, %v917
    %v969 = vunpack.c.l.s4 1934713408
    %v970 = vunpack.c.0.s8 %v969
    %v971 = vlaneseq
    %v972 = vshrl.u32 %v971, 7
    %v973 = vsub.s32 %v970, %v972
    %v974 = vrot.slane %v966, %v973
    %v976 = vunpack.c.l.s4 1934713408
    %v977 = vunpack.c.0.s8 %v976
    %v978 = vlaneseq
    %v979 = vshrl.u32 %v978, 7
    %v980 = vsub.s32 %v977, %v979
    %v981 = vrot.slane %v967, %v980
    %v982 = vcombine.low %v926, %v942
    %v983 = vcombine.high %v926, %v942
    %v985 = vunpack.c.l.s4 1934713408
    %v986 = vunpack.c.0.s8 %v985
    %v987 = vlaneseq
    %v988 = vshrl.u32 %v987, 7
    %v989 = vsub.s32 %v986, %v988
    %v990 = vrot.slane %v982, %v989
    %v992 = vunpack.c.l.s4 1934713408
    %v993 = vunpack.c.0.s8 %v992
    %v994 = vlaneseq
    %v995 = vshrl.u32 %v994, 7
    %v996 = vsub.s32 %v993, %v995
    %v997 = vrot.slane %v983, %v996
    %v998 = vcombine.low %v933, %v949
    %v999 = vcombine.high %v933, %v949
    %v1001 = vunpack.c.l.s4 1934713408
    %v1002 = vunpack.c.0.s8 %v1001
    %v1003 = vlaneseq
    %v1004 = vshrl.u32 %v1003, 7
    %v1005 = vsub.s32 %v1002, %v1004
    %v1006 = vrot.slane %v998, %v1005
    %v1008 = vunpack.c.l.s4 1934713408
    %v1009 = vunpack.c.0.s8 %v1008
    %v1010 = vlaneseq
    %v1011 = vshrl.u32 %v1010, 7
    %v1012 = vsub.s32 %v1009, %v1011
    %v1013 = vrot.slane %v999, %v1012
    %v1014 = vcombine.low %v958, %v990
    %v1015 = vcombine.high %v958, %v990
    %v1016 = vcombine.low %v965, %v997
    %v1017 = vcombine.high %v965, %v997
    %v1018 = vcombine.low %v974, %v1006
    %v1019 = vcombine.high %v974, %v1006
    %v1020 = vcombine.low %v981, %v1013
    %v1021 = vcombine.high %v981, %v1013
    %v1023 = vcombine.high %v68, %v68
    %v1025 = vunpack.c.l.s4 1966171168
    %v1026 = vunpack.c.0.s8 %v1025
    %v1027 = vlaneseq
    %v1028 = vshrl.u32 %v1027, 7
    %v1029 = vsub.s32 %v1026, %v1028
    %v1030 = vrot.slane %v68, %v1029
    %v1032 = vunpack.c.l.s4 1966171168
    %v1033 = vunpack.c.0.s8 %v1032
    %v1034 = vlaneseq
    %v1035 = vshrl.u32 %v1034, 7
    %v1036 = vsub.s32 %v1033, %v1035
    %v1037 = vrot.slane %v1023, %v1036
    %v1038 = vcombine.high %v1030, %v1030
    %v1039 = vcombine.high %v1037, %v1037
    %v1041 = vunpack.c.l.s4 1966171168
    %v1042 = vunpack.c.0.s8 %v1041
    %v1043 = vlaneseq
    %v1044 = vshrl.u32 %v1043, 7
    %v1045 = vsub.s32 %v1042, %v1044
    %v1046 = vrot.slane %v1030, %v1045
    %v1048 = vunpack.c.l.s4 1966171168
    %v1049 = vunpack.c.0.s8 %v1048
    %v1050 = vlaneseq
    %v1051 = vshrl.u32 %v1050, 7
    %v1052 = vsub.s32 %v1049, %v1051
    %v1053 = vrot.slane %v1037, %v1052
    %v1055 = vunpack.c.l.s4 1966171168
    %v1056 = vunpack.c.0.s8 %v1055
    %v1057 = vlaneseq
    %v1058 = vshrl.u32 %v1057, 7
    %v1059 = vsub.s32 %v1056, %v1058
    %v1060 = vrot.slane %v1038, %v1059
    %v1062 = vunpack.c.l.s4 1966171168
    %v1063 = vunpack.c.0.s8 %v1062
    %v1064 = vlaneseq
    %v1065 = vshrl.u32 %v1064, 7
    %v1066 = vsub.s32 %v1063, %v1065
    %v1067 = vrot.slane %v1039, %v1066
    %v1068 = vcombine.high %v1046, %v1046
    %v1069 = vcombine.high %v1053, %v1053
    %v1070 = vcombine.high %v1060, %v1060
    %v1071 = vcombine.high %v1067, %v1067
    %v1072 = vlaneseq
    %v1073 = vshrl.u32 %v1072, 7
    %v1074 = vsub.s32 0, %v1073
    %v1075 = vrot.slane %v1046, %v1074
    %v1076 = vlaneseq
    %v1077 = vshrl.u32 %v1076, 7
    %v1078 = vsub.s32 0, %v1077
    %v1079 = vrot.slane %v1060, %v1078
    %v1080 = vlaneseq
    %v1081 = vshrl.u32 %v1080, 7
    %v1082 = vsub.s32 0, %v1081
    %v1083 = vrot.slane %v1068, %v1082
    %v1084 = vlaneseq
    %v1085 = vshrl.u32 %v1084, 7
    %v1086 = vsub.s32 0, %v1085
    %v1087 = vrot.slane %v1070, %v1086
    %v1088 = vlaneseq
    %v1089 = vshrl.u32 %v1088, 7
    %v1090 = vsub.s32 0, %v1089
    %v1091 = vrot.slane %v1053, %v1090
    %v1092 = vlaneseq
    %v1093 = vshrl.u32 %v1092, 7
    %v1094 = vsub.s32 0, %v1093
    %v1095 = vrot.slane %v1067, %v1094
    %v1096 = vlaneseq
    %v1097 = vshrl.u32 %v1096, 7
    %v1098 = vsub.s32 0, %v1097
    %v1099 = vrot.slane %v1069, %v1098
    %v1100 = vlaneseq
    %v1101 = vshrl.u32 %v1100, 7
    %v1102 = vsub.s32 0, %v1101
    %v1103 = vrot.slane %v1071, %v1102
    %v1112 = vmul.f32 %v606, %v1075
    %v1113 = vmul.f32 %v742, %v1075
    %v1114 = vmul.f32 %v878, %v1075
    %v1115 = vmul.f32 %v1014, %v1075
    %v1116 = vmul.f32 %v607, %v1079
    %v1117 = vmul.f32 %v743, %v1079
    %v1118 = vmul.f32 %v879, %v1079
    %v1119 = vmul.f32 %v1015, %v1079
    %v1120 = vmul.f32 %v608, %v1083
    %v1121 = vmul.f32 %v744, %v1083
    %v1122 = vmul.f32 %v880, %v1083
    %v1123 = vmul.f32 %v1016, %v1083
    %v1124 = vmul.f32 %v609, %v1087
    %v1125 = vmul.f32 %v745, %v1087
    %v1126 = vmul.f32 %v881, %v1087
    %v1127 = vmul.f32 %v1017, %v1087
    %v1128 = vmul.f32 %v610, %v1091
    %v1129 = vmul.f32 %v746, %v1091
    %v1130 = vmul.f32 %v882, %v1091
    %v1131 = vmul.f32 %v1018, %v1091
    %v1132 = vmul.f32 %v611, %v1095
    %v1133 = vmul.f32 %v747, %v1095
    %v1134 = vmul.f32 %v883, %v1095
    %v1135 = vmul.f32 %v1019, %v1095
    %v1136 = vmul.f32 %v612, %v1099
    %v1137 = vmul.f32 %v748, %v1099
    %v1138 = vmul.f32 %v884, %v1099
    %v1139 = vmul.f32 %v1020, %v1099
    %v1140 = vmul.f32 %v613, %v1103
    %v1141 = vmul.f32 %v749, %v1103
    %v1142 = vmul.f32 %v885, %v1103
    %v1143 = vmul.f32 %v1021, %v1103
    %v1144 = vsel %vm110, %v1112, 0.0
    %1145 = vadd.xlane.f32.xlu0 %v1144
    %v1146 = vpop.xlane.xlu0 %1145
    %v1147 = vsel %vm110, %v1113, 0.0
    %1148 = vadd.xlane.f32.xlu0 %v1147
    %v1149 = vpop.xlane.xlu0 %1148
    %v1150 = vsel %vm110, %v1114, 0.0
    %1151 = vadd.xlane.f32.xlu0 %v1150
    %v1152 = vpop.xlane.xlu0 %1151
    %v1153 = vsel %vm110, %v1115, 0.0
    %1154 = vadd.xlane.f32.xlu0 %v1153
    %v1155 = vpop.xlane.xlu0 %1154
    %v1156 = vsel %vm110, %v1116, 0.0
    %1157 = vadd.xlane.f32.xlu0 %v1156
    %v1158 = vpop.xlane.xlu0 %1157
    %v1159 = vsel %vm110, %v1117, 0.0
    %1160 = vadd.xlane.f32.xlu0 %v1159
    %v1161 = vpop.xlane.xlu0 %1160
    %v1162 = vsel %vm110, %v1118, 0.0
    %1163 = vadd.xlane.f32.xlu0 %v1162
    %v1164 = vpop.xlane.xlu0 %1163
    %v1165 = vsel %vm110, %v1119, 0.0
    %1166 = vadd.xlane.f32.xlu0 %v1165
    %v1167 = vpop.xlane.xlu0 %1166
    %v1168 = vsel %vm110, %v1120, 0.0
    %1169 = vadd.xlane.f32.xlu0 %v1168
    %v1170 = vpop.xlane.xlu0 %1169
    %v1171 = vsel %vm110, %v1121, 0.0
    %1172 = vadd.xlane.f32.xlu0 %v1171
    %v1173 = vpop.xlane.xlu0 %1172
    %v1174 = vsel %vm110, %v1122, 0.0
    %1175 = vadd.xlane.f32.xlu0 %v1174
    %v1176 = vpop.xlane.xlu0 %1175
    %v1177 = vsel %vm110, %v1123, 0.0
    %1178 = vadd.xlane.f32.xlu0 %v1177
    %v1179 = vpop.xlane.xlu0 %1178
    %v1180 = vsel %vm110, %v1124, 0.0
    %1181 = vadd.xlane.f32.xlu0 %v1180
    %v1182 = vpop.xlane.xlu0 %1181
    %v1183 = vsel %vm110, %v1125, 0.0
    %1184 = vadd.xlane.f32.xlu0 %v1183
    %v1185 = vpop.xlane.xlu0 %1184
    %v1186 = vsel %vm110, %v1126, 0.0
    %1187 = vadd.xlane.f32.xlu0 %v1186
    %v1188 = vpop.xlane.xlu0 %1187
    %v1189 = vsel %vm110, %v1127, 0.0
    %1190 = vadd.xlane.f32.xlu0 %v1189
    %v1191 = vpop.xlane.xlu0 %1190
    %v1192 = vsel %vm110, %v1128, 0.0
    %1193 = vadd.xlane.f32.xlu0 %v1192
    %v1194 = vpop.xlane.xlu0 %1193
    %v1195 = vsel %vm110, %v1129, 0.0
    %1196 = vadd.xlane.f32.xlu0 %v1195
    %v1197 = vpop.xlane.xlu0 %1196
    %v1198 = vsel %vm110, %v1130, 0.0
    %1199 = vadd.xlane.f32.xlu0 %v1198
    %v1200 = vpop.xlane.xlu0 %1199
    %v1201 = vsel %vm110, %v1131, 0.0
    %1202 = vadd.xlane.f32.xlu0 %v1201
    %v1203 = vpop.xlane.xlu0 %1202
    %v1204 = vsel %vm110, %v1132, 0.0
    %1205 = vadd.xlane.f32.xlu0 %v1204
    %v1206 = vpop.xlane.xlu0 %1205
    %v1207 = vsel %vm110, %v1133, 0.0
    %1208 = vadd.xlane.f32.xlu0 %v1207
    %v1209 = vpop.xlane.xlu0 %1208
    %v1210 = vsel %vm110, %v1134, 0.0
    %1211 = vadd.xlane.f32.xlu0 %v1210
    %v1212 = vpop.xlane.xlu0 %1211
    %v1213 = vsel %vm110, %v1135, 0.0
    %1214 = vadd.xlane.f32.xlu0 %v1213
    %v1215 = vpop.xlane.xlu0 %1214
    %v1216 = vsel %vm110, %v1136, 0.0
    %1217 = vadd.xlane.f32.xlu0 %v1216
    %v1218 = vpop.xlane.xlu0 %1217
    %v1219 = vsel %vm110, %v1137, 0.0
    %1220 = vadd.xlane.f32.xlu0 %v1219
    %v1221 = vpop.xlane.xlu0 %1220
    %v1222 = vsel %vm110, %v1138, 0.0
    %1223 = vadd.xlane.f32.xlu0 %v1222
    %v1224 = vpop.xlane.xlu0 %1223
    %v1225 = vsel %vm110, %v1139, 0.0
    %1226 = vadd.xlane.f32.xlu0 %v1225
    %v1227 = vpop.xlane.xlu0 %1226
    %v1228 = vsel %vm110, %v1140, 0.0
    %1229 = vadd.xlane.f32.xlu0 %v1228
    %v1230 = vpop.xlane.xlu0 %1229
    %v1231 = vsel %vm110, %v1141, 0.0
    %1232 = vadd.xlane.f32.xlu0 %v1231
    %v1233 = vpop.xlane.xlu0 %1232
    %v1234 = vsel %vm110, %v1142, 0.0
    %1235 = vadd.xlane.f32.xlu0 %v1234
    %v1236 = vpop.xlane.xlu0 %1235
    %v1237 = vsel %vm110, %v1143, 0.0
    %1238 = vadd.xlane.f32.xlu0 %v1237
    %v1239 = vpop.xlane.xlu0 %1238
    %v1272 = vlaneseq
    %v1273 = vshrl.u32 %v1272, 7
    %v1274 = vsub.s32 0, %v1273
    %v1275 = vrot.slane %v1146, %v1274
    %v1276 = vlaneseq
    %v1277 = vshrl.u32 %v1276, 7
    %v1278 = vsub.s32 1, %v1277
    %v1279 = vrot.slane %v1146, %v1278
    %v1280 = vlaneseq
    %v1281 = vshrl.u32 %v1280, 7
    %v1282 = vsub.s32 2, %v1281
    %v1283 = vrot.slane %v1146, %v1282
    %v1284 = vlaneseq
    %v1285 = vshrl.u32 %v1284, 7
    %v1286 = vsub.s32 3, %v1285
    %v1287 = vrot.slane %v1146, %v1286
    %v1288 = vlaneseq
    %v1289 = vshrl.u32 %v1288, 7
    %v1290 = vsub.s32 4, %v1289
    %v1291 = vrot.slane %v1146, %v1290
    %v1292 = vlaneseq
    %v1293 = vshrl.u32 %v1292, 7
    %v1294 = vsub.s32 5, %v1293
    %v1295 = vrot.slane %v1146, %v1294
    %v1296 = vlaneseq
    %v1297 = vshrl.u32 %v1296, 7
    %v1298 = vsub.s32 6, %v1297
    %v1299 = vrot.slane %v1146, %v1298
    %v1300 = vlaneseq
    %v1301 = vshrl.u32 %v1300, 7
    %v1302 = vsub.s32 7, %v1301
    %v1303 = vrot.slane %v1146, %v1302
    %v1304 = vlaneseq
    %v1305 = vshrl.u32 %v1304, 7
    %v1306 = vsub.s32 0, %v1305
    %v1307 = vrot.slane %v1149, %v1306
    %v1308 = vlaneseq
    %v1309 = vshrl.u32 %v1308, 7
    %v1310 = vsub.s32 1, %v1309
    %v1311 = vrot.slane %v1149, %v1310
    %v1312 = vlaneseq
    %v1313 = vshrl.u32 %v1312, 7
    %v1314 = vsub.s32 2, %v1313
    %v1315 = vrot.slane %v1149, %v1314
    %v1316 = vlaneseq
    %v1317 = vshrl.u32 %v1316, 7
    %v1318 = vsub.s32 3, %v1317
    %v1319 = vrot.slane %v1149, %v1318
    %v1320 = vlaneseq
    %v1321 = vshrl.u32 %v1320, 7
    %v1322 = vsub.s32 4, %v1321
    %v1323 = vrot.slane %v1149, %v1322
    %v1324 = vlaneseq
    %v1325 = vshrl.u32 %v1324, 7
    %v1326 = vsub.s32 5, %v1325
    %v1327 = vrot.slane %v1149, %v1326
    %v1328 = vlaneseq
    %v1329 = vshrl.u32 %v1328, 7
    %v1330 = vsub.s32 6, %v1329
    %v1331 = vrot.slane %v1149, %v1330
    %v1332 = vlaneseq
    %v1333 = vshrl.u32 %v1332, 7
    %v1334 = vsub.s32 7, %v1333
    %v1335 = vrot.slane %v1149, %v1334
    %v1336 = vlaneseq
    %v1337 = vshrl.u32 %v1336, 7
    %v1338 = vsub.s32 0, %v1337
    %v1339 = vrot.slane %v1152, %v1338
    %v1340 = vlaneseq
    %v1341 = vshrl.u32 %v1340, 7
    %v1342 = vsub.s32 1, %v1341
    %v1343 = vrot.slane %v1152, %v1342
    %v1344 = vlaneseq
    %v1345 = vshrl.u32 %v1344, 7
    %v1346 = vsub.s32 2, %v1345
    %v1347 = vrot.slane %v1152, %v1346
    %v1348 = vlaneseq
    %v1349 = vshrl.u32 %v1348, 7
    %v1350 = vsub.s32 3, %v1349
    %v1351 = vrot.slane %v1152, %v1350
    %v1352 = vlaneseq
    %v1353 = vshrl.u32 %v1352, 7
    %v1354 = vsub.s32 4, %v1353
    %v1355 = vrot.slane %v1152, %v1354
    %v1356 = vlaneseq
    %v1357 = vshrl.u32 %v1356, 7
    %v1358 = vsub.s32 5, %v1357
    %v1359 = vrot.slane %v1152, %v1358
    %v1360 = vlaneseq
    %v1361 = vshrl.u32 %v1360, 7
    %v1362 = vsub.s32 6, %v1361
    %v1363 = vrot.slane %v1152, %v1362
    %v1364 = vlaneseq
    %v1365 = vshrl.u32 %v1364, 7
    %v1366 = vsub.s32 7, %v1365
    %v1367 = vrot.slane %v1152, %v1366
    %v1368 = vlaneseq
    %v1369 = vshrl.u32 %v1368, 7
    %v1370 = vsub.s32 0, %v1369
    %v1371 = vrot.slane %v1155, %v1370
    %v1372 = vlaneseq
    %v1373 = vshrl.u32 %v1372, 7
    %v1374 = vsub.s32 1, %v1373
    %v1375 = vrot.slane %v1155, %v1374
    %v1376 = vlaneseq
    %v1377 = vshrl.u32 %v1376, 7
    %v1378 = vsub.s32 2, %v1377
    %v1379 = vrot.slane %v1155, %v1378
    %v1380 = vlaneseq
    %v1381 = vshrl.u32 %v1380, 7
    %v1382 = vsub.s32 3, %v1381
    %v1383 = vrot.slane %v1155, %v1382
    %v1384 = vlaneseq
    %v1385 = vshrl.u32 %v1384, 7
    %v1386 = vsub.s32 4, %v1385
    %v1387 = vrot.slane %v1155, %v1386
    %v1388 = vlaneseq
    %v1389 = vshrl.u32 %v1388, 7
    %v1390 = vsub.s32 5, %v1389
    %v1391 = vrot.slane %v1155, %v1390
    %v1392 = vlaneseq
    %v1393 = vshrl.u32 %v1392, 7
    %v1394 = vsub.s32 6, %v1393
    %v1395 = vrot.slane %v1155, %v1394
    %v1396 = vlaneseq
    %v1397 = vshrl.u32 %v1396, 7
    %v1398 = vsub.s32 7, %v1397
    %v1399 = vrot.slane %v1155, %v1398
    %v1400 = vlaneseq
    %v1401 = vshrl.u32 %v1400, 7
    %v1402 = vsub.s32 0, %v1401
    %v1403 = vrot.slane %v1158, %v1402
    %v1404 = vlaneseq
    %v1405 = vshrl.u32 %v1404, 7
    %v1406 = vsub.s32 1, %v1405
    %v1407 = vrot.slane %v1158, %v1406
    %v1408 = vlaneseq
    %v1409 = vshrl.u32 %v1408, 7
    %v1410 = vsub.s32 2, %v1409
    %v1411 = vrot.slane %v1158, %v1410
    %v1412 = vlaneseq
    %v1413 = vshrl.u32 %v1412, 7
    %v1414 = vsub.s32 3, %v1413
    %v1415 = vrot.slane %v1158, %v1414
    %v1416 = vlaneseq
    %v1417 = vshrl.u32 %v1416, 7
    %v1418 = vsub.s32 4, %v1417
    %v1419 = vrot.slane %v1158, %v1418
    %v1420 = vlaneseq
    %v1421 = vshrl.u32 %v1420, 7
    %v1422 = vsub.s32 5, %v1421
    %v1423 = vrot.slane %v1158, %v1422
    %v1424 = vlaneseq
    %v1425 = vshrl.u32 %v1424, 7
    %v1426 = vsub.s32 6, %v1425
    %v1427 = vrot.slane %v1158, %v1426
    %v1428 = vlaneseq
    %v1429 = vshrl.u32 %v1428, 7
    %v1430 = vsub.s32 7, %v1429
    %v1431 = vrot.slane %v1158, %v1430
    %v1432 = vlaneseq
    %v1433 = vshrl.u32 %v1432, 7
    %v1434 = vsub.s32 0, %v1433
    %v1435 = vrot.slane %v1161, %v1434
    %v1436 = vlaneseq
    %v1437 = vshrl.u32 %v1436, 7
    %v1438 = vsub.s32 1, %v1437
    %v1439 = vrot.slane %v1161, %v1438
    %v1440 = vlaneseq
    %v1441 = vshrl.u32 %v1440, 7
    %v1442 = vsub.s32 2, %v1441
    %v1443 = vrot.slane %v1161, %v1442
    %v1444 = vlaneseq
    %v1445 = vshrl.u32 %v1444, 7
    %v1446 = vsub.s32 3, %v1445
    %v1447 = vrot.slane %v1161, %v1446
    %v1448 = vlaneseq
    %v1449 = vshrl.u32 %v1448, 7
    %v1450 = vsub.s32 4, %v1449
    %v1451 = vrot.slane %v1161, %v1450
    %v1452 = vlaneseq
    %v1453 = vshrl.u32 %v1452, 7
    %v1454 = vsub.s32 5, %v1453
    %v1455 = vrot.slane %v1161, %v1454
    %v1456 = vlaneseq
    %v1457 = vshrl.u32 %v1456, 7
    %v1458 = vsub.s32 6, %v1457
    %v1459 = vrot.slane %v1161, %v1458
    %v1460 = vlaneseq
    %v1461 = vshrl.u32 %v1460, 7
    %v1462 = vsub.s32 7, %v1461
    %v1463 = vrot.slane %v1161, %v1462
    %v1464 = vlaneseq
    %v1465 = vshrl.u32 %v1464, 7
    %v1466 = vsub.s32 0, %v1465
    %v1467 = vrot.slane %v1164, %v1466
    %v1468 = vlaneseq
    %v1469 = vshrl.u32 %v1468, 7
    %v1470 = vsub.s32 1, %v1469
    %v1471 = vrot.slane %v1164, %v1470
    %v1472 = vlaneseq
    %v1473 = vshrl.u32 %v1472, 7
    %v1474 = vsub.s32 2, %v1473
    %v1475 = vrot.slane %v1164, %v1474
    %v1476 = vlaneseq
    %v1477 = vshrl.u32 %v1476, 7
    %v1478 = vsub.s32 3, %v1477
    %v1479 = vrot.slane %v1164, %v1478
    %v1480 = vlaneseq
    %v1481 = vshrl.u32 %v1480, 7
    %v1482 = vsub.s32 4, %v1481
    %v1483 = vrot.slane %v1164, %v1482
    %v1484 = vlaneseq
    %v1485 = vshrl.u32 %v1484, 7
    %v1486 = vsub.s32 5, %v1485
    %v1487 = vrot.slane %v1164, %v1486
    %v1488 = vlaneseq
    %v1489 = vshrl.u32 %v1488, 7
    %v1490 = vsub.s32 6, %v1489
    %v1491 = vrot.slane %v1164, %v1490
    %v1492 = vlaneseq
    %v1493 = vshrl.u32 %v1492, 7
    %v1494 = vsub.s32 7, %v1493
    %v1495 = vrot.slane %v1164, %v1494
    %v1496 = vlaneseq
    %v1497 = vshrl.u32 %v1496, 7
    %v1498 = vsub.s32 0, %v1497
    %v1499 = vrot.slane %v1167, %v1498
    %v1500 = vlaneseq
    %v1501 = vshrl.u32 %v1500, 7
    %v1502 = vsub.s32 1, %v1501
    %v1503 = vrot.slane %v1167, %v1502
    %v1504 = vlaneseq
    %v1505 = vshrl.u32 %v1504, 7
    %v1506 = vsub.s32 2, %v1505
    %v1507 = vrot.slane %v1167, %v1506
    %v1508 = vlaneseq
    %v1509 = vshrl.u32 %v1508, 7
    %v1510 = vsub.s32 3, %v1509
    %v1511 = vrot.slane %v1167, %v1510
    %v1512 = vlaneseq
    %v1513 = vshrl.u32 %v1512, 7
    %v1514 = vsub.s32 4, %v1513
    %v1515 = vrot.slane %v1167, %v1514
    %v1516 = vlaneseq
    %v1517 = vshrl.u32 %v1516, 7
    %v1518 = vsub.s32 5, %v1517
    %v1519 = vrot.slane %v1167, %v1518
    %v1520 = vlaneseq
    %v1521 = vshrl.u32 %v1520, 7
    %v1522 = vsub.s32 6, %v1521
    %v1523 = vrot.slane %v1167, %v1522
    %v1524 = vlaneseq
    %v1525 = vshrl.u32 %v1524, 7
    %v1526 = vsub.s32 7, %v1525
    %v1527 = vrot.slane %v1167, %v1526
    %v1528 = vlaneseq
    %v1529 = vshrl.u32 %v1528, 7
    %v1530 = vsub.s32 0, %v1529
    %v1531 = vrot.slane %v1170, %v1530
    %v1532 = vlaneseq
    %v1533 = vshrl.u32 %v1532, 7
    %v1534 = vsub.s32 1, %v1533
    %v1535 = vrot.slane %v1170, %v1534
    %v1536 = vlaneseq
    %v1537 = vshrl.u32 %v1536, 7
    %v1538 = vsub.s32 2, %v1537
    %v1539 = vrot.slane %v1170, %v1538
    %v1540 = vlaneseq
    %v1541 = vshrl.u32 %v1540, 7
    %v1542 = vsub.s32 3, %v1541
    %v1543 = vrot.slane %v1170, %v1542
    %v1544 = vlaneseq
    %v1545 = vshrl.u32 %v1544, 7
    %v1546 = vsub.s32 4, %v1545
    %v1547 = vrot.slane %v1170, %v1546
    %v1548 = vlaneseq
    %v1549 = vshrl.u32 %v1548, 7
    %v1550 = vsub.s32 5, %v1549
    %v1551 = vrot.slane %v1170, %v1550
    %v1552 = vlaneseq
    %v1553 = vshrl.u32 %v1552, 7
    %v1554 = vsub.s32 6, %v1553
    %v1555 = vrot.slane %v1170, %v1554
    %v1556 = vlaneseq
    %v1557 = vshrl.u32 %v1556, 7
    %v1558 = vsub.s32 7, %v1557
    %v1559 = vrot.slane %v1170, %v1558
    %v1560 = vlaneseq
    %v1561 = vshrl.u32 %v1560, 7
    %v1562 = vsub.s32 0, %v1561
    %v1563 = vrot.slane %v1173, %v1562
    %v1564 = vlaneseq
    %v1565 = vshrl.u32 %v1564, 7
    %v1566 = vsub.s32 1, %v1565
    %v1567 = vrot.slane %v1173, %v1566
    %v1568 = vlaneseq
    %v1569 = vshrl.u32 %v1568, 7
    %v1570 = vsub.s32 2, %v1569
    %v1571 = vrot.slane %v1173, %v1570
    %v1572 = vlaneseq
    %v1573 = vshrl.u32 %v1572, 7
    %v1574 = vsub.s32 3, %v1573
    %v1575 = vrot.slane %v1173, %v1574
    %v1576 = vlaneseq
    %v1577 = vshrl.u32 %v1576, 7
    %v1578 = vsub.s32 4, %v1577
    %v1579 = vrot.slane %v1173, %v1578
    %v1580 = vlaneseq
    %v1581 = vshrl.u32 %v1580, 7
    %v1582 = vsub.s32 5, %v1581
    %v1583 = vrot.slane %v1173, %v1582
    %v1584 = vlaneseq
    %v1585 = vshrl.u32 %v1584, 7
    %v1586 = vsub.s32 6, %v1585
    %v1587 = vrot.slane %v1173, %v1586
    %v1588 = vlaneseq
    %v1589 = vshrl.u32 %v1588, 7
    %v1590 = vsub.s32 7, %v1589
    %v1591 = vrot.slane %v1173, %v1590
    %v1592 = vlaneseq
    %v1593 = vshrl.u32 %v1592, 7
    %v1594 = vsub.s32 0, %v1593
    %v1595 = vrot.slane %v1176, %v1594
    %v1596 = vlaneseq
    %v1597 = vshrl.u32 %v1596, 7
    %v1598 = vsub.s32 1, %v1597
    %v1599 = vrot.slane %v1176, %v1598
    %v1600 = vlaneseq
    %v1601 = vshrl.u32 %v1600, 7
    %v1602 = vsub.s32 2, %v1601
    %v1603 = vrot.slane %v1176, %v1602
    %v1604 = vlaneseq
    %v1605 = vshrl.u32 %v1604, 7
    %v1606 = vsub.s32 3, %v1605
    %v1607 = vrot.slane %v1176, %v1606
    %v1608 = vlaneseq
    %v1609 = vshrl.u32 %v1608, 7
    %v1610 = vsub.s32 4, %v1609
    %v1611 = vrot.slane %v1176, %v1610
    %v1612 = vlaneseq
    %v1613 = vshrl.u32 %v1612, 7
    %v1614 = vsub.s32 5, %v1613
    %v1615 = vrot.slane %v1176, %v1614
    %v1616 = vlaneseq
    %v1617 = vshrl.u32 %v1616, 7
    %v1618 = vsub.s32 6, %v1617
    %v1619 = vrot.slane %v1176, %v1618
    %v1620 = vlaneseq
    %v1621 = vshrl.u32 %v1620, 7
    %v1622 = vsub.s32 7, %v1621
    %v1623 = vrot.slane %v1176, %v1622
    %v1624 = vlaneseq
    %v1625 = vshrl.u32 %v1624, 7
    %v1626 = vsub.s32 0, %v1625
    %v1627 = vrot.slane %v1179, %v1626
    %v1628 = vlaneseq
    %v1629 = vshrl.u32 %v1628, 7
    %v1630 = vsub.s32 1, %v1629
    %v1631 = vrot.slane %v1179, %v1630
    %v1632 = vlaneseq
    %v1633 = vshrl.u32 %v1632, 7
    %v1634 = vsub.s32 2, %v1633
    %v1635 = vrot.slane %v1179, %v1634
    %v1636 = vlaneseq
    %v1637 = vshrl.u32 %v1636, 7
    %v1638 = vsub.s32 3, %v1637
    %v1639 = vrot.slane %v1179, %v1638
    %v1640 = vlaneseq
    %v1641 = vshrl.u32 %v1640, 7
    %v1642 = vsub.s32 4, %v1641
    %v1643 = vrot.slane %v1179, %v1642
    %v1644 = vlaneseq
    %v1645 = vshrl.u32 %v1644, 7
    %v1646 = vsub.s32 5, %v1645
    %v1647 = vrot.slane %v1179, %v1646
    %v1648 = vlaneseq
    %v1649 = vshrl.u32 %v1648, 7
    %v1650 = vsub.s32 6, %v1649
    %v1651 = vrot.slane %v1179, %v1650
    %v1652 = vlaneseq
    %v1653 = vshrl.u32 %v1652, 7
    %v1654 = vsub.s32 7, %v1653
    %v1655 = vrot.slane %v1179, %v1654
    %v1656 = vlaneseq
    %v1657 = vshrl.u32 %v1656, 7
    %v1658 = vsub.s32 0, %v1657
    %v1659 = vrot.slane %v1182, %v1658
    %v1660 = vlaneseq
    %v1661 = vshrl.u32 %v1660, 7
    %v1662 = vsub.s32 1, %v1661
    %v1663 = vrot.slane %v1182, %v1662
    %v1664 = vlaneseq
    %v1665 = vshrl.u32 %v1664, 7
    %v1666 = vsub.s32 2, %v1665
    %v1667 = vrot.slane %v1182, %v1666
    %v1668 = vlaneseq
    %v1669 = vshrl.u32 %v1668, 7
    %v1670 = vsub.s32 3, %v1669
    %v1671 = vrot.slane %v1182, %v1670
    %v1672 = vlaneseq
    %v1673 = vshrl.u32 %v1672, 7
    %v1674 = vsub.s32 4, %v1673
    %v1675 = vrot.slane %v1182, %v1674
    %v1676 = vlaneseq
    %v1677 = vshrl.u32 %v1676, 7
    %v1678 = vsub.s32 5, %v1677
    %v1679 = vrot.slane %v1182, %v1678
    %v1680 = vlaneseq
    %v1681 = vshrl.u32 %v1680, 7
    %v1682 = vsub.s32 6, %v1681
    %v1683 = vrot.slane %v1182, %v1682
    %v1684 = vlaneseq
    %v1685 = vshrl.u32 %v1684, 7
    %v1686 = vsub.s32 7, %v1685
    %v1687 = vrot.slane %v1182, %v1686
    %v1688 = vlaneseq
    %v1689 = vshrl.u32 %v1688, 7
    %v1690 = vsub.s32 0, %v1689
    %v1691 = vrot.slane %v1185, %v1690
    %v1692 = vlaneseq
    %v1693 = vshrl.u32 %v1692, 7
    %v1694 = vsub.s32 1, %v1693
    %v1695 = vrot.slane %v1185, %v1694
    %v1696 = vlaneseq
    %v1697 = vshrl.u32 %v1696, 7
    %v1698 = vsub.s32 2, %v1697
    %v1699 = vrot.slane %v1185, %v1698
    %v1700 = vlaneseq
    %v1701 = vshrl.u32 %v1700, 7
    %v1702 = vsub.s32 3, %v1701
    %v1703 = vrot.slane %v1185, %v1702
    %v1704 = vlaneseq
    %v1705 = vshrl.u32 %v1704, 7
    %v1706 = vsub.s32 4, %v1705
    %v1707 = vrot.slane %v1185, %v1706
    %v1708 = vlaneseq
    %v1709 = vshrl.u32 %v1708, 7
    %v1710 = vsub.s32 5, %v1709
    %v1711 = vrot.slane %v1185, %v1710
    %v1712 = vlaneseq
    %v1713 = vshrl.u32 %v1712, 7
    %v1714 = vsub.s32 6, %v1713
    %v1715 = vrot.slane %v1185, %v1714
    %v1716 = vlaneseq
    %v1717 = vshrl.u32 %v1716, 7
    %v1718 = vsub.s32 7, %v1717
    %v1719 = vrot.slane %v1185, %v1718
    %v1720 = vlaneseq
    %v1721 = vshrl.u32 %v1720, 7
    %v1722 = vsub.s32 0, %v1721
    %v1723 = vrot.slane %v1188, %v1722
    %v1724 = vlaneseq
    %v1725 = vshrl.u32 %v1724, 7
    %v1726 = vsub.s32 1, %v1725
    %v1727 = vrot.slane %v1188, %v1726
    %v1728 = vlaneseq
    %v1729 = vshrl.u32 %v1728, 7
    %v1730 = vsub.s32 2, %v1729
    %v1731 = vrot.slane %v1188, %v1730
    %v1732 = vlaneseq
    %v1733 = vshrl.u32 %v1732, 7
    %v1734 = vsub.s32 3, %v1733
    %v1735 = vrot.slane %v1188, %v1734
    %v1736 = vlaneseq
    %v1737 = vshrl.u32 %v1736, 7
    %v1738 = vsub.s32 4, %v1737
    %v1739 = vrot.slane %v1188, %v1738
    %v1740 = vlaneseq
    %v1741 = vshrl.u32 %v1740, 7
    %v1742 = vsub.s32 5, %v1741
    %v1743 = vrot.slane %v1188, %v1742
    %v1744 = vlaneseq
    %v1745 = vshrl.u32 %v1744, 7
    %v1746 = vsub.s32 6, %v1745
    %v1747 = vrot.slane %v1188, %v1746
    %v1748 = vlaneseq
    %v1749 = vshrl.u32 %v1748, 7
    %v1750 = vsub.s32 7, %v1749
    %v1751 = vrot.slane %v1188, %v1750
    %v1752 = vlaneseq
    %v1753 = vshrl.u32 %v1752, 7
    %v1754 = vsub.s32 0, %v1753
    %v1755 = vrot.slane %v1191, %v1754
    %v1756 = vlaneseq
    %v1757 = vshrl.u32 %v1756, 7
    %v1758 = vsub.s32 1, %v1757
    %v1759 = vrot.slane %v1191, %v1758
    %v1760 = vlaneseq
    %v1761 = vshrl.u32 %v1760, 7
    %v1762 = vsub.s32 2, %v1761
    %v1763 = vrot.slane %v1191, %v1762
    %v1764 = vlaneseq
    %v1765 = vshrl.u32 %v1764, 7
    %v1766 = vsub.s32 3, %v1765
    %v1767 = vrot.slane %v1191, %v1766
    %v1768 = vlaneseq
    %v1769 = vshrl.u32 %v1768, 7
    %v1770 = vsub.s32 4, %v1769
    %v1771 = vrot.slane %v1191, %v1770
    %v1772 = vlaneseq
    %v1773 = vshrl.u32 %v1772, 7
    %v1774 = vsub.s32 5, %v1773
    %v1775 = vrot.slane %v1191, %v1774
    %v1776 = vlaneseq
    %v1777 = vshrl.u32 %v1776, 7
    %v1778 = vsub.s32 6, %v1777
    %v1779 = vrot.slane %v1191, %v1778
    %v1780 = vlaneseq
    %v1781 = vshrl.u32 %v1780, 7
    %v1782 = vsub.s32 7, %v1781
    %v1783 = vrot.slane %v1191, %v1782
    %v1784 = vlaneseq
    %v1785 = vshrl.u32 %v1784, 7
    %v1786 = vsub.s32 0, %v1785
    %v1787 = vrot.slane %v1194, %v1786
    %v1788 = vlaneseq
    %v1789 = vshrl.u32 %v1788, 7
    %v1790 = vsub.s32 1, %v1789
    %v1791 = vrot.slane %v1194, %v1790
    %v1792 = vlaneseq
    %v1793 = vshrl.u32 %v1792, 7
    %v1794 = vsub.s32 2, %v1793
    %v1795 = vrot.slane %v1194, %v1794
    %v1796 = vlaneseq
    %v1797 = vshrl.u32 %v1796, 7
    %v1798 = vsub.s32 3, %v1797
    %v1799 = vrot.slane %v1194, %v1798
    %v1800 = vlaneseq
    %v1801 = vshrl.u32 %v1800, 7
    %v1802 = vsub.s32 4, %v1801
    %v1803 = vrot.slane %v1194, %v1802
    %v1804 = vlaneseq
    %v1805 = vshrl.u32 %v1804, 7
    %v1806 = vsub.s32 5, %v1805
    %v1807 = vrot.slane %v1194, %v1806
    %v1808 = vlaneseq
    %v1809 = vshrl.u32 %v1808, 7
    %v1810 = vsub.s32 6, %v1809
    %v1811 = vrot.slane %v1194, %v1810
    %v1812 = vlaneseq
    %v1813 = vshrl.u32 %v1812, 7
    %v1814 = vsub.s32 7, %v1813
    %v1815 = vrot.slane %v1194, %v1814
    %v1816 = vlaneseq
    %v1817 = vshrl.u32 %v1816, 7
    %v1818 = vsub.s32 0, %v1817
    %v1819 = vrot.slane %v1197, %v1818
    %v1820 = vlaneseq
    %v1821 = vshrl.u32 %v1820, 7
    %v1822 = vsub.s32 1, %v1821
    %v1823 = vrot.slane %v1197, %v1822
    %v1824 = vlaneseq
    %v1825 = vshrl.u32 %v1824, 7
    %v1826 = vsub.s32 2, %v1825
    %v1827 = vrot.slane %v1197, %v1826
    %v1828 = vlaneseq
    %v1829 = vshrl.u32 %v1828, 7
    %v1830 = vsub.s32 3, %v1829
    %v1831 = vrot.slane %v1197, %v1830
    %v1832 = vlaneseq
    %v1833 = vshrl.u32 %v1832, 7
    %v1834 = vsub.s32 4, %v1833
    %v1835 = vrot.slane %v1197, %v1834
    %v1836 = vlaneseq
    %v1837 = vshrl.u32 %v1836, 7
    %v1838 = vsub.s32 5, %v1837
    %v1839 = vrot.slane %v1197, %v1838
    %v1840 = vlaneseq
    %v1841 = vshrl.u32 %v1840, 7
    %v1842 = vsub.s32 6, %v1841
    %v1843 = vrot.slane %v1197, %v1842
    %v1844 = vlaneseq
    %v1845 = vshrl.u32 %v1844, 7
    %v1846 = vsub.s32 7, %v1845
    %v1847 = vrot.slane %v1197, %v1846
    %v1848 = vlaneseq
    %v1849 = vshrl.u32 %v1848, 7
    %v1850 = vsub.s32 0, %v1849
    %v1851 = vrot.slane %v1200, %v1850
    %v1852 = vlaneseq
    %v1853 = vshrl.u32 %v1852, 7
    %v1854 = vsub.s32 1, %v1853
    %v1855 = vrot.slane %v1200, %v1854
    %v1856 = vlaneseq
    %v1857 = vshrl.u32 %v1856, 7
    %v1858 = vsub.s32 2, %v1857
    %v1859 = vrot.slane %v1200, %v1858
    %v1860 = vlaneseq
    %v1861 = vshrl.u32 %v1860, 7
    %v1862 = vsub.s32 3, %v1861
    %v1863 = vrot.slane %v1200, %v1862
    %v1864 = vlaneseq
    %v1865 = vshrl.u32 %v1864, 7
    %v1866 = vsub.s32 4, %v1865
    %v1867 = vrot.slane %v1200, %v1866
    %v1868 = vlaneseq
    %v1869 = vshrl.u32 %v1868, 7
    %v1870 = vsub.s32 5, %v1869
    %v1871 = vrot.slane %v1200, %v1870
    %v1872 = vlaneseq
    %v1873 = vshrl.u32 %v1872, 7
    %v1874 = vsub.s32 6, %v1873
    %v1875 = vrot.slane %v1200, %v1874
    %v1876 = vlaneseq
    %v1877 = vshrl.u32 %v1876, 7
    %v1878 = vsub.s32 7, %v1877
    %v1879 = vrot.slane %v1200, %v1878
    %v1880 = vlaneseq
    %v1881 = vshrl.u32 %v1880, 7
    %v1882 = vsub.s32 0, %v1881
    %v1883 = vrot.slane %v1203, %v1882
    %v1884 = vlaneseq
    %v1885 = vshrl.u32 %v1884, 7
    %v1886 = vsub.s32 1, %v1885
    %v1887 = vrot.slane %v1203, %v1886
    %v1888 = vlaneseq
    %v1889 = vshrl.u32 %v1888, 7
    %v1890 = vsub.s32 2, %v1889
    %v1891 = vrot.slane %v1203, %v1890
    %v1892 = vlaneseq
    %v1893 = vshrl.u32 %v1892, 7
    %v1894 = vsub.s32 3, %v1893
    %v1895 = vrot.slane %v1203, %v1894
    %v1896 = vlaneseq
    %v1897 = vshrl.u32 %v1896, 7
    %v1898 = vsub.s32 4, %v1897
    %v1899 = vrot.slane %v1203, %v1898
    %v1900 = vlaneseq
    %v1901 = vshrl.u32 %v1900, 7
    %v1902 = vsub.s32 5, %v1901
    %v1903 = vrot.slane %v1203, %v1902
    %v1904 = vlaneseq
    %v1905 = vshrl.u32 %v1904, 7
    %v1906 = vsub.s32 6, %v1905
    %v1907 = vrot.slane %v1203, %v1906
    %v1908 = vlaneseq
    %v1909 = vshrl.u32 %v1908, 7
    %v1910 = vsub.s32 7, %v1909
    %v1911 = vrot.slane %v1203, %v1910
    %v1912 = vlaneseq
    %v1913 = vshrl.u32 %v1912, 7
    %v1914 = vsub.s32 0, %v1913
    %v1915 = vrot.slane %v1206, %v1914
    %v1916 = vlaneseq
    %v1917 = vshrl.u32 %v1916, 7
    %v1918 = vsub.s32 1, %v1917
    %v1919 = vrot.slane %v1206, %v1918
    %v1920 = vlaneseq
    %v1921 = vshrl.u32 %v1920, 7
    %v1922 = vsub.s32 2, %v1921
    %v1923 = vrot.slane %v1206, %v1922
    %v1924 = vlaneseq
    %v1925 = vshrl.u32 %v1924, 7
    %v1926 = vsub.s32 3, %v1925
    %v1927 = vrot.slane %v1206, %v1926
    %v1928 = vlaneseq
    %v1929 = vshrl.u32 %v1928, 7
    %v1930 = vsub.s32 4, %v1929
    %v1931 = vrot.slane %v1206, %v1930
    %v1932 = vlaneseq
    %v1933 = vshrl.u32 %v1932, 7
    %v1934 = vsub.s32 5, %v1933
    %v1935 = vrot.slane %v1206, %v1934
    %v1936 = vlaneseq
    %v1937 = vshrl.u32 %v1936, 7
    %v1938 = vsub.s32 6, %v1937
    %v1939 = vrot.slane %v1206, %v1938
    %v1940 = vlaneseq
    %v1941 = vshrl.u32 %v1940, 7
    %v1942 = vsub.s32 7, %v1941
    %v1943 = vrot.slane %v1206, %v1942
    %v1944 = vlaneseq
    %v1945 = vshrl.u32 %v1944, 7
    %v1946 = vsub.s32 0, %v1945
    %v1947 = vrot.slane %v1209, %v1946
    %v1948 = vlaneseq
    %v1949 = vshrl.u32 %v1948, 7
    %v1950 = vsub.s32 1, %v1949
    %v1951 = vrot.slane %v1209, %v1950
    %v1952 = vlaneseq
    %v1953 = vshrl.u32 %v1952, 7
    %v1954 = vsub.s32 2, %v1953
    %v1955 = vrot.slane %v1209, %v1954
    %v1956 = vlaneseq
    %v1957 = vshrl.u32 %v1956, 7
    %v1958 = vsub.s32 3, %v1957
    %v1959 = vrot.slane %v1209, %v1958
    %v1960 = vlaneseq
    %v1961 = vshrl.u32 %v1960, 7
    %v1962 = vsub.s32 4, %v1961
    %v1963 = vrot.slane %v1209, %v1962
    %v1964 = vlaneseq
    %v1965 = vshrl.u32 %v1964, 7
    %v1966 = vsub.s32 5, %v1965
    %v1967 = vrot.slane %v1209, %v1966
    %v1968 = vlaneseq
    %v1969 = vshrl.u32 %v1968, 7
    %v1970 = vsub.s32 6, %v1969
    %v1971 = vrot.slane %v1209, %v1970
    %v1972 = vlaneseq
    %v1973 = vshrl.u32 %v1972, 7
    %v1974 = vsub.s32 7, %v1973
    %v1975 = vrot.slane %v1209, %v1974
    %v1976 = vlaneseq
    %v1977 = vshrl.u32 %v1976, 7
    %v1978 = vsub.s32 0, %v1977
    %v1979 = vrot.slane %v1212, %v1978
    %v1980 = vlaneseq
    %v1981 = vshrl.u32 %v1980, 7
    %v1982 = vsub.s32 1, %v1981
    %v1983 = vrot.slane %v1212, %v1982
    %v1984 = vlaneseq
    %v1985 = vshrl.u32 %v1984, 7
    %v1986 = vsub.s32 2, %v1985
    %v1987 = vrot.slane %v1212, %v1986
    %v1988 = vlaneseq
    %v1989 = vshrl.u32 %v1988, 7
    %v1990 = vsub.s32 3, %v1989
    %v1991 = vrot.slane %v1212, %v1990
    %v1992 = vlaneseq
    %v1993 = vshrl.u32 %v1992, 7
    %v1994 = vsub.s32 4, %v1993
    %v1995 = vrot.slane %v1212, %v1994
    %v1996 = vlaneseq
    %v1997 = vshrl.u32 %v1996, 7
    %v1998 = vsub.s32 5, %v1997
    %v1999 = vrot.slane %v1212, %v1998
    %v2000 = vlaneseq
    %v2001 = vshrl.u32 %v2000, 7
    %v2002 = vsub.s32 6, %v2001
    %v2003 = vrot.slane %v1212, %v2002
    %v2004 = vlaneseq
    %v2005 = vshrl.u32 %v2004, 7
    %v2006 = vsub.s32 7, %v2005
    %v2007 = vrot.slane %v1212, %v2006
    %v2008 = vlaneseq
    %v2009 = vshrl.u32 %v2008, 7
    %v2010 = vsub.s32 0, %v2009
    %v2011 = vrot.slane %v1215, %v2010
    %v2012 = vlaneseq
    %v2013 = vshrl.u32 %v2012, 7
    %v2014 = vsub.s32 1, %v2013
    %v2015 = vrot.slane %v1215, %v2014
    %v2016 = vlaneseq
    %v2017 = vshrl.u32 %v2016, 7
    %v2018 = vsub.s32 2, %v2017
    %v2019 = vrot.slane %v1215, %v2018
    %v2020 = vlaneseq
    %v2021 = vshrl.u32 %v2020, 7
    %v2022 = vsub.s32 3, %v2021
    %v2023 = vrot.slane %v1215, %v2022
    %v2024 = vlaneseq
    %v2025 = vshrl.u32 %v2024, 7
    %v2026 = vsub.s32 4, %v2025
    %v2027 = vrot.slane %v1215, %v2026
    %v2028 = vlaneseq
    %v2029 = vshrl.u32 %v2028, 7
    %v2030 = vsub.s32 5, %v2029
    %v2031 = vrot.slane %v1215, %v2030
    %v2032 = vlaneseq
    %v2033 = vshrl.u32 %v2032, 7
    %v2034 = vsub.s32 6, %v2033
    %v2035 = vrot.slane %v1215, %v2034
    %v2036 = vlaneseq
    %v2037 = vshrl.u32 %v2036, 7
    %v2038 = vsub.s32 7, %v2037
    %v2039 = vrot.slane %v1215, %v2038
    %v2040 = vlaneseq
    %v2041 = vshrl.u32 %v2040, 7
    %v2042 = vsub.s32 0, %v2041
    %v2043 = vrot.slane %v1218, %v2042
    %v2044 = vlaneseq
    %v2045 = vshrl.u32 %v2044, 7
    %v2046 = vsub.s32 1, %v2045
    %v2047 = vrot.slane %v1218, %v2046
    %v2048 = vlaneseq
    %v2049 = vshrl.u32 %v2048, 7
    %v2050 = vsub.s32 2, %v2049
    %v2051 = vrot.slane %v1218, %v2050
    %v2052 = vlaneseq
    %v2053 = vshrl.u32 %v2052, 7
    %v2054 = vsub.s32 3, %v2053
    %v2055 = vrot.slane %v1218, %v2054
    %v2056 = vlaneseq
    %v2057 = vshrl.u32 %v2056, 7
    %v2058 = vsub.s32 4, %v2057
    %v2059 = vrot.slane %v1218, %v2058
    %v2060 = vlaneseq
    %v2061 = vshrl.u32 %v2060, 7
    %v2062 = vsub.s32 5, %v2061
    %v2063 = vrot.slane %v1218, %v2062
    %v2064 = vlaneseq
    %v2065 = vshrl.u32 %v2064, 7
    %v2066 = vsub.s32 6, %v2065
    %v2067 = vrot.slane %v1218, %v2066
    %v2068 = vlaneseq
    %v2069 = vshrl.u32 %v2068, 7
    %v2070 = vsub.s32 7, %v2069
    %v2071 = vrot.slane %v1218, %v2070
    %v2072 = vlaneseq
    %v2073 = vshrl.u32 %v2072, 7
    %v2074 = vsub.s32 0, %v2073
    %v2075 = vrot.slane %v1221, %v2074
    %v2076 = vlaneseq
    %v2077 = vshrl.u32 %v2076, 7
    %v2078 = vsub.s32 1, %v2077
    %v2079 = vrot.slane %v1221, %v2078
    %v2080 = vlaneseq
    %v2081 = vshrl.u32 %v2080, 7
    %v2082 = vsub.s32 2, %v2081
    %v2083 = vrot.slane %v1221, %v2082
    %v2084 = vlaneseq
    %v2085 = vshrl.u32 %v2084, 7
    %v2086 = vsub.s32 3, %v2085
    %v2087 = vrot.slane %v1221, %v2086
    %v2088 = vlaneseq
    %v2089 = vshrl.u32 %v2088, 7
    %v2090 = vsub.s32 4, %v2089
    %v2091 = vrot.slane %v1221, %v2090
    %v2092 = vlaneseq
    %v2093 = vshrl.u32 %v2092, 7
    %v2094 = vsub.s32 5, %v2093
    %v2095 = vrot.slane %v1221, %v2094
    %v2096 = vlaneseq
    %v2097 = vshrl.u32 %v2096, 7
    %v2098 = vsub.s32 6, %v2097
    %v2099 = vrot.slane %v1221, %v2098
    %v2100 = vlaneseq
    %v2101 = vshrl.u32 %v2100, 7
    %v2102 = vsub.s32 7, %v2101
    %v2103 = vrot.slane %v1221, %v2102
    %v2104 = vlaneseq
    %v2105 = vshrl.u32 %v2104, 7
    %v2106 = vsub.s32 0, %v2105
    %v2107 = vrot.slane %v1224, %v2106
    %v2108 = vlaneseq
    %v2109 = vshrl.u32 %v2108, 7
    %v2110 = vsub.s32 1, %v2109
    %v2111 = vrot.slane %v1224, %v2110
    %v2112 = vlaneseq
    %v2113 = vshrl.u32 %v2112, 7
    %v2114 = vsub.s32 2, %v2113
    %v2115 = vrot.slane %v1224, %v2114
    %v2116 = vlaneseq
    %v2117 = vshrl.u32 %v2116, 7
    %v2118 = vsub.s32 3, %v2117
    %v2119 = vrot.slane %v1224, %v2118
    %v2120 = vlaneseq
    %v2121 = vshrl.u32 %v2120, 7
    %v2122 = vsub.s32 4, %v2121
    %v2123 = vrot.slane %v1224, %v2122
    %v2124 = vlaneseq
    %v2125 = vshrl.u32 %v2124, 7
    %v2126 = vsub.s32 5, %v2125
    %v2127 = vrot.slane %v1224, %v2126
    %v2128 = vlaneseq
    %v2129 = vshrl.u32 %v2128, 7
    %v2130 = vsub.s32 6, %v2129
    %v2131 = vrot.slane %v1224, %v2130
    %v2132 = vlaneseq
    %v2133 = vshrl.u32 %v2132, 7
    %v2134 = vsub.s32 7, %v2133
    %v2135 = vrot.slane %v1224, %v2134
    %v2136 = vlaneseq
    %v2137 = vshrl.u32 %v2136, 7
    %v2138 = vsub.s32 0, %v2137
    %v2139 = vrot.slane %v1227, %v2138
    %v2140 = vlaneseq
    %v2141 = vshrl.u32 %v2140, 7
    %v2142 = vsub.s32 1, %v2141
    %v2143 = vrot.slane %v1227, %v2142
    %v2144 = vlaneseq
    %v2145 = vshrl.u32 %v2144, 7
    %v2146 = vsub.s32 2, %v2145
    %v2147 = vrot.slane %v1227, %v2146
    %v2148 = vlaneseq
    %v2149 = vshrl.u32 %v2148, 7
    %v2150 = vsub.s32 3, %v2149
    %v2151 = vrot.slane %v1227, %v2150
    %v2152 = vlaneseq
    %v2153 = vshrl.u32 %v2152, 7
    %v2154 = vsub.s32 4, %v2153
    %v2155 = vrot.slane %v1227, %v2154
    %v2156 = vlaneseq
    %v2157 = vshrl.u32 %v2156, 7
    %v2158 = vsub.s32 5, %v2157
    %v2159 = vrot.slane %v1227, %v2158
    %v2160 = vlaneseq
    %v2161 = vshrl.u32 %v2160, 7
    %v2162 = vsub.s32 6, %v2161
    %v2163 = vrot.slane %v1227, %v2162
    %v2164 = vlaneseq
    %v2165 = vshrl.u32 %v2164, 7
    %v2166 = vsub.s32 7, %v2165
    %v2167 = vrot.slane %v1227, %v2166
    %v2168 = vlaneseq
    %v2169 = vshrl.u32 %v2168, 7
    %v2170 = vsub.s32 0, %v2169
    %v2171 = vrot.slane %v1230, %v2170
    %v2172 = vlaneseq
    %v2173 = vshrl.u32 %v2172, 7
    %v2174 = vsub.s32 1, %v2173
    %v2175 = vrot.slane %v1230, %v2174
    %v2176 = vlaneseq
    %v2177 = vshrl.u32 %v2176, 7
    %v2178 = vsub.s32 2, %v2177
    %v2179 = vrot.slane %v1230, %v2178
    %v2180 = vlaneseq
    %v2181 = vshrl.u32 %v2180, 7
    %v2182 = vsub.s32 3, %v2181
    %v2183 = vrot.slane %v1230, %v2182
    %v2184 = vlaneseq
    %v2185 = vshrl.u32 %v2184, 7
    %v2186 = vsub.s32 4, %v2185
    %v2187 = vrot.slane %v1230, %v2186
    %v2188 = vlaneseq
    %v2189 = vshrl.u32 %v2188, 7
    %v2190 = vsub.s32 5, %v2189
    %v2191 = vrot.slane %v1230, %v2190
    %v2192 = vlaneseq
    %v2193 = vshrl.u32 %v2192, 7
    %v2194 = vsub.s32 6, %v2193
    %v2195 = vrot.slane %v1230, %v2194
    %v2196 = vlaneseq
    %v2197 = vshrl.u32 %v2196, 7
    %v2198 = vsub.s32 7, %v2197
    %v2199 = vrot.slane %v1230, %v2198
    %v2200 = vlaneseq
    %v2201 = vshrl.u32 %v2200, 7
    %v2202 = vsub.s32 0, %v2201
    %v2203 = vrot.slane %v1233, %v2202
    %v2204 = vlaneseq
    %v2205 = vshrl.u32 %v2204, 7
    %v2206 = vsub.s32 1, %v2205
    %v2207 = vrot.slane %v1233, %v2206
    %v2208 = vlaneseq
    %v2209 = vshrl.u32 %v2208, 7
    %v2210 = vsub.s32 2, %v2209
    %v2211 = vrot.slane %v1233, %v2210
    %v2212 = vlaneseq
    %v2213 = vshrl.u32 %v2212, 7
    %v2214 = vsub.s32 3, %v2213
    %v2215 = vrot.slane %v1233, %v2214
    %v2216 = vlaneseq
    %v2217 = vshrl.u32 %v2216, 7
    %v2218 = vsub.s32 4, %v2217
    %v2219 = vrot.slane %v1233, %v2218
    %v2220 = vlaneseq
    %v2221 = vshrl.u32 %v2220, 7
    %v2222 = vsub.s32 5, %v2221
    %v2223 = vrot.slane %v1233, %v2222
    %v2224 = vlaneseq
    %v2225 = vshrl.u32 %v2224, 7
    %v2226 = vsub.s32 6, %v2225
    %v2227 = vrot.slane %v1233, %v2226
    %v2228 = vlaneseq
    %v2229 = vshrl.u32 %v2228, 7
    %v2230 = vsub.s32 7, %v2229
    %v2231 = vrot.slane %v1233, %v2230
    %v2232 = vlaneseq
    %v2233 = vshrl.u32 %v2232, 7
    %v2234 = vsub.s32 0, %v2233
    %v2235 = vrot.slane %v1236, %v2234
    %v2236 = vlaneseq
    %v2237 = vshrl.u32 %v2236, 7
    %v2238 = vsub.s32 1, %v2237
    %v2239 = vrot.slane %v1236, %v2238
    %v2240 = vlaneseq
    %v2241 = vshrl.u32 %v2240, 7
    %v2242 = vsub.s32 2, %v2241
    %v2243 = vrot.slane %v1236, %v2242
    %v2244 = vlaneseq
    %v2245 = vshrl.u32 %v2244, 7
    %v2246 = vsub.s32 3, %v2245
    %v2247 = vrot.slane %v1236, %v2246
    %v2248 = vlaneseq
    %v2249 = vshrl.u32 %v2248, 7
    %v2250 = vsub.s32 4, %v2249
    %v2251 = vrot.slane %v1236, %v2250
    %v2252 = vlaneseq
    %v2253 = vshrl.u32 %v2252, 7
    %v2254 = vsub.s32 5, %v2253
    %v2255 = vrot.slane %v1236, %v2254
    %v2256 = vlaneseq
    %v2257 = vshrl.u32 %v2256, 7
    %v2258 = vsub.s32 6, %v2257
    %v2259 = vrot.slane %v1236, %v2258
    %v2260 = vlaneseq
    %v2261 = vshrl.u32 %v2260, 7
    %v2262 = vsub.s32 7, %v2261
    %v2263 = vrot.slane %v1236, %v2262
    %v2264 = vlaneseq
    %v2265 = vshrl.u32 %v2264, 7
    %v2266 = vsub.s32 0, %v2265
    %v2267 = vrot.slane %v1239, %v2266
    %v2268 = vlaneseq
    %v2269 = vshrl.u32 %v2268, 7
    %v2270 = vsub.s32 1, %v2269
    %v2271 = vrot.slane %v1239, %v2270
    %v2272 = vlaneseq
    %v2273 = vshrl.u32 %v2272, 7
    %v2274 = vsub.s32 2, %v2273
    %v2275 = vrot.slane %v1239, %v2274
    %v2276 = vlaneseq
    %v2277 = vshrl.u32 %v2276, 7
    %v2278 = vsub.s32 3, %v2277
    %v2279 = vrot.slane %v1239, %v2278
    %v2280 = vlaneseq
    %v2281 = vshrl.u32 %v2280, 7
    %v2282 = vsub.s32 4, %v2281
    %v2283 = vrot.slane %v1239, %v2282
    %v2284 = vlaneseq
    %v2285 = vshrl.u32 %v2284, 7
    %v2286 = vsub.s32 5, %v2285
    %v2287 = vrot.slane %v1239, %v2286
    %v2288 = vlaneseq
    %v2289 = vshrl.u32 %v2288, 7
    %v2290 = vsub.s32 6, %v2289
    %v2291 = vrot.slane %v1239, %v2290
    %v2292 = vlaneseq
    %v2293 = vshrl.u32 %v2292, 7
    %v2294 = vsub.s32 7, %v2293
    %v2295 = vrot.slane %v1239, %v2294
    %v2296 = vcombine.low %v1275, %v1279
    %v2297 = vcombine.low %v1283, %v1287
    %v2298 = vcombine.low %v1291, %v1295
    %v2299 = vcombine.low %v1299, %v1303
    %v2301 = vunpack.c.l.s4 1966171168
    %v2302 = vunpack.c.0.s8 %v2301
    %v2303 = vlaneseq
    %v2304 = vshrl.u32 %v2303, 7
    %v2305 = vsub.s32 %v2302, %v2304
    %v2306 = vrot.slane %v2296, %v2305
    %v2308 = vunpack.c.l.s4 1966171168
    %v2309 = vunpack.c.0.s8 %v2308
    %v2310 = vlaneseq
    %v2311 = vshrl.u32 %v2310, 7
    %v2312 = vsub.s32 %v2309, %v2311
    %v2313 = vrot.slane %v2297, %v2312
    %v2315 = vunpack.c.l.s4 1966171168
    %v2316 = vunpack.c.0.s8 %v2315
    %v2317 = vlaneseq
    %v2318 = vshrl.u32 %v2317, 7
    %v2319 = vsub.s32 %v2316, %v2318
    %v2320 = vrot.slane %v2298, %v2319
    %v2322 = vunpack.c.l.s4 1966171168
    %v2323 = vunpack.c.0.s8 %v2322
    %v2324 = vlaneseq
    %v2325 = vshrl.u32 %v2324, 7
    %v2326 = vsub.s32 %v2323, %v2325
    %v2327 = vrot.slane %v2299, %v2326
    %v2328 = vcombine.low %v2306, %v2313
    %v2329 = vcombine.low %v2320, %v2327
    %v2331 = vunpack.c.l.s4 1966171168
    %v2332 = vunpack.c.0.s8 %v2331
    %v2333 = vlaneseq
    %v2334 = vshrl.u32 %v2333, 7
    %v2335 = vsub.s32 %v2332, %v2334
    %v2336 = vrot.slane %v2328, %v2335
    %v2338 = vunpack.c.l.s4 1966171168
    %v2339 = vunpack.c.0.s8 %v2338
    %v2340 = vlaneseq
    %v2341 = vshrl.u32 %v2340, 7
    %v2342 = vsub.s32 %v2339, %v2341
    %v2343 = vrot.slane %v2329, %v2342
    %v2344 = vcombine.low %v2336, %v2343
    %v2345 = vcombine.low %v1307, %v1311
    %v2346 = vcombine.low %v1315, %v1319
    %v2347 = vcombine.low %v1323, %v1327
    %v2348 = vcombine.low %v1331, %v1335
    %v2350 = vunpack.c.l.s4 1966171168
    %v2351 = vunpack.c.0.s8 %v2350
    %v2352 = vlaneseq
    %v2353 = vshrl.u32 %v2352, 7
    %v2354 = vsub.s32 %v2351, %v2353
    %v2355 = vrot.slane %v2345, %v2354
    %v2357 = vunpack.c.l.s4 1966171168
    %v2358 = vunpack.c.0.s8 %v2357
    %v2359 = vlaneseq
    %v2360 = vshrl.u32 %v2359, 7
    %v2361 = vsub.s32 %v2358, %v2360
    %v2362 = vrot.slane %v2346, %v2361
    %v2364 = vunpack.c.l.s4 1966171168
    %v2365 = vunpack.c.0.s8 %v2364
    %v2366 = vlaneseq
    %v2367 = vshrl.u32 %v2366, 7
    %v2368 = vsub.s32 %v2365, %v2367
    %v2369 = vrot.slane %v2347, %v2368
    %v2371 = vunpack.c.l.s4 1966171168
    %v2372 = vunpack.c.0.s8 %v2371
    %v2373 = vlaneseq
    %v2374 = vshrl.u32 %v2373, 7
    %v2375 = vsub.s32 %v2372, %v2374
    %v2376 = vrot.slane %v2348, %v2375
    %v2377 = vcombine.low %v2355, %v2362
    %v2378 = vcombine.low %v2369, %v2376
    %v2380 = vunpack.c.l.s4 1966171168
    %v2381 = vunpack.c.0.s8 %v2380
    %v2382 = vlaneseq
    %v2383 = vshrl.u32 %v2382, 7
    %v2384 = vsub.s32 %v2381, %v2383
    %v2385 = vrot.slane %v2377, %v2384
    %v2387 = vunpack.c.l.s4 1966171168
    %v2388 = vunpack.c.0.s8 %v2387
    %v2389 = vlaneseq
    %v2390 = vshrl.u32 %v2389, 7
    %v2391 = vsub.s32 %v2388, %v2390
    %v2392 = vrot.slane %v2378, %v2391
    %v2393 = vcombine.low %v2385, %v2392
    %v2394 = vcombine.low %v1339, %v1343
    %v2395 = vcombine.low %v1347, %v1351
    %v2396 = vcombine.low %v1355, %v1359
    %v2397 = vcombine.low %v1363, %v1367
    %v2399 = vunpack.c.l.s4 1966171168
    %v2400 = vunpack.c.0.s8 %v2399
    %v2401 = vlaneseq
    %v2402 = vshrl.u32 %v2401, 7
    %v2403 = vsub.s32 %v2400, %v2402
    %v2404 = vrot.slane %v2394, %v2403
    %v2406 = vunpack.c.l.s4 1966171168
    %v2407 = vunpack.c.0.s8 %v2406
    %v2408 = vlaneseq
    %v2409 = vshrl.u32 %v2408, 7
    %v2410 = vsub.s32 %v2407, %v2409
    %v2411 = vrot.slane %v2395, %v2410
    %v2413 = vunpack.c.l.s4 1966171168
    %v2414 = vunpack.c.0.s8 %v2413
    %v2415 = vlaneseq
    %v2416 = vshrl.u32 %v2415, 7
    %v2417 = vsub.s32 %v2414, %v2416
    %v2418 = vrot.slane %v2396, %v2417
    %v2420 = vunpack.c.l.s4 1966171168
    %v2421 = vunpack.c.0.s8 %v2420
    %v2422 = vlaneseq
    %v2423 = vshrl.u32 %v2422, 7
    %v2424 = vsub.s32 %v2421, %v2423
    %v2425 = vrot.slane %v2397, %v2424
    %v2426 = vcombine.low %v2404, %v2411
    %v2427 = vcombine.low %v2418, %v2425
    %v2429 = vunpack.c.l.s4 1966171168
    %v2430 = vunpack.c.0.s8 %v2429
    %v2431 = vlaneseq
    %v2432 = vshrl.u32 %v2431, 7
    %v2433 = vsub.s32 %v2430, %v2432
    %v2434 = vrot.slane %v2426, %v2433
    %v2436 = vunpack.c.l.s4 1966171168
    %v2437 = vunpack.c.0.s8 %v2436
    %v2438 = vlaneseq
    %v2439 = vshrl.u32 %v2438, 7
    %v2440 = vsub.s32 %v2437, %v2439
    %v2441 = vrot.slane %v2427, %v2440
    %v2442 = vcombine.low %v2434, %v2441
    %v2443 = vcombine.low %v1371, %v1375
    %v2444 = vcombine.low %v1379, %v1383
    %v2445 = vcombine.low %v1387, %v1391
    %v2446 = vcombine.low %v1395, %v1399
    %v2448 = vunpack.c.l.s4 1966171168
    %v2449 = vunpack.c.0.s8 %v2448
    %v2450 = vlaneseq
    %v2451 = vshrl.u32 %v2450, 7
    %v2452 = vsub.s32 %v2449, %v2451
    %v2453 = vrot.slane %v2443, %v2452
    %v2455 = vunpack.c.l.s4 1966171168
    %v2456 = vunpack.c.0.s8 %v2455
    %v2457 = vlaneseq
    %v2458 = vshrl.u32 %v2457, 7
    %v2459 = vsub.s32 %v2456, %v2458
    %v2460 = vrot.slane %v2444, %v2459
    %v2462 = vunpack.c.l.s4 1966171168
    %v2463 = vunpack.c.0.s8 %v2462
    %v2464 = vlaneseq
    %v2465 = vshrl.u32 %v2464, 7
    %v2466 = vsub.s32 %v2463, %v2465
    %v2467 = vrot.slane %v2445, %v2466
    %v2469 = vunpack.c.l.s4 1966171168
    %v2470 = vunpack.c.0.s8 %v2469
    %v2471 = vlaneseq
    %v2472 = vshrl.u32 %v2471, 7
    %v2473 = vsub.s32 %v2470, %v2472
    %v2474 = vrot.slane %v2446, %v2473
    %v2475 = vcombine.low %v2453, %v2460
    %v2476 = vcombine.low %v2467, %v2474
    %v2478 = vunpack.c.l.s4 1966171168
    %v2479 = vunpack.c.0.s8 %v2478
    %v2480 = vlaneseq
    %v2481 = vshrl.u32 %v2480, 7
    %v2482 = vsub.s32 %v2479, %v2481
    %v2483 = vrot.slane %v2475, %v2482
    %v2485 = vunpack.c.l.s4 1966171168
    %v2486 = vunpack.c.0.s8 %v2485
    %v2487 = vlaneseq
    %v2488 = vshrl.u32 %v2487, 7
    %v2489 = vsub.s32 %v2486, %v2488
    %v2490 = vrot.slane %v2476, %v2489
    %v2491 = vcombine.low %v2483, %v2490
    %v2492 = vcombine.low %v1403, %v1407
    %v2493 = vcombine.low %v1411, %v1415
    %v2494 = vcombine.low %v1419, %v1423
    %v2495 = vcombine.low %v1427, %v1431
    %v2497 = vunpack.c.l.s4 1966171168
    %v2498 = vunpack.c.0.s8 %v2497
    %v2499 = vlaneseq
    %v2500 = vshrl.u32 %v2499, 7
    %v2501 = vsub.s32 %v2498, %v2500
    %v2502 = vrot.slane %v2492, %v2501
    %v2504 = vunpack.c.l.s4 1966171168
    %v2505 = vunpack.c.0.s8 %v2504
    %v2506 = vlaneseq
    %v2507 = vshrl.u32 %v2506, 7
    %v2508 = vsub.s32 %v2505, %v2507
    %v2509 = vrot.slane %v2493, %v2508
    %v2511 = vunpack.c.l.s4 1966171168
    %v2512 = vunpack.c.0.s8 %v2511
    %v2513 = vlaneseq
    %v2514 = vshrl.u32 %v2513, 7
    %v2515 = vsub.s32 %v2512, %v2514
    %v2516 = vrot.slane %v2494, %v2515
    %v2518 = vunpack.c.l.s4 1966171168
    %v2519 = vunpack.c.0.s8 %v2518
    %v2520 = vlaneseq
    %v2521 = vshrl.u32 %v2520, 7
    %v2522 = vsub.s32 %v2519, %v2521
    %v2523 = vrot.slane %v2495, %v2522
    %v2524 = vcombine.low %v2502, %v2509
    %v2525 = vcombine.low %v2516, %v2523
    %v2527 = vunpack.c.l.s4 1966171168
    %v2528 = vunpack.c.0.s8 %v2527
    %v2529 = vlaneseq
    %v2530 = vshrl.u32 %v2529, 7
    %v2531 = vsub.s32 %v2528, %v2530
    %v2532 = vrot.slane %v2524, %v2531
    %v2534 = vunpack.c.l.s4 1966171168
    %v2535 = vunpack.c.0.s8 %v2534
    %v2536 = vlaneseq
    %v2537 = vshrl.u32 %v2536, 7
    %v2538 = vsub.s32 %v2535, %v2537
    %v2539 = vrot.slane %v2525, %v2538
    %v2540 = vcombine.low %v2532, %v2539
    %v2541 = vcombine.low %v1435, %v1439
    %v2542 = vcombine.low %v1443, %v1447
    %v2543 = vcombine.low %v1451, %v1455
    %v2544 = vcombine.low %v1459, %v1463
    %v2546 = vunpack.c.l.s4 1966171168
    %v2547 = vunpack.c.0.s8 %v2546
    %v2548 = vlaneseq
    %v2549 = vshrl.u32 %v2548, 7
    %v2550 = vsub.s32 %v2547, %v2549
    %v2551 = vrot.slane %v2541, %v2550
    %v2553 = vunpack.c.l.s4 1966171168
    %v2554 = vunpack.c.0.s8 %v2553
    %v2555 = vlaneseq
    %v2556 = vshrl.u32 %v2555, 7
    %v2557 = vsub.s32 %v2554, %v2556
    %v2558 = vrot.slane %v2542, %v2557
    %v2560 = vunpack.c.l.s4 1966171168
    %v2561 = vunpack.c.0.s8 %v2560
    %v2562 = vlaneseq
    %v2563 = vshrl.u32 %v2562, 7
    %v2564 = vsub.s32 %v2561, %v2563
    %v2565 = vrot.slane %v2543, %v2564
    %v2567 = vunpack.c.l.s4 1966171168
    %v2568 = vunpack.c.0.s8 %v2567
    %v2569 = vlaneseq
    %v2570 = vshrl.u32 %v2569, 7
    %v2571 = vsub.s32 %v2568, %v2570
    %v2572 = vrot.slane %v2544, %v2571
    %v2573 = vcombine.low %v2551, %v2558
    %v2574 = vcombine.low %v2565, %v2572
    %v2576 = vunpack.c.l.s4 1966171168
    %v2577 = vunpack.c.0.s8 %v2576
    %v2578 = vlaneseq
    %v2579 = vshrl.u32 %v2578, 7
    %v2580 = vsub.s32 %v2577, %v2579
    %v2581 = vrot.slane %v2573, %v2580
    %v2583 = vunpack.c.l.s4 1966171168
    %v2584 = vunpack.c.0.s8 %v2583
    %v2585 = vlaneseq
    %v2586 = vshrl.u32 %v2585, 7
    %v2587 = vsub.s32 %v2584, %v2586
    %v2588 = vrot.slane %v2574, %v2587
    %v2589 = vcombine.low %v2581, %v2588
    %v2590 = vcombine.low %v1467, %v1471
    %v2591 = vcombine.low %v1475, %v1479
    %v2592 = vcombine.low %v1483, %v1487
    %v2593 = vcombine.low %v1491, %v1495
    %v2595 = vunpack.c.l.s4 1966171168
    %v2596 = vunpack.c.0.s8 %v2595
    %v2597 = vlaneseq
    %v2598 = vshrl.u32 %v2597, 7
    %v2599 = vsub.s32 %v2596, %v2598
    %v2600 = vrot.slane %v2590, %v2599
    %v2602 = vunpack.c.l.s4 1966171168
    %v2603 = vunpack.c.0.s8 %v2602
    %v2604 = vlaneseq
    %v2605 = vshrl.u32 %v2604, 7
    %v2606 = vsub.s32 %v2603, %v2605
    %v2607 = vrot.slane %v2591, %v2606
    %v2609 = vunpack.c.l.s4 1966171168
    %v2610 = vunpack.c.0.s8 %v2609
    %v2611 = vlaneseq
    %v2612 = vshrl.u32 %v2611, 7
    %v2613 = vsub.s32 %v2610, %v2612
    %v2614 = vrot.slane %v2592, %v2613
    %v2616 = vunpack.c.l.s4 1966171168
    %v2617 = vunpack.c.0.s8 %v2616
    %v2618 = vlaneseq
    %v2619 = vshrl.u32 %v2618, 7
    %v2620 = vsub.s32 %v2617, %v2619
    %v2621 = vrot.slane %v2593, %v2620
    %v2622 = vcombine.low %v2600, %v2607
    %v2623 = vcombine.low %v2614, %v2621
    %v2625 = vunpack.c.l.s4 1966171168
    %v2626 = vunpack.c.0.s8 %v2625
    %v2627 = vlaneseq
    %v2628 = vshrl.u32 %v2627, 7
    %v2629 = vsub.s32 %v2626, %v2628
    %v2630 = vrot.slane %v2622, %v2629
    %v2632 = vunpack.c.l.s4 1966171168
    %v2633 = vunpack.c.0.s8 %v2632
    %v2634 = vlaneseq
    %v2635 = vshrl.u32 %v2634, 7
    %v2636 = vsub.s32 %v2633, %v2635
    %v2637 = vrot.slane %v2623, %v2636
    %v2638 = vcombine.low %v2630, %v2637
    %v2639 = vcombine.low %v1499, %v1503
    %v2640 = vcombine.low %v1507, %v1511
    %v2641 = vcombine.low %v1515, %v1519
    %v2642 = vcombine.low %v1523, %v1527
    %v2644 = vunpack.c.l.s4 1966171168
    %v2645 = vunpack.c.0.s8 %v2644
    %v2646 = vlaneseq
    %v2647 = vshrl.u32 %v2646, 7
    %v2648 = vsub.s32 %v2645, %v2647
    %v2649 = vrot.slane %v2639, %v2648
    %v2651 = vunpack.c.l.s4 1966171168
    %v2652 = vunpack.c.0.s8 %v2651
    %v2653 = vlaneseq
    %v2654 = vshrl.u32 %v2653, 7
    %v2655 = vsub.s32 %v2652, %v2654
    %v2656 = vrot.slane %v2640, %v2655
    %v2658 = vunpack.c.l.s4 1966171168
    %v2659 = vunpack.c.0.s8 %v2658
    %v2660 = vlaneseq
    %v2661 = vshrl.u32 %v2660, 7
    %v2662 = vsub.s32 %v2659, %v2661
    %v2663 = vrot.slane %v2641, %v2662
    %v2665 = vunpack.c.l.s4 1966171168
    %v2666 = vunpack.c.0.s8 %v2665
    %v2667 = vlaneseq
    %v2668 = vshrl.u32 %v2667, 7
    %v2669 = vsub.s32 %v2666, %v2668
    %v2670 = vrot.slane %v2642, %v2669
    %v2671 = vcombine.low %v2649, %v2656
    %v2672 = vcombine.low %v2663, %v2670
    %v2674 = vunpack.c.l.s4 1966171168
    %v2675 = vunpack.c.0.s8 %v2674
    %v2676 = vlaneseq
    %v2677 = vshrl.u32 %v2676, 7
    %v2678 = vsub.s32 %v2675, %v2677
    %v2679 = vrot.slane %v2671, %v2678
    %v2681 = vunpack.c.l.s4 1966171168
    %v2682 = vunpack.c.0.s8 %v2681
    %v2683 = vlaneseq
    %v2684 = vshrl.u32 %v2683, 7
    %v2685 = vsub.s32 %v2682, %v2684
    %v2686 = vrot.slane %v2672, %v2685
    %v2687 = vcombine.low %v2679, %v2686
    %v2688 = vcombine.low %v1531, %v1535
    %v2689 = vcombine.low %v1539, %v1543
    %v2690 = vcombine.low %v1547, %v1551
    %v2691 = vcombine.low %v1555, %v1559
    %v2693 = vunpack.c.l.s4 1966171168
    %v2694 = vunpack.c.0.s8 %v2693
    %v2695 = vlaneseq
    %v2696 = vshrl.u32 %v2695, 7
    %v2697 = vsub.s32 %v2694, %v2696
    %v2698 = vrot.slane %v2688, %v2697
    %v2700 = vunpack.c.l.s4 1966171168
    %v2701 = vunpack.c.0.s8 %v2700
    %v2702 = vlaneseq
    %v2703 = vshrl.u32 %v2702, 7
    %v2704 = vsub.s32 %v2701, %v2703
    %v2705 = vrot.slane %v2689, %v2704
    %v2707 = vunpack.c.l.s4 1966171168
    %v2708 = vunpack.c.0.s8 %v2707
    %v2709 = vlaneseq
    %v2710 = vshrl.u32 %v2709, 7
    %v2711 = vsub.s32 %v2708, %v2710
    %v2712 = vrot.slane %v2690, %v2711
    %v2714 = vunpack.c.l.s4 1966171168
    %v2715 = vunpack.c.0.s8 %v2714
    %v2716 = vlaneseq
    %v2717 = vshrl.u32 %v2716, 7
    %v2718 = vsub.s32 %v2715, %v2717
    %v2719 = vrot.slane %v2691, %v2718
    %v2720 = vcombine.low %v2698, %v2705
    %v2721 = vcombine.low %v2712, %v2719
    %v2723 = vunpack.c.l.s4 1966171168
    %v2724 = vunpack.c.0.s8 %v2723
    %v2725 = vlaneseq
    %v2726 = vshrl.u32 %v2725, 7
    %v2727 = vsub.s32 %v2724, %v2726
    %v2728 = vrot.slane %v2720, %v2727
    %v2730 = vunpack.c.l.s4 1966171168
    %v2731 = vunpack.c.0.s8 %v2730
    %v2732 = vlaneseq
    %v2733 = vshrl.u32 %v2732, 7
    %v2734 = vsub.s32 %v2731, %v2733
    %v2735 = vrot.slane %v2721, %v2734
    %v2736 = vcombine.low %v2728, %v2735
    %v2737 = vcombine.low %v1563, %v1567
    %v2738 = vcombine.low %v1571, %v1575
    %v2739 = vcombine.low %v1579, %v1583
    %v2740 = vcombine.low %v1587, %v1591
    %v2742 = vunpack.c.l.s4 1966171168
    %v2743 = vunpack.c.0.s8 %v2742
    %v2744 = vlaneseq
    %v2745 = vshrl.u32 %v2744, 7
    %v2746 = vsub.s32 %v2743, %v2745
    %v2747 = vrot.slane %v2737, %v2746
    %v2749 = vunpack.c.l.s4 1966171168
    %v2750 = vunpack.c.0.s8 %v2749
    %v2751 = vlaneseq
    %v2752 = vshrl.u32 %v2751, 7
    %v2753 = vsub.s32 %v2750, %v2752
    %v2754 = vrot.slane %v2738, %v2753
    %v2756 = vunpack.c.l.s4 1966171168
    %v2757 = vunpack.c.0.s8 %v2756
    %v2758 = vlaneseq
    %v2759 = vshrl.u32 %v2758, 7
    %v2760 = vsub.s32 %v2757, %v2759
    %v2761 = vrot.slane %v2739, %v2760
    %v2763 = vunpack.c.l.s4 1966171168
    %v2764 = vunpack.c.0.s8 %v2763
    %v2765 = vlaneseq
    %v2766 = vshrl.u32 %v2765, 7
    %v2767 = vsub.s32 %v2764, %v2766
    %v2768 = vrot.slane %v2740, %v2767
    %v2769 = vcombine.low %v2747, %v2754
    %v2770 = vcombine.low %v2761, %v2768
    %v2772 = vunpack.c.l.s4 1966171168
    %v2773 = vunpack.c.0.s8 %v2772
    %v2774 = vlaneseq
    %v2775 = vshrl.u32 %v2774, 7
    %v2776 = vsub.s32 %v2773, %v2775
    %v2777 = vrot.slane %v2769, %v2776
    %v2779 = vunpack.c.l.s4 1966171168
    %v2780 = vunpack.c.0.s8 %v2779
    %v2781 = vlaneseq
    %v2782 = vshrl.u32 %v2781, 7
    %v2783 = vsub.s32 %v2780, %v2782
    %v2784 = vrot.slane %v2770, %v2783
    %v2785 = vcombine.low %v2777, %v2784
    %v2786 = vcombine.low %v1595, %v1599
    %v2787 = vcombine.low %v1603, %v1607
    %v2788 = vcombine.low %v1611, %v1615
    %v2789 = vcombine.low %v1619, %v1623
    %v2791 = vunpack.c.l.s4 1966171168
    %v2792 = vunpack.c.0.s8 %v2791
    %v2793 = vlaneseq
    %v2794 = vshrl.u32 %v2793, 7
    %v2795 = vsub.s32 %v2792, %v2794
    %v2796 = vrot.slane %v2786, %v2795
    %v2798 = vunpack.c.l.s4 1966171168
    %v2799 = vunpack.c.0.s8 %v2798
    %v2800 = vlaneseq
    %v2801 = vshrl.u32 %v2800, 7
    %v2802 = vsub.s32 %v2799, %v2801
    %v2803 = vrot.slane %v2787, %v2802
    %v2805 = vunpack.c.l.s4 1966171168
    %v2806 = vunpack.c.0.s8 %v2805
    %v2807 = vlaneseq
    %v2808 = vshrl.u32 %v2807, 7
    %v2809 = vsub.s32 %v2806, %v2808
    %v2810 = vrot.slane %v2788, %v2809
    %v2812 = vunpack.c.l.s4 1966171168
    %v2813 = vunpack.c.0.s8 %v2812
    %v2814 = vlaneseq
    %v2815 = vshrl.u32 %v2814, 7
    %v2816 = vsub.s32 %v2813, %v2815
    %v2817 = vrot.slane %v2789, %v2816
    %v2818 = vcombine.low %v2796, %v2803
    %v2819 = vcombine.low %v2810, %v2817
    %v2821 = vunpack.c.l.s4 1966171168
    %v2822 = vunpack.c.0.s8 %v2821
    %v2823 = vlaneseq
    %v2824 = vshrl.u32 %v2823, 7
    %v2825 = vsub.s32 %v2822, %v2824
    %v2826 = vrot.slane %v2818, %v2825
    %v2828 = vunpack.c.l.s4 1966171168
    %v2829 = vunpack.c.0.s8 %v2828
    %v2830 = vlaneseq
    %v2831 = vshrl.u32 %v2830, 7
    %v2832 = vsub.s32 %v2829, %v2831
    %v2833 = vrot.slane %v2819, %v2832
    %v2834 = vcombine.low %v2826, %v2833
    %v2835 = vcombine.low %v1627, %v1631
    %v2836 = vcombine.low %v1635, %v1639
    %v2837 = vcombine.low %v1643, %v1647
    %v2838 = vcombine.low %v1651, %v1655
    %v2840 = vunpack.c.l.s4 1966171168
    %v2841 = vunpack.c.0.s8 %v2840
    %v2842 = vlaneseq
    %v2843 = vshrl.u32 %v2842, 7
    %v2844 = vsub.s32 %v2841, %v2843
    %v2845 = vrot.slane %v2835, %v2844
    %v2847 = vunpack.c.l.s4 1966171168
    %v2848 = vunpack.c.0.s8 %v2847
    %v2849 = vlaneseq
    %v2850 = vshrl.u32 %v2849, 7
    %v2851 = vsub.s32 %v2848, %v2850
    %v2852 = vrot.slane %v2836, %v2851
    %v2854 = vunpack.c.l.s4 1966171168
    %v2855 = vunpack.c.0.s8 %v2854
    %v2856 = vlaneseq
    %v2857 = vshrl.u32 %v2856, 7
    %v2858 = vsub.s32 %v2855, %v2857
    %v2859 = vrot.slane %v2837, %v2858
    %v2861 = vunpack.c.l.s4 1966171168
    %v2862 = vunpack.c.0.s8 %v2861
    %v2863 = vlaneseq
    %v2864 = vshrl.u32 %v2863, 7
    %v2865 = vsub.s32 %v2862, %v2864
    %v2866 = vrot.slane %v2838, %v2865
    %v2867 = vcombine.low %v2845, %v2852
    %v2868 = vcombine.low %v2859, %v2866
    %v2870 = vunpack.c.l.s4 1966171168
    %v2871 = vunpack.c.0.s8 %v2870
    %v2872 = vlaneseq
    %v2873 = vshrl.u32 %v2872, 7
    %v2874 = vsub.s32 %v2871, %v2873
    %v2875 = vrot.slane %v2867, %v2874
    %v2877 = vunpack.c.l.s4 1966171168
    %v2878 = vunpack.c.0.s8 %v2877
    %v2879 = vlaneseq
    %v2880 = vshrl.u32 %v2879, 7
    %v2881 = vsub.s32 %v2878, %v2880
    %v2882 = vrot.slane %v2868, %v2881
    %v2883 = vcombine.low %v2875, %v2882
    %v2884 = vcombine.low %v1659, %v1663
    %v2885 = vcombine.low %v1667, %v1671
    %v2886 = vcombine.low %v1675, %v1679
    %v2887 = vcombine.low %v1683, %v1687
    %v2889 = vunpack.c.l.s4 1966171168
    %v2890 = vunpack.c.0.s8 %v2889
    %v2891 = vlaneseq
    %v2892 = vshrl.u32 %v2891, 7
    %v2893 = vsub.s32 %v2890, %v2892
    %v2894 = vrot.slane %v2884, %v2893
    %v2896 = vunpack.c.l.s4 1966171168
    %v2897 = vunpack.c.0.s8 %v2896
    %v2898 = vlaneseq
    %v2899 = vshrl.u32 %v2898, 7
    %v2900 = vsub.s32 %v2897, %v2899
    %v2901 = vrot.slane %v2885, %v2900
    %v2903 = vunpack.c.l.s4 1966171168
    %v2904 = vunpack.c.0.s8 %v2903
    %v2905 = vlaneseq
    %v2906 = vshrl.u32 %v2905, 7
    %v2907 = vsub.s32 %v2904, %v2906
    %v2908 = vrot.slane %v2886, %v2907
    %v2910 = vunpack.c.l.s4 1966171168
    %v2911 = vunpack.c.0.s8 %v2910
    %v2912 = vlaneseq
    %v2913 = vshrl.u32 %v2912, 7
    %v2914 = vsub.s32 %v2911, %v2913
    %v2915 = vrot.slane %v2887, %v2914
    %v2916 = vcombine.low %v2894, %v2901
    %v2917 = vcombine.low %v2908, %v2915
    %v2919 = vunpack.c.l.s4 1966171168
    %v2920 = vunpack.c.0.s8 %v2919
    %v2921 = vlaneseq
    %v2922 = vshrl.u32 %v2921, 7
    %v2923 = vsub.s32 %v2920, %v2922
    %v2924 = vrot.slane %v2916, %v2923
    %v2926 = vunpack.c.l.s4 1966171168
    %v2927 = vunpack.c.0.s8 %v2926
    %v2928 = vlaneseq
    %v2929 = vshrl.u32 %v2928, 7
    %v2930 = vsub.s32 %v2927, %v2929
    %v2931 = vrot.slane %v2917, %v2930
    %v2932 = vcombine.low %v2924, %v2931
    %v2933 = vcombine.low %v1691, %v1695
    %v2934 = vcombine.low %v1699, %v1703
    %v2935 = vcombine.low %v1707, %v1711
    %v2936 = vcombine.low %v1715, %v1719
    %v2938 = vunpack.c.l.s4 1966171168
    %v2939 = vunpack.c.0.s8 %v2938
    %v2940 = vlaneseq
    %v2941 = vshrl.u32 %v2940, 7
    %v2942 = vsub.s32 %v2939, %v2941
    %v2943 = vrot.slane %v2933, %v2942
    %v2945 = vunpack.c.l.s4 1966171168
    %v2946 = vunpack.c.0.s8 %v2945
    %v2947 = vlaneseq
    %v2948 = vshrl.u32 %v2947, 7
    %v2949 = vsub.s32 %v2946, %v2948
    %v2950 = vrot.slane %v2934, %v2949
    %v2952 = vunpack.c.l.s4 1966171168
    %v2953 = vunpack.c.0.s8 %v2952
    %v2954 = vlaneseq
    %v2955 = vshrl.u32 %v2954, 7
    %v2956 = vsub.s32 %v2953, %v2955
    %v2957 = vrot.slane %v2935, %v2956
    %v2959 = vunpack.c.l.s4 1966171168
    %v2960 = vunpack.c.0.s8 %v2959
    %v2961 = vlaneseq
    %v2962 = vshrl.u32 %v2961, 7
    %v2963 = vsub.s32 %v2960, %v2962
    %v2964 = vrot.slane %v2936, %v2963
    %v2965 = vcombine.low %v2943, %v2950
    %v2966 = vcombine.low %v2957, %v2964
    %v2968 = vunpack.c.l.s4 1966171168
    %v2969 = vunpack.c.0.s8 %v2968
    %v2970 = vlaneseq
    %v2971 = vshrl.u32 %v2970, 7
    %v2972 = vsub.s32 %v2969, %v2971
    %v2973 = vrot.slane %v2965, %v2972
    %v2975 = vunpack.c.l.s4 1966171168
    %v2976 = vunpack.c.0.s8 %v2975
    %v2977 = vlaneseq
    %v2978 = vshrl.u32 %v2977, 7
    %v2979 = vsub.s32 %v2976, %v2978
    %v2980 = vrot.slane %v2966, %v2979
    %v2981 = vcombine.low %v2973, %v2980
    %v2982 = vcombine.low %v1723, %v1727
    %v2983 = vcombine.low %v1731, %v1735
    %v2984 = vcombine.low %v1739, %v1743
    %v2985 = vcombine.low %v1747, %v1751
    %v2987 = vunpack.c.l.s4 1966171168
    %v2988 = vunpack.c.0.s8 %v2987
    %v2989 = vlaneseq
    %v2990 = vshrl.u32 %v2989, 7
    %v2991 = vsub.s32 %v2988, %v2990
    %v2992 = vrot.slane %v2982, %v2991
    %v2994 = vunpack.c.l.s4 1966171168
    %v2995 = vunpack.c.0.s8 %v2994
    %v2996 = vlaneseq
    %v2997 = vshrl.u32 %v2996, 7
    %v2998 = vsub.s32 %v2995, %v2997
    %v2999 = vrot.slane %v2983, %v2998
    %v3001 = vunpack.c.l.s4 1966171168
    %v3002 = vunpack.c.0.s8 %v3001
    %v3003 = vlaneseq
    %v3004 = vshrl.u32 %v3003, 7
    %v3005 = vsub.s32 %v3002, %v3004
    %v3006 = vrot.slane %v2984, %v3005
    %v3008 = vunpack.c.l.s4 1966171168
    %v3009 = vunpack.c.0.s8 %v3008
    %v3010 = vlaneseq
    %v3011 = vshrl.u32 %v3010, 7
    %v3012 = vsub.s32 %v3009, %v3011
    %v3013 = vrot.slane %v2985, %v3012
    %v3014 = vcombine.low %v2992, %v2999
    %v3015 = vcombine.low %v3006, %v3013
    %v3017 = vunpack.c.l.s4 1966171168
    %v3018 = vunpack.c.0.s8 %v3017
    %v3019 = vlaneseq
    %v3020 = vshrl.u32 %v3019, 7
    %v3021 = vsub.s32 %v3018, %v3020
    %v3022 = vrot.slane %v3014, %v3021
    %v3024 = vunpack.c.l.s4 1966171168
    %v3025 = vunpack.c.0.s8 %v3024
    %v3026 = vlaneseq
    %v3027 = vshrl.u32 %v3026, 7
    %v3028 = vsub.s32 %v3025, %v3027
    %v3029 = vrot.slane %v3015, %v3028
    %v3030 = vcombine.low %v3022, %v3029
    %v3031 = vcombine.low %v1755, %v1759
    %v3032 = vcombine.low %v1763, %v1767
    %v3033 = vcombine.low %v1771, %v1775
    %v3034 = vcombine.low %v1779, %v1783
    %v3036 = vunpack.c.l.s4 1966171168
    %v3037 = vunpack.c.0.s8 %v3036
    %v3038 = vlaneseq
    %v3039 = vshrl.u32 %v3038, 7
    %v3040 = vsub.s32 %v3037, %v3039
    %v3041 = vrot.slane %v3031, %v3040
    %v3043 = vunpack.c.l.s4 1966171168
    %v3044 = vunpack.c.0.s8 %v3043
    %v3045 = vlaneseq
    %v3046 = vshrl.u32 %v3045, 7
    %v3047 = vsub.s32 %v3044, %v3046
    %v3048 = vrot.slane %v3032, %v3047
    %v3050 = vunpack.c.l.s4 1966171168
    %v3051 = vunpack.c.0.s8 %v3050
    %v3052 = vlaneseq
    %v3053 = vshrl.u32 %v3052, 7
    %v3054 = vsub.s32 %v3051, %v3053
    %v3055 = vrot.slane %v3033, %v3054
    %v3057 = vunpack.c.l.s4 1966171168
    %v3058 = vunpack.c.0.s8 %v3057
    %v3059 = vlaneseq
    %v3060 = vshrl.u32 %v3059, 7
    %v3061 = vsub.s32 %v3058, %v3060
    %v3062 = vrot.slane %v3034, %v3061
    %v3063 = vcombine.low %v3041, %v3048
    %v3064 = vcombine.low %v3055, %v3062
    %v3066 = vunpack.c.l.s4 1966171168
    %v3067 = vunpack.c.0.s8 %v3066
    %v3068 = vlaneseq
    %v3069 = vshrl.u32 %v3068, 7
    %v3070 = vsub.s32 %v3067, %v3069
    %v3071 = vrot.slane %v3063, %v3070
    %v3073 = vunpack.c.l.s4 1966171168
    %v3074 = vunpack.c.0.s8 %v3073
    %v3075 = vlaneseq
    %v3076 = vshrl.u32 %v3075, 7
    %v3077 = vsub.s32 %v3074, %v3076
    %v3078 = vrot.slane %v3064, %v3077
    %v3079 = vcombine.low %v3071, %v3078
    %v3080 = vcombine.low %v1787, %v1791
    %v3081 = vcombine.low %v1795, %v1799
    %v3082 = vcombine.low %v1803, %v1807
    %v3083 = vcombine.low %v1811, %v1815
    %v3085 = vunpack.c.l.s4 1966171168
    %v3086 = vunpack.c.0.s8 %v3085
    %v3087 = vlaneseq
    %v3088 = vshrl.u32 %v3087, 7
    %v3089 = vsub.s32 %v3086, %v3088
    %v3090 = vrot.slane %v3080, %v3089
    %v3092 = vunpack.c.l.s4 1966171168
    %v3093 = vunpack.c.0.s8 %v3092
    %v3094 = vlaneseq
    %v3095 = vshrl.u32 %v3094, 7
    %v3096 = vsub.s32 %v3093, %v3095
    %v3097 = vrot.slane %v3081, %v3096
    %v3099 = vunpack.c.l.s4 1966171168
    %v3100 = vunpack.c.0.s8 %v3099
    %v3101 = vlaneseq
    %v3102 = vshrl.u32 %v3101, 7
    %v3103 = vsub.s32 %v3100, %v3102
    %v3104 = vrot.slane %v3082, %v3103
    %v3106 = vunpack.c.l.s4 1966171168
    %v3107 = vunpack.c.0.s8 %v3106
    %v3108 = vlaneseq
    %v3109 = vshrl.u32 %v3108, 7
    %v3110 = vsub.s32 %v3107, %v3109
    %v3111 = vrot.slane %v3083, %v3110
    %v3112 = vcombine.low %v3090, %v3097
    %v3113 = vcombine.low %v3104, %v3111
    %v3115 = vunpack.c.l.s4 1966171168
    %v3116 = vunpack.c.0.s8 %v3115
    %v3117 = vlaneseq
    %v3118 = vshrl.u32 %v3117, 7
    %v3119 = vsub.s32 %v3116, %v3118
    %v3120 = vrot.slane %v3112, %v3119
    %v3122 = vunpack.c.l.s4 1966171168
    %v3123 = vunpack.c.0.s8 %v3122
    %v3124 = vlaneseq
    %v3125 = vshrl.u32 %v3124, 7
    %v3126 = vsub.s32 %v3123, %v3125
    %v3127 = vrot.slane %v3113, %v3126
    %v3128 = vcombine.low %v3120, %v3127
    %v3129 = vcombine.low %v1819, %v1823
    %v3130 = vcombine.low %v1827, %v1831
    %v3131 = vcombine.low %v1835, %v1839
    %v3132 = vcombine.low %v1843, %v1847
    %v3134 = vunpack.c.l.s4 1966171168
    %v3135 = vunpack.c.0.s8 %v3134
    %v3136 = vlaneseq
    %v3137 = vshrl.u32 %v3136, 7
    %v3138 = vsub.s32 %v3135, %v3137
    %v3139 = vrot.slane %v3129, %v3138
    %v3141 = vunpack.c.l.s4 1966171168
    %v3142 = vunpack.c.0.s8 %v3141
    %v3143 = vlaneseq
    %v3144 = vshrl.u32 %v3143, 7
    %v3145 = vsub.s32 %v3142, %v3144
    %v3146 = vrot.slane %v3130, %v3145
    %v3148 = vunpack.c.l.s4 1966171168
    %v3149 = vunpack.c.0.s8 %v3148
    %v3150 = vlaneseq
    %v3151 = vshrl.u32 %v3150, 7
    %v3152 = vsub.s32 %v3149, %v3151
    %v3153 = vrot.slane %v3131, %v3152
    %v3155 = vunpack.c.l.s4 1966171168
    %v3156 = vunpack.c.0.s8 %v3155
    %v3157 = vlaneseq
    %v3158 = vshrl.u32 %v3157, 7
    %v3159 = vsub.s32 %v3156, %v3158
    %v3160 = vrot.slane %v3132, %v3159
    %v3161 = vcombine.low %v3139, %v3146
    %v3162 = vcombine.low %v3153, %v3160
    %v3164 = vunpack.c.l.s4 1966171168
    %v3165 = vunpack.c.0.s8 %v3164
    %v3166 = vlaneseq
    %v3167 = vshrl.u32 %v3166, 7
    %v3168 = vsub.s32 %v3165, %v3167
    %v3169 = vrot.slane %v3161, %v3168
    %v3171 = vunpack.c.l.s4 1966171168
    %v3172 = vunpack.c.0.s8 %v3171
    %v3173 = vlaneseq
    %v3174 = vshrl.u32 %v3173, 7
    %v3175 = vsub.s32 %v3172, %v3174
    %v3176 = vrot.slane %v3162, %v3175
    %v3177 = vcombine.low %v3169, %v3176
    %v3178 = vcombine.low %v1851, %v1855
    %v3179 = vcombine.low %v1859, %v1863
    %v3180 = vcombine.low %v1867, %v1871
    %v3181 = vcombine.low %v1875, %v1879
    %v3183 = vunpack.c.l.s4 1966171168
    %v3184 = vunpack.c.0.s8 %v3183
    %v3185 = vlaneseq
    %v3186 = vshrl.u32 %v3185, 7
    %v3187 = vsub.s32 %v3184, %v3186
    %v3188 = vrot.slane %v3178, %v3187
    %v3190 = vunpack.c.l.s4 1966171168
    %v3191 = vunpack.c.0.s8 %v3190
    %v3192 = vlaneseq
    %v3193 = vshrl.u32 %v3192, 7
    %v3194 = vsub.s32 %v3191, %v3193
    %v3195 = vrot.slane %v3179, %v3194
    %v3197 = vunpack.c.l.s4 1966171168
    %v3198 = vunpack.c.0.s8 %v3197
    %v3199 = vlaneseq
    %v3200 = vshrl.u32 %v3199, 7
    %v3201 = vsub.s32 %v3198, %v3200
    %v3202 = vrot.slane %v3180, %v3201
    %v3204 = vunpack.c.l.s4 1966171168
    %v3205 = vunpack.c.0.s8 %v3204
    %v3206 = vlaneseq
    %v3207 = vshrl.u32 %v3206, 7
    %v3208 = vsub.s32 %v3205, %v3207
    %v3209 = vrot.slane %v3181, %v3208
    %v3210 = vcombine.low %v3188, %v3195
    %v3211 = vcombine.low %v3202, %v3209
    %v3213 = vunpack.c.l.s4 1966171168
    %v3214 = vunpack.c.0.s8 %v3213
    %v3215 = vlaneseq
    %v3216 = vshrl.u32 %v3215, 7
    %v3217 = vsub.s32 %v3214, %v3216
    %v3218 = vrot.slane %v3210, %v3217
    %v3220 = vunpack.c.l.s4 1966171168
    %v3221 = vunpack.c.0.s8 %v3220
    %v3222 = vlaneseq
    %v3223 = vshrl.u32 %v3222, 7
    %v3224 = vsub.s32 %v3221, %v3223
    %v3225 = vrot.slane %v3211, %v3224
    %v3226 = vcombine.low %v3218, %v3225
    %v3227 = vcombine.low %v1883, %v1887
    %v3228 = vcombine.low %v1891, %v1895
    %v3229 = vcombine.low %v1899, %v1903
    %v3230 = vcombine.low %v1907, %v1911
    %v3232 = vunpack.c.l.s4 1966171168
    %v3233 = vunpack.c.0.s8 %v3232
    %v3234 = vlaneseq
    %v3235 = vshrl.u32 %v3234, 7
    %v3236 = vsub.s32 %v3233, %v3235
    %v3237 = vrot.slane %v3227, %v3236
    %v3239 = vunpack.c.l.s4 1966171168
    %v3240 = vunpack.c.0.s8 %v3239
    %v3241 = vlaneseq
    %v3242 = vshrl.u32 %v3241, 7
    %v3243 = vsub.s32 %v3240, %v3242
    %v3244 = vrot.slane %v3228, %v3243
    %v3246 = vunpack.c.l.s4 1966171168
    %v3247 = vunpack.c.0.s8 %v3246
    %v3248 = vlaneseq
    %v3249 = vshrl.u32 %v3248, 7
    %v3250 = vsub.s32 %v3247, %v3249
    %v3251 = vrot.slane %v3229, %v3250
    %v3253 = vunpack.c.l.s4 1966171168
    %v3254 = vunpack.c.0.s8 %v3253
    %v3255 = vlaneseq
    %v3256 = vshrl.u32 %v3255, 7
    %v3257 = vsub.s32 %v3254, %v3256
    %v3258 = vrot.slane %v3230, %v3257
    %v3259 = vcombine.low %v3237, %v3244
    %v3260 = vcombine.low %v3251, %v3258
    %v3262 = vunpack.c.l.s4 1966171168
    %v3263 = vunpack.c.0.s8 %v3262
    %v3264 = vlaneseq
    %v3265 = vshrl.u32 %v3264, 7
    %v3266 = vsub.s32 %v3263, %v3265
    %v3267 = vrot.slane %v3259, %v3266
    %v3269 = vunpack.c.l.s4 1966171168
    %v3270 = vunpack.c.0.s8 %v3269
    %v3271 = vlaneseq
    %v3272 = vshrl.u32 %v3271, 7
    %v3273 = vsub.s32 %v3270, %v3272
    %v3274 = vrot.slane %v3260, %v3273
    %v3275 = vcombine.low %v3267, %v3274
    %v3276 = vcombine.low %v1915, %v1919
    %v3277 = vcombine.low %v1923, %v1927
    %v3278 = vcombine.low %v1931, %v1935
    %v3279 = vcombine.low %v1939, %v1943
    %v3281 = vunpack.c.l.s4 1966171168
    %v3282 = vunpack.c.0.s8 %v3281
    %v3283 = vlaneseq
    %v3284 = vshrl.u32 %v3283, 7
    %v3285 = vsub.s32 %v3282, %v3284
    %v3286 = vrot.slane %v3276, %v3285
    %v3288 = vunpack.c.l.s4 1966171168
    %v3289 = vunpack.c.0.s8 %v3288
    %v3290 = vlaneseq
    %v3291 = vshrl.u32 %v3290, 7
    %v3292 = vsub.s32 %v3289, %v3291
    %v3293 = vrot.slane %v3277, %v3292
    %v3295 = vunpack.c.l.s4 1966171168
    %v3296 = vunpack.c.0.s8 %v3295
    %v3297 = vlaneseq
    %v3298 = vshrl.u32 %v3297, 7
    %v3299 = vsub.s32 %v3296, %v3298
    %v3300 = vrot.slane %v3278, %v3299
    %v3302 = vunpack.c.l.s4 1966171168
    %v3303 = vunpack.c.0.s8 %v3302
    %v3304 = vlaneseq
    %v3305 = vshrl.u32 %v3304, 7
    %v3306 = vsub.s32 %v3303, %v3305
    %v3307 = vrot.slane %v3279, %v3306
    %v3308 = vcombine.low %v3286, %v3293
    %v3309 = vcombine.low %v3300, %v3307
    %v3311 = vunpack.c.l.s4 1966171168
    %v3312 = vunpack.c.0.s8 %v3311
    %v3313 = vlaneseq
    %v3314 = vshrl.u32 %v3313, 7
    %v3315 = vsub.s32 %v3312, %v3314
    %v3316 = vrot.slane %v3308, %v3315
    %v3318 = vunpack.c.l.s4 1966171168
    %v3319 = vunpack.c.0.s8 %v3318
    %v3320 = vlaneseq
    %v3321 = vshrl.u32 %v3320, 7
    %v3322 = vsub.s32 %v3319, %v3321
    %v3323 = vrot.slane %v3309, %v3322
    %v3324 = vcombine.low %v3316, %v3323
    %v3325 = vcombine.low %v1947, %v1951
    %v3326 = vcombine.low %v1955, %v1959
    %v3327 = vcombine.low %v1963, %v1967
    %v3328 = vcombine.low %v1971, %v1975
    %v3330 = vunpack.c.l.s4 1966171168
    %v3331 = vunpack.c.0.s8 %v3330
    %v3332 = vlaneseq
    %v3333 = vshrl.u32 %v3332, 7
    %v3334 = vsub.s32 %v3331, %v3333
    %v3335 = vrot.slane %v3325, %v3334
    %v3337 = vunpack.c.l.s4 1966171168
    %v3338 = vunpack.c.0.s8 %v3337
    %v3339 = vlaneseq
    %v3340 = vshrl.u32 %v3339, 7
    %v3341 = vsub.s32 %v3338, %v3340
    %v3342 = vrot.slane %v3326, %v3341
    %v3344 = vunpack.c.l.s4 1966171168
    %v3345 = vunpack.c.0.s8 %v3344
    %v3346 = vlaneseq
    %v3347 = vshrl.u32 %v3346, 7
    %v3348 = vsub.s32 %v3345, %v3347
    %v3349 = vrot.slane %v3327, %v3348
    %v3351 = vunpack.c.l.s4 1966171168
    %v3352 = vunpack.c.0.s8 %v3351
    %v3353 = vlaneseq
    %v3354 = vshrl.u32 %v3353, 7
    %v3355 = vsub.s32 %v3352, %v3354
    %v3356 = vrot.slane %v3328, %v3355
    %v3357 = vcombine.low %v3335, %v3342
    %v3358 = vcombine.low %v3349, %v3356
    %v3360 = vunpack.c.l.s4 1966171168
    %v3361 = vunpack.c.0.s8 %v3360
    %v3362 = vlaneseq
    %v3363 = vshrl.u32 %v3362, 7
    %v3364 = vsub.s32 %v3361, %v3363
    %v3365 = vrot.slane %v3357, %v3364
    %v3367 = vunpack.c.l.s4 1966171168
    %v3368 = vunpack.c.0.s8 %v3367
    %v3369 = vlaneseq
    %v3370 = vshrl.u32 %v3369, 7
    %v3371 = vsub.s32 %v3368, %v3370
    %v3372 = vrot.slane %v3358, %v3371
    %v3373 = vcombine.low %v3365, %v3372
    %v3374 = vcombine.low %v1979, %v1983
    %v3375 = vcombine.low %v1987, %v1991
    %v3376 = vcombine.low %v1995, %v1999
    %v3377 = vcombine.low %v2003, %v2007
    %v3379 = vunpack.c.l.s4 1966171168
    %v3380 = vunpack.c.0.s8 %v3379
    %v3381 = vlaneseq
    %v3382 = vshrl.u32 %v3381, 7
    %v3383 = vsub.s32 %v3380, %v3382
    %v3384 = vrot.slane %v3374, %v3383
    %v3386 = vunpack.c.l.s4 1966171168
    %v3387 = vunpack.c.0.s8 %v3386
    %v3388 = vlaneseq
    %v3389 = vshrl.u32 %v3388, 7
    %v3390 = vsub.s32 %v3387, %v3389
    %v3391 = vrot.slane %v3375, %v3390
    %v3393 = vunpack.c.l.s4 1966171168
    %v3394 = vunpack.c.0.s8 %v3393
    %v3395 = vlaneseq
    %v3396 = vshrl.u32 %v3395, 7
    %v3397 = vsub.s32 %v3394, %v3396
    %v3398 = vrot.slane %v3376, %v3397
    %v3400 = vunpack.c.l.s4 1966171168
    %v3401 = vunpack.c.0.s8 %v3400
    %v3402 = vlaneseq
    %v3403 = vshrl.u32 %v3402, 7
    %v3404 = vsub.s32 %v3401, %v3403
    %v3405 = vrot.slane %v3377, %v3404
    %v3406 = vcombine.low %v3384, %v3391
    %v3407 = vcombine.low %v3398, %v3405
    %v3409 = vunpack.c.l.s4 1966171168
    %v3410 = vunpack.c.0.s8 %v3409
    %v3411 = vlaneseq
    %v3412 = vshrl.u32 %v3411, 7
    %v3413 = vsub.s32 %v3410, %v3412
    %v3414 = vrot.slane %v3406, %v3413
    %v3416 = vunpack.c.l.s4 1966171168
    %v3417 = vunpack.c.0.s8 %v3416
    %v3418 = vlaneseq
    %v3419 = vshrl.u32 %v3418, 7
    %v3420 = vsub.s32 %v3417, %v3419
    %v3421 = vrot.slane %v3407, %v3420
    %v3422 = vcombine.low %v3414, %v3421
    %v3423 = vcombine.low %v2011, %v2015
    %v3424 = vcombine.low %v2019, %v2023
    %v3425 = vcombine.low %v2027, %v2031
    %v3426 = vcombine.low %v2035, %v2039
    %v3428 = vunpack.c.l.s4 1966171168
    %v3429 = vunpack.c.0.s8 %v3428
    %v3430 = vlaneseq
    %v3431 = vshrl.u32 %v3430, 7
    %v3432 = vsub.s32 %v3429, %v3431
    %v3433 = vrot.slane %v3423, %v3432
    %v3435 = vunpack.c.l.s4 1966171168
    %v3436 = vunpack.c.0.s8 %v3435
    %v3437 = vlaneseq
    %v3438 = vshrl.u32 %v3437, 7
    %v3439 = vsub.s32 %v3436, %v3438
    %v3440 = vrot.slane %v3424, %v3439
    %v3442 = vunpack.c.l.s4 1966171168
    %v3443 = vunpack.c.0.s8 %v3442
    %v3444 = vlaneseq
    %v3445 = vshrl.u32 %v3444, 7
    %v3446 = vsub.s32 %v3443, %v3445
    %v3447 = vrot.slane %v3425, %v3446
    %v3449 = vunpack.c.l.s4 1966171168
    %v3450 = vunpack.c.0.s8 %v3449
    %v3451 = vlaneseq
    %v3452 = vshrl.u32 %v3451, 7
    %v3453 = vsub.s32 %v3450, %v3452
    %v3454 = vrot.slane %v3426, %v3453
    %v3455 = vcombine.low %v3433, %v3440
    %v3456 = vcombine.low %v3447, %v3454
    %v3458 = vunpack.c.l.s4 1966171168
    %v3459 = vunpack.c.0.s8 %v3458
    %v3460 = vlaneseq
    %v3461 = vshrl.u32 %v3460, 7
    %v3462 = vsub.s32 %v3459, %v3461
    %v3463 = vrot.slane %v3455, %v3462
    %v3465 = vunpack.c.l.s4 1966171168
    %v3466 = vunpack.c.0.s8 %v3465
    %v3467 = vlaneseq
    %v3468 = vshrl.u32 %v3467, 7
    %v3469 = vsub.s32 %v3466, %v3468
    %v3470 = vrot.slane %v3456, %v3469
    %v3471 = vcombine.low %v3463, %v3470
    %v3472 = vcombine.low %v2043, %v2047
    %v3473 = vcombine.low %v2051, %v2055
    %v3474 = vcombine.low %v2059, %v2063
    %v3475 = vcombine.low %v2067, %v2071
    %v3477 = vunpack.c.l.s4 1966171168
    %v3478 = vunpack.c.0.s8 %v3477
    %v3479 = vlaneseq
    %v3480 = vshrl.u32 %v3479, 7
    %v3481 = vsub.s32 %v3478, %v3480
    %v3482 = vrot.slane %v3472, %v3481
    %v3484 = vunpack.c.l.s4 1966171168
    %v3485 = vunpack.c.0.s8 %v3484
    %v3486 = vlaneseq
    %v3487 = vshrl.u32 %v3486, 7
    %v3488 = vsub.s32 %v3485, %v3487
    %v3489 = vrot.slane %v3473, %v3488
    %v3491 = vunpack.c.l.s4 1966171168
    %v3492 = vunpack.c.0.s8 %v3491
    %v3493 = vlaneseq
    %v3494 = vshrl.u32 %v3493, 7
    %v3495 = vsub.s32 %v3492, %v3494
    %v3496 = vrot.slane %v3474, %v3495
    %v3498 = vunpack.c.l.s4 1966171168
    %v3499 = vunpack.c.0.s8 %v3498
    %v3500 = vlaneseq
    %v3501 = vshrl.u32 %v3500, 7
    %v3502 = vsub.s32 %v3499, %v3501
    %v3503 = vrot.slane %v3475, %v3502
    %v3504 = vcombine.low %v3482, %v3489
    %v3505 = vcombine.low %v3496, %v3503
    %v3507 = vunpack.c.l.s4 1966171168
    %v3508 = vunpack.c.0.s8 %v3507
    %v3509 = vlaneseq
    %v3510 = vshrl.u32 %v3509, 7
    %v3511 = vsub.s32 %v3508, %v3510
    %v3512 = vrot.slane %v3504, %v3511
    %v3514 = vunpack.c.l.s4 1966171168
    %v3515 = vunpack.c.0.s8 %v3514
    %v3516 = vlaneseq
    %v3517 = vshrl.u32 %v3516, 7
    %v3518 = vsub.s32 %v3515, %v3517
    %v3519 = vrot.slane %v3505, %v3518
    %v3520 = vcombine.low %v3512, %v3519
    %v3521 = vcombine.low %v2075, %v2079
    %v3522 = vcombine.low %v2083, %v2087
    %v3523 = vcombine.low %v2091, %v2095
    %v3524 = vcombine.low %v2099, %v2103
    %v3526 = vunpack.c.l.s4 1966171168
    %v3527 = vunpack.c.0.s8 %v3526
    %v3528 = vlaneseq
    %v3529 = vshrl.u32 %v3528, 7
    %v3530 = vsub.s32 %v3527, %v3529
    %v3531 = vrot.slane %v3521, %v3530
    %v3533 = vunpack.c.l.s4 1966171168
    %v3534 = vunpack.c.0.s8 %v3533
    %v3535 = vlaneseq
    %v3536 = vshrl.u32 %v3535, 7
    %v3537 = vsub.s32 %v3534, %v3536
    %v3538 = vrot.slane %v3522, %v3537
    %v3540 = vunpack.c.l.s4 1966171168
    %v3541 = vunpack.c.0.s8 %v3540
    %v3542 = vlaneseq
    %v3543 = vshrl.u32 %v3542, 7
    %v3544 = vsub.s32 %v3541, %v3543
    %v3545 = vrot.slane %v3523, %v3544
    %v3547 = vunpack.c.l.s4 1966171168
    %v3548 = vunpack.c.0.s8 %v3547
    %v3549 = vlaneseq
    %v3550 = vshrl.u32 %v3549, 7
    %v3551 = vsub.s32 %v3548, %v3550
    %v3552 = vrot.slane %v3524, %v3551
    %v3553 = vcombine.low %v3531, %v3538
    %v3554 = vcombine.low %v3545, %v3552
    %v3556 = vunpack.c.l.s4 1966171168
    %v3557 = vunpack.c.0.s8 %v3556
    %v3558 = vlaneseq
    %v3559 = vshrl.u32 %v3558, 7
    %v3560 = vsub.s32 %v3557, %v3559
    %v3561 = vrot.slane %v3553, %v3560
    %v3563 = vunpack.c.l.s4 1966171168
    %v3564 = vunpack.c.0.s8 %v3563
    %v3565 = vlaneseq
    %v3566 = vshrl.u32 %v3565, 7
    %v3567 = vsub.s32 %v3564, %v3566
    %v3568 = vrot.slane %v3554, %v3567
    %v3569 = vcombine.low %v3561, %v3568
    %v3570 = vcombine.low %v2107, %v2111
    %v3571 = vcombine.low %v2115, %v2119
    %v3572 = vcombine.low %v2123, %v2127
    %v3573 = vcombine.low %v2131, %v2135
    %v3575 = vunpack.c.l.s4 1966171168
    %v3576 = vunpack.c.0.s8 %v3575
    %v3577 = vlaneseq
    %v3578 = vshrl.u32 %v3577, 7
    %v3579 = vsub.s32 %v3576, %v3578
    %v3580 = vrot.slane %v3570, %v3579
    %v3582 = vunpack.c.l.s4 1966171168
    %v3583 = vunpack.c.0.s8 %v3582
    %v3584 = vlaneseq
    %v3585 = vshrl.u32 %v3584, 7
    %v3586 = vsub.s32 %v3583, %v3585
    %v3587 = vrot.slane %v3571, %v3586
    %v3589 = vunpack.c.l.s4 1966171168
    %v3590 = vunpack.c.0.s8 %v3589
    %v3591 = vlaneseq
    %v3592 = vshrl.u32 %v3591, 7
    %v3593 = vsub.s32 %v3590, %v3592
    %v3594 = vrot.slane %v3572, %v3593
    %v3596 = vunpack.c.l.s4 1966171168
    %v3597 = vunpack.c.0.s8 %v3596
    %v3598 = vlaneseq
    %v3599 = vshrl.u32 %v3598, 7
    %v3600 = vsub.s32 %v3597, %v3599
    %v3601 = vrot.slane %v3573, %v3600
    %v3602 = vcombine.low %v3580, %v3587
    %v3603 = vcombine.low %v3594, %v3601
    %v3605 = vunpack.c.l.s4 1966171168
    %v3606 = vunpack.c.0.s8 %v3605
    %v3607 = vlaneseq
    %v3608 = vshrl.u32 %v3607, 7
    %v3609 = vsub.s32 %v3606, %v3608
    %v3610 = vrot.slane %v3602, %v3609
    %v3612 = vunpack.c.l.s4 1966171168
    %v3613 = vunpack.c.0.s8 %v3612
    %v3614 = vlaneseq
    %v3615 = vshrl.u32 %v3614, 7
    %v3616 = vsub.s32 %v3613, %v3615
    %v3617 = vrot.slane %v3603, %v3616
    %v3618 = vcombine.low %v3610, %v3617
    %v3619 = vcombine.low %v2139, %v2143
    %v3620 = vcombine.low %v2147, %v2151
    %v3621 = vcombine.low %v2155, %v2159
    %v3622 = vcombine.low %v2163, %v2167
    %v3624 = vunpack.c.l.s4 1966171168
    %v3625 = vunpack.c.0.s8 %v3624
    %v3626 = vlaneseq
    %v3627 = vshrl.u32 %v3626, 7
    %v3628 = vsub.s32 %v3625, %v3627
    %v3629 = vrot.slane %v3619, %v3628
    %v3631 = vunpack.c.l.s4 1966171168
    %v3632 = vunpack.c.0.s8 %v3631
    %v3633 = vlaneseq
    %v3634 = vshrl.u32 %v3633, 7
    %v3635 = vsub.s32 %v3632, %v3634
    %v3636 = vrot.slane %v3620, %v3635
    %v3638 = vunpack.c.l.s4 1966171168
    %v3639 = vunpack.c.0.s8 %v3638
    %v3640 = vlaneseq
    %v3641 = vshrl.u32 %v3640, 7
    %v3642 = vsub.s32 %v3639, %v3641
    %v3643 = vrot.slane %v3621, %v3642
    %v3645 = vunpack.c.l.s4 1966171168
    %v3646 = vunpack.c.0.s8 %v3645
    %v3647 = vlaneseq
    %v3648 = vshrl.u32 %v3647, 7
    %v3649 = vsub.s32 %v3646, %v3648
    %v3650 = vrot.slane %v3622, %v3649
    %v3651 = vcombine.low %v3629, %v3636
    %v3652 = vcombine.low %v3643, %v3650
    %v3654 = vunpack.c.l.s4 1966171168
    %v3655 = vunpack.c.0.s8 %v3654
    %v3656 = vlaneseq
    %v3657 = vshrl.u32 %v3656, 7
    %v3658 = vsub.s32 %v3655, %v3657
    %v3659 = vrot.slane %v3651, %v3658
    %v3661 = vunpack.c.l.s4 1966171168
    %v3662 = vunpack.c.0.s8 %v3661
    %v3663 = vlaneseq
    %v3664 = vshrl.u32 %v3663, 7
    %v3665 = vsub.s32 %v3662, %v3664
    %v3666 = vrot.slane %v3652, %v3665
    %v3667 = vcombine.low %v3659, %v3666
    %v3668 = vcombine.low %v2171, %v2175
    %v3669 = vcombine.low %v2179, %v2183
    %v3670 = vcombine.low %v2187, %v2191
    %v3671 = vcombine.low %v2195, %v2199
    %v3673 = vunpack.c.l.s4 1966171168
    %v3674 = vunpack.c.0.s8 %v3673
    %v3675 = vlaneseq
    %v3676 = vshrl.u32 %v3675, 7
    %v3677 = vsub.s32 %v3674, %v3676
    %v3678 = vrot.slane %v3668, %v3677
    %v3680 = vunpack.c.l.s4 1966171168
    %v3681 = vunpack.c.0.s8 %v3680
    %v3682 = vlaneseq
    %v3683 = vshrl.u32 %v3682, 7
    %v3684 = vsub.s32 %v3681, %v3683
    %v3685 = vrot.slane %v3669, %v3684
    %v3687 = vunpack.c.l.s4 1966171168
    %v3688 = vunpack.c.0.s8 %v3687
    %v3689 = vlaneseq
    %v3690 = vshrl.u32 %v3689, 7
    %v3691 = vsub.s32 %v3688, %v3690
    %v3692 = vrot.slane %v3670, %v3691
    %v3694 = vunpack.c.l.s4 1966171168
    %v3695 = vunpack.c.0.s8 %v3694
    %v3696 = vlaneseq
    %v3697 = vshrl.u32 %v3696, 7
    %v3698 = vsub.s32 %v3695, %v3697
    %v3699 = vrot.slane %v3671, %v3698
    %v3700 = vcombine.low %v3678, %v3685
    %v3701 = vcombine.low %v3692, %v3699
    %v3703 = vunpack.c.l.s4 1966171168
    %v3704 = vunpack.c.0.s8 %v3703
    %v3705 = vlaneseq
    %v3706 = vshrl.u32 %v3705, 7
    %v3707 = vsub.s32 %v3704, %v3706
    %v3708 = vrot.slane %v3700, %v3707
    %v3710 = vunpack.c.l.s4 1966171168
    %v3711 = vunpack.c.0.s8 %v3710
    %v3712 = vlaneseq
    %v3713 = vshrl.u32 %v3712, 7
    %v3714 = vsub.s32 %v3711, %v3713
    %v3715 = vrot.slane %v3701, %v3714
    %v3716 = vcombine.low %v3708, %v3715
    %v3717 = vcombine.low %v2203, %v2207
    %v3718 = vcombine.low %v2211, %v2215
    %v3719 = vcombine.low %v2219, %v2223
    %v3720 = vcombine.low %v2227, %v2231
    %v3722 = vunpack.c.l.s4 1966171168
    %v3723 = vunpack.c.0.s8 %v3722
    %v3724 = vlaneseq
    %v3725 = vshrl.u32 %v3724, 7
    %v3726 = vsub.s32 %v3723, %v3725
    %v3727 = vrot.slane %v3717, %v3726
    %v3729 = vunpack.c.l.s4 1966171168
    %v3730 = vunpack.c.0.s8 %v3729
    %v3731 = vlaneseq
    %v3732 = vshrl.u32 %v3731, 7
    %v3733 = vsub.s32 %v3730, %v3732
    %v3734 = vrot.slane %v3718, %v3733
    %v3736 = vunpack.c.l.s4 1966171168
    %v3737 = vunpack.c.0.s8 %v3736
    %v3738 = vlaneseq
    %v3739 = vshrl.u32 %v3738, 7
    %v3740 = vsub.s32 %v3737, %v3739
    %v3741 = vrot.slane %v3719, %v3740
    %v3743 = vunpack.c.l.s4 1966171168
    %v3744 = vunpack.c.0.s8 %v3743
    %v3745 = vlaneseq
    %v3746 = vshrl.u32 %v3745, 7
    %v3747 = vsub.s32 %v3744, %v3746
    %v3748 = vrot.slane %v3720, %v3747
    %v3749 = vcombine.low %v3727, %v3734
    %v3750 = vcombine.low %v3741, %v3748
    %v3752 = vunpack.c.l.s4 1966171168
    %v3753 = vunpack.c.0.s8 %v3752
    %v3754 = vlaneseq
    %v3755 = vshrl.u32 %v3754, 7
    %v3756 = vsub.s32 %v3753, %v3755
    %v3757 = vrot.slane %v3749, %v3756
    %v3759 = vunpack.c.l.s4 1966171168
    %v3760 = vunpack.c.0.s8 %v3759
    %v3761 = vlaneseq
    %v3762 = vshrl.u32 %v3761, 7
    %v3763 = vsub.s32 %v3760, %v3762
    %v3764 = vrot.slane %v3750, %v3763
    %v3765 = vcombine.low %v3757, %v3764
    %v3766 = vcombine.low %v2235, %v2239
    %v3767 = vcombine.low %v2243, %v2247
    %v3768 = vcombine.low %v2251, %v2255
    %v3769 = vcombine.low %v2259, %v2263
    %v3771 = vunpack.c.l.s4 1966171168
    %v3772 = vunpack.c.0.s8 %v3771
    %v3773 = vlaneseq
    %v3774 = vshrl.u32 %v3773, 7
    %v3775 = vsub.s32 %v3772, %v3774
    %v3776 = vrot.slane %v3766, %v3775
    %v3778 = vunpack.c.l.s4 1966171168
    %v3779 = vunpack.c.0.s8 %v3778
    %v3780 = vlaneseq
    %v3781 = vshrl.u32 %v3780, 7
    %v3782 = vsub.s32 %v3779, %v3781
    %v3783 = vrot.slane %v3767, %v3782
    %v3785 = vunpack.c.l.s4 1966171168
    %v3786 = vunpack.c.0.s8 %v3785
    %v3787 = vlaneseq
    %v3788 = vshrl.u32 %v3787, 7
    %v3789 = vsub.s32 %v3786, %v3788
    %v3790 = vrot.slane %v3768, %v3789
    %v3792 = vunpack.c.l.s4 1966171168
    %v3793 = vunpack.c.0.s8 %v3792
    %v3794 = vlaneseq
    %v3795 = vshrl.u32 %v3794, 7
    %v3796 = vsub.s32 %v3793, %v3795
    %v3797 = vrot.slane %v3769, %v3796
    %v3798 = vcombine.low %v3776, %v3783
    %v3799 = vcombine.low %v3790, %v3797
    %v3801 = vunpack.c.l.s4 1966171168
    %v3802 = vunpack.c.0.s8 %v3801
    %v3803 = vlaneseq
    %v3804 = vshrl.u32 %v3803, 7
    %v3805 = vsub.s32 %v3802, %v3804
    %v3806 = vrot.slane %v3798, %v3805
    %v3808 = vunpack.c.l.s4 1966171168
    %v3809 = vunpack.c.0.s8 %v3808
    %v3810 = vlaneseq
    %v3811 = vshrl.u32 %v3810, 7
    %v3812 = vsub.s32 %v3809, %v3811
    %v3813 = vrot.slane %v3799, %v3812
    %v3814 = vcombine.low %v3806, %v3813
    %v3815 = vcombine.low %v2267, %v2271
    %v3816 = vcombine.low %v2275, %v2279
    %v3817 = vcombine.low %v2283, %v2287
    %v3818 = vcombine.low %v2291, %v2295
    %v3820 = vunpack.c.l.s4 1966171168
    %v3821 = vunpack.c.0.s8 %v3820
    %v3822 = vlaneseq
    %v3823 = vshrl.u32 %v3822, 7
    %v3824 = vsub.s32 %v3821, %v3823
    %v3825 = vrot.slane %v3815, %v3824
    %v3827 = vunpack.c.l.s4 1966171168
    %v3828 = vunpack.c.0.s8 %v3827
    %v3829 = vlaneseq
    %v3830 = vshrl.u32 %v3829, 7
    %v3831 = vsub.s32 %v3828, %v3830
    %v3832 = vrot.slane %v3816, %v3831
    %v3834 = vunpack.c.l.s4 1966171168
    %v3835 = vunpack.c.0.s8 %v3834
    %v3836 = vlaneseq
    %v3837 = vshrl.u32 %v3836, 7
    %v3838 = vsub.s32 %v3835, %v3837
    %v3839 = vrot.slane %v3817, %v3838
    %v3841 = vunpack.c.l.s4 1966171168
    %v3842 = vunpack.c.0.s8 %v3841
    %v3843 = vlaneseq
    %v3844 = vshrl.u32 %v3843, 7
    %v3845 = vsub.s32 %v3842, %v3844
    %v3846 = vrot.slane %v3818, %v3845
    %v3847 = vcombine.low %v3825, %v3832
    %v3848 = vcombine.low %v3839, %v3846
    %v3850 = vunpack.c.l.s4 1966171168
    %v3851 = vunpack.c.0.s8 %v3850
    %v3852 = vlaneseq
    %v3853 = vshrl.u32 %v3852, 7
    %v3854 = vsub.s32 %v3851, %v3853
    %v3855 = vrot.slane %v3847, %v3854
    %v3857 = vunpack.c.l.s4 1966171168
    %v3858 = vunpack.c.0.s8 %v3857
    %v3859 = vlaneseq
    %v3860 = vshrl.u32 %v3859, 7
    %v3861 = vsub.s32 %v3858, %v3860
    %v3862 = vrot.slane %v3848, %v3861
    %v3863 = vcombine.low %v3855, %v3862
    %3864 = vset.pattern.permute.xlu0 0
    %3865 = vperm.xlu0 %3864, %v2344
    %v3866 = vpop.permute.xlu0 %3865
    %3867 = vset.pattern.permute.xlu0 0
    %3868 = vperm.xlu0 %3867, %v2393
    %v3869 = vpop.permute.xlu0 %3868
    %3870 = vset.pattern.permute.xlu0 0
    %3871 = vperm.xlu0 %3870, %v2442
    %v3872 = vpop.permute.xlu0 %3871
    %3873 = vset.pattern.permute.xlu0 0
    %3874 = vperm.xlu0 %3873, %v2491
    %v3875 = vpop.permute.xlu0 %3874
    %3876 = vset.pattern.permute.xlu0 0
    %3877 = vperm.xlu0 %3876, %v2540
    %v3878 = vpop.permute.xlu0 %3877
    %3879 = vset.pattern.permute.xlu0 0
    %3880 = vperm.xlu0 %3879, %v2589
    %v3881 = vpop.permute.xlu0 %3880
    %3882 = vset.pattern.permute.xlu0 0
    %3883 = vperm.xlu0 %3882, %v2638
    %v3884 = vpop.permute.xlu0 %3883
    %3885 = vset.pattern.permute.xlu0 0
    %3886 = vperm.xlu0 %3885, %v2687
    %v3887 = vpop.permute.xlu0 %3886
    %3888 = vset.pattern.permute.xlu0 0
    %3889 = vperm.xlu0 %3888, %v2736
    %v3890 = vpop.permute.xlu0 %3889
    %3891 = vset.pattern.permute.xlu0 0
    %3892 = vperm.xlu0 %3891, %v2785
    %v3893 = vpop.permute.xlu0 %3892
    %3894 = vset.pattern.permute.xlu0 0
    %3895 = vperm.xlu0 %3894, %v2834
    %v3896 = vpop.permute.xlu0 %3895
    %3897 = vset.pattern.permute.xlu0 0
    %3898 = vperm.xlu0 %3897, %v2883
    %v3899 = vpop.permute.xlu0 %3898
    %3900 = vset.pattern.permute.xlu0 0
    %3901 = vperm.xlu0 %3900, %v2932
    %v3902 = vpop.permute.xlu0 %3901
    %3903 = vset.pattern.permute.xlu0 0
    %3904 = vperm.xlu0 %3903, %v2981
    %v3905 = vpop.permute.xlu0 %3904
    %3906 = vset.pattern.permute.xlu0 0
    %3907 = vperm.xlu0 %3906, %v3030
    %v3908 = vpop.permute.xlu0 %3907
    %3909 = vset.pattern.permute.xlu0 0
    %3910 = vperm.xlu0 %3909, %v3079
    %v3911 = vpop.permute.xlu0 %3910
    %3912 = vset.pattern.permute.xlu0 0
    %3913 = vperm.xlu0 %3912, %v3128
    %v3914 = vpop.permute.xlu0 %3913
    %3915 = vset.pattern.permute.xlu0 0
    %3916 = vperm.xlu0 %3915, %v3177
    %v3917 = vpop.permute.xlu0 %3916
    %3918 = vset.pattern.permute.xlu0 0
    %3919 = vperm.xlu0 %3918, %v3226
    %v3920 = vpop.permute.xlu0 %3919
    %3921 = vset.pattern.permute.xlu0 0
    %3922 = vperm.xlu0 %3921, %v3275
    %v3923 = vpop.permute.xlu0 %3922
    %3924 = vset.pattern.permute.xlu0 0
    %3925 = vperm.xlu0 %3924, %v3324
    %v3926 = vpop.permute.xlu0 %3925
    %3927 = vset.pattern.permute.xlu0 0
    %3928 = vperm.xlu0 %3927, %v3373
    %v3929 = vpop.permute.xlu0 %3928
    %3930 = vset.pattern.permute.xlu0 0
    %3931 = vperm.xlu0 %3930, %v3422
    %v3932 = vpop.permute.xlu0 %3931
    %3933 = vset.pattern.permute.xlu0 0
    %3934 = vperm.xlu0 %3933, %v3471
    %v3935 = vpop.permute.xlu0 %3934
    %3936 = vset.pattern.permute.xlu0 0
    %3937 = vperm.xlu0 %3936, %v3520
    %v3938 = vpop.permute.xlu0 %3937
    %3939 = vset.pattern.permute.xlu0 0
    %3940 = vperm.xlu0 %3939, %v3569
    %v3941 = vpop.permute.xlu0 %3940
    %3942 = vset.pattern.permute.xlu0 0
    %3943 = vperm.xlu0 %3942, %v3618
    %v3944 = vpop.permute.xlu0 %3943
    %3945 = vset.pattern.permute.xlu0 0
    %3946 = vperm.xlu0 %3945, %v3667
    %v3947 = vpop.permute.xlu0 %3946
    %3948 = vset.pattern.permute.xlu0 0
    %3949 = vperm.xlu0 %3948, %v3716
    %v3950 = vpop.permute.xlu0 %3949
    %3951 = vset.pattern.permute.xlu0 0
    %3952 = vperm.xlu0 %3951, %v3765
    %v3953 = vpop.permute.xlu0 %3952
    %3954 = vset.pattern.permute.xlu0 0
    %3955 = vperm.xlu0 %3954, %v3814
    %v3956 = vpop.permute.xlu0 %3955
    %3957 = vset.pattern.permute.xlu0 0
    %3958 = vperm.xlu0 %3957, %v3863
    %v3959 = vpop.permute.xlu0 %3958
    %v3960 = vlaneseq
    %v3961 = vand.u32 %v3960, 127
    %v3962 = vlaneseq
    %v3963 = vshrl.u32 %v3962, 7
    %v3964 = vsub.s32 %v3961, %v3963
    %v3965 = vrot.slane %v3866, %v3964
    %v3966 = vadd.s32 %v3961, 4294967288
    %v3967 = vlaneseq
    %v3968 = vshrl.u32 %v3967, 7
    %v3969 = vsub.s32 %v3966, %v3968
    %v3970 = vrot.slane %v3869, %v3969
    %vm3971 = vcmask 130112
    %v3972 = vsel %vm3971, %v3970, %v3965
    %v3973 = vadd.s32 %v3961, 4294967280
    %v3974 = vlaneseq
    %v3975 = vshrl.u32 %v3974, 7
    %v3976 = vsub.s32 %v3973, %v3975
    %v3977 = vrot.slane %v3872, %v3976
    %vm3978 = vcmask 195712
    %v3979 = vsel %vm3978, %v3977, %v3972
    %v3980 = vadd.s32 %v3961, 4294967272
    %v3981 = vlaneseq
    %v3982 = vshrl.u32 %v3981, 7
    %v3983 = vsub.s32 %v3980, %v3982
    %v3984 = vrot.slane %v3875, %v3983
    %vm3985 = vcmask 261312
    %v3986 = vsel %vm3985, %v3984, %v3979
    %v3987 = vlaneseq
    %v3988 = vshrl.u32 %v3987, 7
    %v3989 = vsub.s32 %v3961, %v3988
    %v3990 = vrot.slane %v3878, %v3989
    %v3991 = vlaneseq
    %v3992 = vshrl.u32 %v3991, 7
    %v3993 = vsub.s32 %v3966, %v3992
    %v3994 = vrot.slane %v3881, %v3993
    %v3995 = vsel %vm3971, %v3994, %v3990
    %v3996 = vlaneseq
    %v3997 = vshrl.u32 %v3996, 7
    %v3998 = vsub.s32 %v3973, %v3997
    %v3999 = vrot.slane %v3884, %v3998
    %v4000 = vsel %vm3978, %v3999, %v3995
    %v4001 = vlaneseq
    %v4002 = vshrl.u32 %v4001, 7
    %v4003 = vsub.s32 %v3980, %v4002
    %v4004 = vrot.slane %v3887, %v4003
    %v4005 = vsel %vm3985, %v4004, %v4000
    %v4006 = vlaneseq
    %v4007 = vshrl.u32 %v4006, 7
    %v4008 = vsub.s32 %v3961, %v4007
    %v4009 = vrot.slane %v3890, %v4008
    %v4010 = vlaneseq
    %v4011 = vshrl.u32 %v4010, 7
    %v4012 = vsub.s32 %v3966, %v4011
    %v4013 = vrot.slane %v3893, %v4012
    %v4014 = vsel %vm3971, %v4013, %v4009
    %v4015 = vlaneseq
    %v4016 = vshrl.u32 %v4015, 7
    %v4017 = vsub.s32 %v3973, %v4016
    %v4018 = vrot.slane %v3896, %v4017
    %v4019 = vsel %vm3978, %v4018, %v4014
    %v4020 = vlaneseq
    %v4021 = vshrl.u32 %v4020, 7
    %v4022 = vsub.s32 %v3980, %v4021
    %v4023 = vrot.slane %v3899, %v4022
    %v4024 = vsel %vm3985, %v4023, %v4019
    %v4025 = vlaneseq
    %v4026 = vshrl.u32 %v4025, 7
    %v4027 = vsub.s32 %v3961, %v4026
    %v4028 = vrot.slane %v3902, %v4027
    %v4029 = vlaneseq
    %v4030 = vshrl.u32 %v4029, 7
    %v4031 = vsub.s32 %v3966, %v4030
    %v4032 = vrot.slane %v3905, %v4031
    %v4033 = vsel %vm3971, %v4032, %v4028
    %v4034 = vlaneseq
    %v4035 = vshrl.u32 %v4034, 7
    %v4036 = vsub.s32 %v3973, %v4035
    %v4037 = vrot.slane %v3908, %v4036
    %v4038 = vsel %vm3978, %v4037, %v4033
    %v4039 = vlaneseq
    %v4040 = vshrl.u32 %v4039, 7
    %v4041 = vsub.s32 %v3980, %v4040
    %v4042 = vrot.slane %v3911, %v4041
    %v4043 = vsel %vm3985, %v4042, %v4038
    %v4044 = vlaneseq
    %v4045 = vshrl.u32 %v4044, 7
    %v4046 = vsub.s32 %v3961, %v4045
    %v4047 = vrot.slane %v3914, %v4046
    %v4048 = vlaneseq
    %v4049 = vshrl.u32 %v4048, 7
    %v4050 = vsub.s32 %v3966, %v4049
    %v4051 = vrot.slane %v3917, %v4050
    %v4052 = vsel %vm3971, %v4051, %v4047
    %v4053 = vlaneseq
    %v4054 = vshrl.u32 %v4053, 7
    %v4055 = vsub.s32 %v3973, %v4054
    %v4056 = vrot.slane %v3920, %v4055
    %v4057 = vsel %vm3978, %v4056, %v4052
    %v4058 = vlaneseq
    %v4059 = vshrl.u32 %v4058, 7
    %v4060 = vsub.s32 %v3980, %v4059
    %v4061 = vrot.slane %v3923, %v4060
    %v4062 = vsel %vm3985, %v4061, %v4057
    %v4063 = vlaneseq
    %v4064 = vshrl.u32 %v4063, 7
    %v4065 = vsub.s32 %v3961, %v4064
    %v4066 = vrot.slane %v3926, %v4065
    %v4067 = vlaneseq
    %v4068 = vshrl.u32 %v4067, 7
    %v4069 = vsub.s32 %v3966, %v4068
    %v4070 = vrot.slane %v3929, %v4069
    %v4071 = vsel %vm3971, %v4070, %v4066
    %v4072 = vlaneseq
    %v4073 = vshrl.u32 %v4072, 7
    %v4074 = vsub.s32 %v3973, %v4073
    %v4075 = vrot.slane %v3932, %v4074
    %v4076 = vsel %vm3978, %v4075, %v4071
    %v4077 = vlaneseq
    %v4078 = vshrl.u32 %v4077, 7
    %v4079 = vsub.s32 %v3980, %v4078
    %v4080 = vrot.slane %v3935, %v4079
    %v4081 = vsel %vm3985, %v4080, %v4076
    %v4082 = vlaneseq
    %v4083 = vshrl.u32 %v4082, 7
    %v4084 = vsub.s32 %v3961, %v4083
    %v4085 = vrot.slane %v3938, %v4084
    %v4086 = vlaneseq
    %v4087 = vshrl.u32 %v4086, 7
    %v4088 = vsub.s32 %v3966, %v4087
    %v4089 = vrot.slane %v3941, %v4088
    %v4090 = vsel %vm3971, %v4089, %v4085
    %v4091 = vlaneseq
    %v4092 = vshrl.u32 %v4091, 7
    %v4093 = vsub.s32 %v3973, %v4092
    %v4094 = vrot.slane %v3944, %v4093
    %v4095 = vsel %vm3978, %v4094, %v4090
    %v4096 = vlaneseq
    %v4097 = vshrl.u32 %v4096, 7
    %v4098 = vsub.s32 %v3980, %v4097
    %v4099 = vrot.slane %v3947, %v4098
    %v4100 = vsel %vm3985, %v4099, %v4095
    %v4101 = vlaneseq
    %v4102 = vshrl.u32 %v4101, 7
    %v4103 = vsub.s32 %v3961, %v4102
    %v4104 = vrot.slane %v3950, %v4103
    %v4105 = vlaneseq
    %v4106 = vshrl.u32 %v4105, 7
    %v4107 = vsub.s32 %v3966, %v4106
    %v4108 = vrot.slane %v3953, %v4107
    %v4109 = vsel %vm3971, %v4108, %v4104
    %v4110 = vlaneseq
    %v4111 = vshrl.u32 %v4110, 7
    %v4112 = vsub.s32 %v3973, %v4111
    %v4113 = vrot.slane %v3956, %v4112
    %v4114 = vsel %vm3978, %v4113, %v4109
    %v4115 = vlaneseq
    %v4116 = vshrl.u32 %v4115, 7
    %v4117 = vsub.s32 %v3980, %v4116
    %v4118 = vrot.slane %v3959, %v4117
    %v4119 = vsel %vm3985, %v4118, %v4114
    %v4121 = vunpack.c.l.s4 1966171168
    %v4122 = vunpack.c.0.s8 %v4121
    %v4123 = vlaneseq
    %v4124 = vshrl.u32 %v4123, 7
    %v4125 = vsub.s32 %v4122, %v4124
    %v4126 = vrot.slane %v3986, %v4125
    %v4128 = vunpack.c.l.s4 1966171168
    %v4129 = vunpack.c.0.s8 %v4128
    %v4130 = vlaneseq
    %v4131 = vshrl.u32 %v4130, 7
    %v4132 = vsub.s32 %v4129, %v4131
    %v4133 = vrot.slane %v4126, %v4132
    %v4135 = vunpack.c.l.s4 1966171168
    %v4136 = vunpack.c.0.s8 %v4135
    %v4137 = vlaneseq
    %v4138 = vshrl.u32 %v4137, 7
    %v4139 = vsub.s32 %v4136, %v4138
    %v4140 = vrot.slane %v4005, %v4139
    %v4142 = vunpack.c.l.s4 1966171168
    %v4143 = vunpack.c.0.s8 %v4142
    %v4144 = vlaneseq
    %v4145 = vshrl.u32 %v4144, 7
    %v4146 = vsub.s32 %v4143, %v4145
    %v4147 = vrot.slane %v4140, %v4146
    %v4149 = vunpack.c.l.s4 1966171168
    %v4150 = vunpack.c.0.s8 %v4149
    %v4151 = vlaneseq
    %v4152 = vshrl.u32 %v4151, 7
    %v4153 = vsub.s32 %v4150, %v4152
    %v4154 = vrot.slane %v4024, %v4153
    %v4156 = vunpack.c.l.s4 1966171168
    %v4157 = vunpack.c.0.s8 %v4156
    %v4158 = vlaneseq
    %v4159 = vshrl.u32 %v4158, 7
    %v4160 = vsub.s32 %v4157, %v4159
    %v4161 = vrot.slane %v4154, %v4160
    %v4163 = vunpack.c.l.s4 1966171168
    %v4164 = vunpack.c.0.s8 %v4163
    %v4165 = vlaneseq
    %v4166 = vshrl.u32 %v4165, 7
    %v4167 = vsub.s32 %v4164, %v4166
    %v4168 = vrot.slane %v4043, %v4167
    %v4170 = vunpack.c.l.s4 1966171168
    %v4171 = vunpack.c.0.s8 %v4170
    %v4172 = vlaneseq
    %v4173 = vshrl.u32 %v4172, 7
    %v4174 = vsub.s32 %v4171, %v4173
    %v4175 = vrot.slane %v4168, %v4174
    %v4177 = vunpack.c.l.s4 1966171168
    %v4178 = vunpack.c.0.s8 %v4177
    %v4179 = vlaneseq
    %v4180 = vshrl.u32 %v4179, 7
    %v4181 = vsub.s32 %v4178, %v4180
    %v4182 = vrot.slane %v4062, %v4181
    %v4184 = vunpack.c.l.s4 1966171168
    %v4185 = vunpack.c.0.s8 %v4184
    %v4186 = vlaneseq
    %v4187 = vshrl.u32 %v4186, 7
    %v4188 = vsub.s32 %v4185, %v4187
    %v4189 = vrot.slane %v4182, %v4188
    %v4191 = vunpack.c.l.s4 1966171168
    %v4192 = vunpack.c.0.s8 %v4191
    %v4193 = vlaneseq
    %v4194 = vshrl.u32 %v4193, 7
    %v4195 = vsub.s32 %v4192, %v4194
    %v4196 = vrot.slane %v4081, %v4195
    %v4198 = vunpack.c.l.s4 1966171168
    %v4199 = vunpack.c.0.s8 %v4198
    %v4200 = vlaneseq
    %v4201 = vshrl.u32 %v4200, 7
    %v4202 = vsub.s32 %v4199, %v4201
    %v4203 = vrot.slane %v4196, %v4202
    %v4205 = vunpack.c.l.s4 1966171168
    %v4206 = vunpack.c.0.s8 %v4205
    %v4207 = vlaneseq
    %v4208 = vshrl.u32 %v4207, 7
    %v4209 = vsub.s32 %v4206, %v4208
    %v4210 = vrot.slane %v4100, %v4209
    %v4212 = vunpack.c.l.s4 1966171168
    %v4213 = vunpack.c.0.s8 %v4212
    %v4214 = vlaneseq
    %v4215 = vshrl.u32 %v4214, 7
    %v4216 = vsub.s32 %v4213, %v4215
    %v4217 = vrot.slane %v4210, %v4216
    %v4219 = vunpack.c.l.s4 1966171168
    %v4220 = vunpack.c.0.s8 %v4219
    %v4221 = vlaneseq
    %v4222 = vshrl.u32 %v4221, 7
    %v4223 = vsub.s32 %v4220, %v4222
    %v4224 = vrot.slane %v4119, %v4223
    %v4226 = vunpack.c.l.s4 1966171168
    %v4227 = vunpack.c.0.s8 %v4226
    %v4228 = vlaneseq
    %v4229 = vshrl.u32 %v4228, 7
    %v4230 = vsub.s32 %v4227, %v4229
    %v4231 = vrot.slane %v4224, %v4230
    %v4240 = vmul.f32 %v70, %v4133
    %v4241 = vmul.f32 %v71, %v4147
    %v4242 = vmul.f32 %v72, %v4161
    %v4243 = vmul.f32 %v73, %v4175
    %v4244 = vmul.f32 %v74, %v4189
    %v4245 = vmul.f32 %v75, %v4203
    %v4246 = vmul.f32 %v76, %v4217
    %v4247 = vmul.f32 %v77, %v4231
    %vm4248 = vcmask 253952
    %v4249 = vsel %vm4248, %v4240, 0.0
    %4250 = vadd.xlane.f32.xlu0 %v4249
    %v4251 = vpop.xlane.xlu0 %4250
    %v4252 = vsel %vm4248, %v4241, 0.0
    %4253 = vadd.xlane.f32.xlu0 %v4252
    %v4254 = vpop.xlane.xlu0 %4253
    %v4255 = vsel %vm4248, %v4242, 0.0
    %4256 = vadd.xlane.f32.xlu0 %v4255
    %v4257 = vpop.xlane.xlu0 %4256
    %v4258 = vsel %vm4248, %v4243, 0.0
    %4259 = vadd.xlane.f32.xlu0 %v4258
    %v4260 = vpop.xlane.xlu0 %4259
    %v4261 = vsel %vm4248, %v4244, 0.0
    %4262 = vadd.xlane.f32.xlu0 %v4261
    %v4263 = vpop.xlane.xlu0 %4262
    %v4264 = vsel %vm4248, %v4245, 0.0
    %4265 = vadd.xlane.f32.xlu0 %v4264
    %v4266 = vpop.xlane.xlu0 %4265
    %v4267 = vsel %vm4248, %v4246, 0.0
    %4268 = vadd.xlane.f32.xlu0 %v4267
    %v4269 = vpop.xlane.xlu0 %4268
    %v4270 = vsel %vm4248, %v4247, 0.0
    %4271 = vadd.xlane.f32.xlu0 %v4270
    %v4272 = vpop.xlane.xlu0 %4271
    %v4281 = vrot.slane %v4254, 7
    %vm4282 = vcmask 1041409
    %v4283 = vsel %vm4282, %v4281, %v4251
    %v4284 = vrot.slane %v4257, 6
    %vm4285 = vcmask 1042434
    %v4286 = vsel %vm4285, %v4284, %v4283
    %v4287 = vrot.slane %v4260, 5
    %vm4288 = vcmask 1043459
    %v4289 = vsel %vm4288, %v4287, %v4286
    %v4290 = vrot.slane %v4263, 4
    %vm4291 = vcmask 1044484
    %v4292 = vsel %vm4291, %v4290, %v4289
    %v4293 = vrot.slane %v4266, 3
    %vm4294 = vcmask 1045509
    %v4295 = vsel %vm4294, %v4293, %v4292
    %v4296 = vrot.slane %v4269, 2
    %vm4297 = vcmask 1046534
    %v4298 = vsel %vm4297, %v4296, %v4295
    %v4299 = vrot.slane %v4272, 1
    %vm4300 = vcmask 1047559
    %v4301 = vsel %vm4300, %v4299, %v4298
    %vm4303 = vcmask 7168
    %4304 = vst.msk [vmem:[%s4] sm:$0xff] %vm4303, %v4301
    // Predicated region
    $region34: #{tpu_custom_call.1} parent=1 // pred_check
      _
    $region35: #{tpu_custom_call.1} parent=1 // pred_check_branch
      %4306 = sbr.rel (0) target = $region37
    $region36: #{tpu_custom_call.1} parent=1 // pred_region
      _
    $region37: #{tpu_custom_call.1} parent=1 // pred_fallthru
      _
    // Predicated region
    $region38: #{tpu_custom_call.1} parent=1 // pred_check
      _
    $region39: #{tpu_custom_call.1} parent=1 // pred_check_branch
      %4308 = sbr.rel (0) target = $region41
    $region40: #{tpu_custom_call.1} parent=1 // pred_region
      _
    $region41: #{tpu_custom_call.1} parent=1 // pred_fallthru
      _
    %4309 = vsyncpa [#allocation3], 1
    %4310 = vsyncpa [#allocation5], 1
    %4311 = vsyncpa [#allocation8], 1

</llo_original>
